<compile_context>
chip_gen: v6e
topology: v6e:2x2x1
jax: 0.10.0
libtpu: 0.0.40
codegen_flags: <defaults>
</compile_context>

<pallas_src>
import numpy as np
import jax
import jax.numpy as jnp
from jax import lax
from jax.experimental import pallas as pl
from jax.experimental.pallas import tpu as pltpu


# --------------------- constant gather operators (numpy) -------------------- #

def _dw_gather_np(h, w):
    """3x3 / stride 2 / pad 1 depthwise tap gather, output-stacked.

    Returns G of shape (H*W, 9*Ho*Wo) where tap t occupies output columns
    [t*Ho*Wo, (t+1)*Ho*Wo), so a single matmul x @ G produces all 9 per-tap
    gathers at once.
    """
    ho, wo = (h + 2 - 3) // 2 + 1, (w + 2 - 3) // 2 + 1
    g = np.zeros((9, h * w, ho * wo), np.float32)
    for di in range(3):
        for dj in range(3):
            t = di * 3 + dj
            for oh in range(ho):
                ih = 2 * oh + di - 1
                if ih < 0 or ih >= h:
                    continue
                for ow in range(wo):
                    iw = 2 * ow + dj - 1
                    if iw < 0 or iw >= w:
                        continue
                    g[t, ih * w + iw, oh * wo + ow] = 1.0
    g_big = np.transpose(g, (1, 0, 2)).reshape(h * w, 9 * ho * wo)
    return g_big, ho, wo


def _deconv_gather_np(h, w, k, s, p):
    """ConvTranspose2d(k, s, p) per-tap gather: (k*k, H*W, Ho*Wo) 0/1 matrix."""
    ho, wo = (h - 1) * s - 2 * p + k, (w - 1) * s - 2 * p + k
    g = np.zeros((k * k, h * w, ho * wo), np.float32)
    for kh in range(k):
        for kw in range(k):
            t = kh * k + kw
            for oh in range(ho):
                if (oh + p - kh) % s != 0:
                    continue
                ih = (oh + p - kh) // s
                if ih < 0 or ih >= h:
                    continue
                for ow in range(wo):
                    if (ow + p - kw) % s != 0:
                        continue
                    iw = (ow + p - kw) // s
                    if iw < 0 or iw >= w:
                        continue
                    g[t, ih * w + iw, oh * wo + ow] = 1.0
    return g, ho, wo


# ------------------- one-time prep: fold BN, pack weights ------------------- #

def _bn_fold(g, b, m, v, conv_bias=None, eps=1e-5):
    g, b, m, v = (np.asarray(a, np.float32) for a in (g, b, m, v))
    scale = g / np.sqrt(v + eps)
    bias = b - m * scale
    if conv_bias is not None:
        bias = bias + np.asarray(conv_bias, np.float32) * scale
    return scale, bias


class _WeightSlab:
    """Packs the ~18 tiny folded weight/bias tensors into one f32 slab.

    Each tensor gets an 8-aligned row range in a (rows, 16) slab so the kernel
    pays one input DMA (and static, sublane-aligned ref slices) instead of ~20
    separate descriptor setups.
    """

    def __init__(self, ncols=16):
        self.ncols = ncols
        self._items = []
        self._rows = 0

    def add(self, name, arr):
        arr = np.asarray(arr, np.float32)
        if arr.ndim == 1:
            arr = arr[:, None]
        assert arr.ndim == 2 and arr.shape[1] <= self.ncols, (name, arr.shape)
        self._items.append((name, self._rows, arr))
        self._rows += ((arr.shape[0] + 7) // 8) * 8

    def build(self):
        slab = np.zeros((max(8, self._rows), self.ncols), np.float32)
        off = {}
        for name, o, arr in self._items:
            r, c = arr.shape
            slab[o:o + r, :c] = arr
            off[name] = (o, r, c)
        return slab, off


def prepare_assembler(params, stages, input_shape):
    """Fold BN into conv weights, build per-image bf16 gather operators and the
    packed weight slab.  Called once; the forward pass is one pallas_call."""
    if (stages.get('DownConvLayer', 0) != 0 or stages['GroupDownConvLayer'] != 2
            or stages['GroupUpConvLayer'] != 2):
        # TODO(synk): fused single-kernel graph specialized to 2-down/2-up config.
        raise NotImplementedError('fused kernel built for the 2-down/2-up config')

    _, c0, h, w = (int(d) for d in input_shape)
    slab = _WeightSlab(ncols=16)
    hw = (h, w)
    ms = [h * w]

    # --- GroupDown layers ------------------------------------------------- #
    g_down = []
    for li, p in enumerate(params['down']):
        cin = int(np.asarray(p['dw_w']).shape[-1])
        gbig, ho, wo = _dw_gather_np(hw[0], hw[1])
        s1, b1 = _bn_fold(p['g1'], p['b1'], p['m1'], p['v1'])
        taps = (np.asarray(p['dw_w'], np.float32).reshape(9, cin) * s1[None, :]).T
        s2, b2 = _bn_fold(p['g2'], p['b2'], p['m2'], p['v2'], p['pw_b'])
        slab.add('dw%d_w' % (li + 1), taps)                       # (Cin, 9)
        slab.add('dw%d_b' % (li + 1), b1)
        slab.add('pw%d_w' % (li + 1),
                 (np.asarray(p['pw_w'], np.float32) * s2[None, :]).T)
        slab.add('pw%d_b' % (li + 1), b2)
        g_down.append(gbig)
        hw = (ho, wo)
        ms.append(ho * wo)

    # --- GroupUp layers + the fused skip DimRedu -------------------------- #
    def up_prep(p, hw_in, ct, pw):
        k, s, pd = p['kspd']
        c = int(np.asarray(p['ct_w']).shape[0])
        g, ho, wo = _deconv_gather_np(hw_in[0], hw_in[1], k, s, pd)
        s1, b1 = _bn_fold(p['g1'], p['b1'], p['m1'], p['v1'], p['ct_b'])
        ws = (np.transpose(np.asarray(p['ct_w'], np.float32), (2, 3, 1, 0))
              * s1[None, None, :, None])
        slab.add(ct + '_w', ws.reshape(k * k * c, c))             # (taps*Cout, Cin)
        slab.add(ct + '_b', b1)
        s2, b2 = _bn_fold(p['g2'], p['b2'], p['m2'], p['v2'])
        slab.add(pw + '_w', (np.asarray(p['pw_w'], np.float32) * s2[None, :]).T)
        slab.add(pw + '_b', b2)
        return g, (ho, wo), k * k

    g3, hw_mid, ct_taps = up_prep(params['up'][0], hw, 'ct1', 'pw3')

    sp = params['skip'][1]              # the only skip actually used here
    ss, sb = _bn_fold(sp['g'], sp['b'], sp['m'], sp['v'])
    slab.add('sk_w', (np.asarray(sp['w'], np.float32) * ss[None, :]).T)
    slab.add('sk_b', sb)

    g4, hw_out, _ = up_prep(params['up'][1], hw_mid, 'ct2', 'pw4')

    slab_arr, off = slab.build()
    cfg = dict(
        c0=c0,
        c1=int(np.asarray(params['down'][0]['pw_w']).shape[1]),
        c2=int(np.asarray(params['down'][1]['pw_w']).shape[1]),
        cls=int(np.asarray(params['up'][1]['pw_w']).shape[1]),
        m0=ms[0], m1=ms[1], m2=ms[2], dw_taps=9, ct_taps=ct_taps,
        out_h=int(hw_out[0]), out_w=int(hw_out[1]))
    return dict(
        # bf16 constants: 0/1 values are exact; only activation rounding enters.
        g1=jnp.asarray(g_down[0], jnp.bfloat16),    # (256, 9*64)
        g2=jnp.asarray(g_down[1], jnp.bfloat16),    # (64, 9*16)
        g3=jnp.asarray(g3, jnp.bfloat16),           # (16, 16, 64)
        g4=jnp.asarray(g4, jnp.bfloat16),           # (16, 64, 256)
        slab=jnp.asarray(slab_arr),                 # (rows, 16) f32
        off=off, cfg=cfg)


# ------------------------------ fused kernel ------------------------------- #

def _make_kernel(off, cfg):
    c1, c2 = cfg['c1'], cfg['c2']
    m1, m2 = cfg['m1'], cfg['m2']
    dw_taps, ct_taps = cfg['dw_taps'], cfg['ct_taps']
    f32, bf16 = jnp.float32, jnp.bfloat16

    def kernel(x_ref, g1_ref, g2_ref, g3_ref, g4_hbm, w_ref, o_ref,
               g4_buf, g4_sem):
        # Kick off the fetch of the largest gather operator (last deconv, ~60%
        # of all constant bytes) so its HBM->VMEM DMA overlaps the first three
        # layers' compute instead of serializing before the body runs.
        g4_cp = pltpu.make_async_copy(g4_hbm, g4_buf, g4_sem)
        g4_cp.start()

        def wslice(name):
            o, r, c = off[name]
            return w_ref[o:o + r, 0:c]

        def depthwise_relu(x, g_ref, wname, bname, mo):
            # 3x3/s2/p1 depthwise conv + folded BN + ReLU.  One output-stacked
            # bf16 gather matmul (taps on the output axis), then per-tap VPU
            # broadcast-FMAs fold in the per-channel tap weights in f32.
            y = jnp.dot(x.astype(bf16), g_ref[...], preferred_element_type=f32)
            w = wslice(wname)                                      # (C, 9)
            acc = w[:, 0:1] * y[:, 0:mo]
            for t in range(1, dw_taps):
                acc = acc + w[:, t:t + 1] * y[:, t * mo:(t + 1) * mo]
            return jnp.maximum(acc + wslice(bname), 0.0)

        def pointwise_relu(x, wname, bname):
            # 1x1 conv + folded BN + ReLU: (Cout, Cin) @ (Cin, M) channel mix.
            y = jnp.dot(wslice(wname), x, preferred_element_type=f32)
            return jnp.maximum(y + wslice(bname), 0.0)

        def deconv_relu(x, g_ref, wname, bname, cout):
            # ConvTranspose2d(4, 2, 1) + bias + folded BN + ReLU.  One stacked
            # channel matmul (taps*Cout, Cin) @ (Cin, Min), then a single
            # running f32 accumulator over the per-tap bf16 gather matmuls
            # (maps to in-place MXU-result accumulation on v7x).
            ys = jnp.dot(wslice(wname), x, preferred_element_type=f32)
            acc = jnp.dot(ys[0:cout].astype(bf16), g_ref[0],
                          preferred_element_type=f32)
            for t in range(1, ct_taps):
                acc = acc + jnp.dot(ys[t * cout:(t + 1) * cout].astype(bf16),
                                    g_ref[t], preferred_element_type=f32)
            return jnp.maximum(acc + wslice(bname), 0.0)

        x = x_ref[0]                                                   # (4, 256)
        d1 = pointwise_relu(depthwise_relu(x, g1_ref, 'dw1_w', 'dw1_b', m1),
                            'pw1_w', 'pw1_b')                          # (8, 64)
        d2 = pointwise_relu(depthwise_relu(d1, g2_ref, 'dw2_w', 'dw2_b', m2),
                            'pw2_w', 'pw2_b')                          # (16, 16)
        u1 = pointwise_relu(deconv_relu(d2, g3_ref, 'ct1_w', 'ct1_b', c2),
                            'pw3_w', 'pw3_b')                          # (8, 64)
        x4 = pointwise_relu(d1, 'sk_w', 'sk_b') + u1                   # fused skip
        g4_cp.wait()
        o_ref[0] = pointwise_relu(deconv_relu(x4, g4_buf, 'ct2_w', 'ct2_b', c1),
                                  'pw4_w', 'pw4_b')                    # (3, 256)

    return kernel


# --------------------------- Pallas forward wrapper ------------------------- #

def assembler_forward_pallas(x_nchw, prep):
    cfg, off = prep['cfg'], prep['off']
    g1, g2, g3, g4, slab = (prep['g1'], prep['g2'], prep['g3'], prep['g4'],
                            prep['slab'])
    n, c, h, w = x_nchw.shape
    m0 = h * w
    m_out = cfg['out_h'] * cfg['out_w']
    x3d = x_nchw.reshape(n, c, m0)       # per-image lane-dense (C, H*W) blocks

    out3d = pl.pallas_call(
        _make_kernel(off, cfg),
        out_shape=jax.ShapeDtypeStruct((n, cfg['cls'], m_out), jnp.float32),
        grid=(n,),
        in_specs=[
            pl.BlockSpec((1, c, m0), lambda b: (b, 0, 0)),      # x, one image
            pl.BlockSpec(g1.shape, lambda b: (0, 0)),           # resident consts
            pl.BlockSpec(g2.shape, lambda b: (0, 0)),
            pl.BlockSpec(g3.shape, lambda b: (0, 0, 0)),
            pl.BlockSpec(memory_space=pl.ANY),                  # g4: manual DMA
            pl.BlockSpec(slab.shape, lambda b: (0, 0)),         # packed weights
        ],
        out_specs=pl.BlockSpec((1, cfg['cls'], m_out), lambda b: (b, 0, 0)),
        scratch_shapes=[pltpu.VMEM(tuple(g4.shape), jnp.bfloat16),
                        pltpu.SemaphoreType.DMA(())],
        compiler_params=pltpu.CompilerParams(
            dimension_semantics=("parallel",),      # both TCs on v7x
            vmem_limit_bytes=24 * 1024 * 1024),     # right-sized for 64 MiB v7x
    )(x3d, g1, g2, g3, g4, slab)
    return out3d.reshape(n, cfg['cls'], cfg['out_h'], cfg['out_w'])


# -------------------------- pure-JAX reference path ------------------------- #

_DN = ('NHWC', 'HWIO', 'NHWC')
_PREC = lax.Precision.HIGHEST


def _ref_bn_relu(x, g, b, m, v, eps=1e-5):
    return jnp.maximum((x - m) / jnp.sqrt(v + eps) * g + b, 0.0)


def ref_group_down(x, p):
    C = x.shape[-1]
    y = lax.conv_general_dilated(x, p['dw_w'][:, :, None, :], (2, 2),
                                 [(1, 1), (1, 1)], dimension_numbers=_DN,
                                 feature_group_count=C, precision=_PREC)
    y = _ref_bn_relu(y, p['g1'], p['b1'], p['m1'], p['v1'])
    y = lax.conv_general_dilated(y, p['pw_w'][None, None], (1, 1), 'VALID',
                                 dimension_numbers=_DN, precision=_PREC) + p['pw_b']
    return _ref_bn_relu(y, p['g2'], p['b2'], p['m2'], p['v2'])


def ref_group_up(x, p):
    k, s, pd = p['kspd']
    w = jnp.transpose(jnp.flip(p['ct_w'], (2, 3)), (2, 3, 0, 1))
    y = lax.conv_general_dilated(x, w, (1, 1), [(k - 1 - pd, k - 1 - pd)] * 2,
                                 lhs_dilation=(s, s), dimension_numbers=_DN,
                                 precision=_PREC) + p['ct_b']
    y = _ref_bn_relu(y, p['g1'], p['b1'], p['m1'], p['v1'])
    y = lax.conv_general_dilated(y, p['pw_w'][None, None], (1, 1), 'VALID',
                                 dimension_numbers=_DN, precision=_PREC)
    return _ref_bn_relu(y, p['g2'], p['b2'], p['m2'], p['v2'])


def ref_dimredu(x, p):
    y = lax.conv_general_dilated(x, p['w'][None, None], (1, 1), 'VALID',
                                 dimension_numbers=_DN, precision=_PREC)
    return _ref_bn_relu(y, p['g'], p['b'], p['m'], p['v'])


def assembler_forward_ref(x_nchw, params, stages):
    x = jnp.transpose(x_nchw, (0, 2, 3, 1))    # NCHW -> NHWC
    h0 = x.shape[1]
    n = stages['GroupDownConvLayer']
    m = stages['GroupUpConvLayer']
    if n % m != 0:
        raise TypeError('down layers must be an integer multiple of up layers')
    enc = h0 / 2 ** n
    uf = 2 ** (n / m)
    ups = [int(enc) * uf ** i for i in range(1, int(m))]
    outd = {}
    if h0 in ups:
        outd[h0] = x
    for p in params['down']:
        x = ref_group_down(x, p)
        if x.shape[1] in ups:
            outd[x.shape[1]] = x
        if x.shape[1] * x.shape[2] < 9:
            raise ValueError('output size too small, adjust params')
    for idx, p in enumerate(params['up']):
        if x.shape[1] in outd:
            r = ref_dimredu(outd[x.shape[1]], params['skip'][idx])
            x = r + x
        x = ref_group_up(x, p)
    return jnp.transpose(x, (0, 3, 1, 2))      # NHWC -> NCHW


# --------------------------- parameter construction ------------------------- #

def get_upconv_setting(s):
    for i in range(3, 8):
        for j in range(0, 5):
            if i - 2 * j - s == 0:
                return (i, j, int(s))
    raise ValueError('could not find upconv setting')


def _bn_init(key, c):
    k = jax.random.split(key, 4)
    return (1.0 + 0.1 * jax.random.normal(k[0], (c,), jnp.float32),
            0.1 * jax.random.normal(k[1], (c,), jnp.float32),
            0.1 * jax.random.normal(k[2], (c,), jnp.float32),
            1.0 + 0.1 * jnp.abs(jax.random.normal(k[3], (c,), jnp.float32)))


def init_group_down(key, inc, outc):
    k = jax.random.split(key, 5)
    g1, b1, m1, v1 = _bn_init(k[3], inc)
    g2, b2, m2, v2 = _bn_init(k[4], outc)
    return dict(dw_w=0.3 * jax.random.normal(k[0], (3, 3, inc), jnp.float32),
                pw_w=jax.random.normal(k[1], (inc, outc), jnp.float32) / jnp.sqrt(inc),
                pw_b=0.1 * jax.random.normal(k[2], (outc,), jnp.float32),
                g1=g1, b1=b1, m1=m1, v1=v1, g2=g2, b2=b2, m2=m2, v2=v2)


def init_group_up(key, inc, outc, kspd):
    k = jax.random.split(key, 5)
    g1, b1, m1, v1 = _bn_init(k[3], inc)
    g2, b2, m2, v2 = _bn_init(k[4], outc)
    kk = kspd[0]
    return dict(ct_w=jax.random.normal(k[0], (inc, inc, kk, kk), jnp.float32) / jnp.sqrt(inc * kk * kk),
                ct_b=0.1 * jax.random.normal(k[1], (inc,), jnp.float32),
                pw_w=jax.random.normal(k[2], (inc, outc), jnp.float32) / jnp.sqrt(inc),
                kspd=kspd,
                g1=g1, b1=b1, m1=m1, v1=v1, g2=g2, b2=b2, m2=m2, v2=v2)


def init_dimredu(key, inc, outc):
    k = jax.random.split(key, 2)
    g, b, m, v = _bn_init(k[1], outc)
    return dict(w=jax.random.normal(k[0], (inc, outc), jnp.float32) / jnp.sqrt(inc),
                g=g, b=b, m=m, v=v)


def build_assembler_params(key, stages, input_c, class_number, cof):
    n = stages['GroupDownConvLayer']
    m = stages['GroupUpConvLayer']
    kk, pp, ss = get_upconv_setting(2 ** (n / m))
    down, up, skip = [], [], {}
    dli, uli = -1, -1
    keys = iter(jax.random.split(key, 64))
    for name, num in stages.items():
        if name == 'DownConvLayer':
            for _ in range(num):
                dli += 1
                # TODO(synk): DownConvLayer (plain 3x3/s2 conv) is not
                # instantiated in this config (count=0).
                raise NotImplementedError('DownConvLayer not built in this config')
        if name == 'GroupDownConvLayer':
            for _ in range(num):
                dli += 1
                inc = input_c if dli == 0 else (2 ** (dli - 1)) * cof
                outc = (2 ** dli) * cof
                down.append(init_group_down(next(keys), int(inc), int(outc)))
        if name == 'GroupUpConvLayer':
            for _ in range(num):
                if uli == num - 2:
                    uli += 1
                    skip[uli] = init_dimredu(next(keys),
                                             int(cof * 2 ** ((n * m - n * uli - m) / m)),
                                             int((2 ** (dli - uli)) * cof))
                    up.append(init_group_up(next(keys), int((2 ** (dli - uli)) * cof),
                                            int(class_number), (kk, ss, pp)))
                else:
                    uli += 1
                    up.append(init_group_up(next(keys), int((2 ** (dli - uli)) * cof),
                                            int((2 ** (dli - uli - 1)) * cof), (kk, ss, pp)))
                    skip[uli] = init_dimredu(next(keys),
                                             int(cof * 2 ** ((n * m - n * uli - m) / m)),
                                             int((2 ** (dli - uli)) * cof))
    return dict(down=down, up=up, skip=skip)


# ----------------------------------- main ----------------------------------- #

if __name__ == "__main__":
    stages = {'DownConvLayer': 0, 'GroupDownConvLayer': 2, 'GroupUpConvLayer': 2}
    input_c, class_number, cof = 4, 3, 8
    N, H, W = 2, 16, 16

    key = jax.random.PRNGKey(0)
    kx, kp = jax.random.split(key)
    x = jax.random.normal(kx, (N, input_c, H, W), jnp.float32)
    params = build_assembler_params(kp, stages, input_c, class_number, cof)

    # One-time prep: fold BN, build per-image bf16 gather operators, pack weights.
    prep = prepare_assembler(params, stages, (N, input_c, H, W))

    fwd = jax.jit(lambda xx: assembler_forward_pallas(xx, prep))
    out = jax.block_until_ready(fwd(x))

    ref = jax.block_until_ready(assembler_forward_ref(x, params, stages))

    assert out.shape == (N, class_number, H, W), out.shape
    max_err = float(jnp.max(jnp.abs(out - ref)))
    scale = float(jnp.max(jnp.abs(ref)))
    # bf16 gather operands => tolerance scaled to the activation magnitude.
    assert max_err <= 5e-2 * max(1.0, scale), (max_err, scale)
    print("KERNEL_OK")
</pallas_src>

<mosaic_0001>
module attributes {stable_mosaic.version = 11 : i64} {
  func.func @kernel(%arg0: i32, %arg1: memref<1x4x256xf32, #tpu.memory_space<vmem>>, %arg2: memref<256x576xbf16, #tpu.memory_space<vmem>>, %arg3: memref<64x144xbf16, #tpu.memory_space<vmem>>, %arg4: memref<16x16x64xbf16, #tpu.memory_space<vmem>>, %arg5: memref<16x64x256xbf16, #tpu.memory_space<any>>, %arg6: memref<536x16xf32, #tpu.memory_space<vmem>>, %arg7: memref<1x3x256xf32, #tpu.memory_space<vmem>>, %arg8: memref<16x64x256xbf16, #tpu.memory_space<vmem>>, %arg9: memref<!tpu.dma_semaphore, #tpu.memory_space<semaphore_mem>>) attributes {dimension_semantics = [#tpu.dimension_semantics<parallel>], iteration_bounds = array<i64: 2>, scalar_prefetch = 0 : i64, scratch_operands = 2 : i64, tpu.core_type = #tpu.core_type<tc>, window_params = [{transform_indices = @transform_0, window_bounds = array<i64: 1, 4, 256>}, {pipeline_mode = #tpu.pipeline_mode<synchronous>, transform_indices = @transform_1, window_bounds = array<i64: 256, 576>}, {pipeline_mode = #tpu.pipeline_mode<synchronous>, transform_indices = @transform_2, window_bounds = array<i64: 64, 144>}, {pipeline_mode = #tpu.pipeline_mode<synchronous>, transform_indices = @transform_3, window_bounds = array<i64: 16, 16, 64>}, {}, {pipeline_mode = #tpu.pipeline_mode<synchronous>, transform_indices = @transform_5, window_bounds = array<i64: 536, 16>}, {transform_indices = @transform_6, window_bounds = array<i64: 1, 3, 256>}]} {
    tpu.enqueue_dma source(%arg5 : memref<16x64x256xbf16, #tpu.memory_space<any>>) target(%arg8 : memref<16x64x256xbf16, #tpu.memory_space<vmem>>) target_semaphore(%arg9 : memref<!tpu.dma_semaphore, #tpu.memory_space<semaphore_mem>>)
    %c0 = arith.constant 0 : index
    %c0_0 = arith.constant 0 : index
    %c0_1 = arith.constant 0 : index
    %0 = vector.load %arg1[%c0, %c0_0, %c0_1] : memref<1x4x256xf32, #tpu.memory_space<vmem>>, vector<1x4x256xf32>
    %1 = vector.shape_cast %0 : vector<1x4x256xf32> to vector<4x256xf32>
    %2 = arith.truncf %1 : vector<4x256xf32> to vector<4x256xbf16>
    %c0_2 = arith.constant 0 : index
    %c0_3 = arith.constant 0 : index
    %3 = vector.load %arg2[%c0_2, %c0_3] : memref<256x576xbf16, #tpu.memory_space<vmem>>, vector<256x576xbf16>
    %cst = arith.constant dense<0.000000e+00> : vector<4x576xf32>
    %4 = tpu.matmul %2, %3, %cst {dimension_numbers = #tpu.dot_dimension_numbers<[1], [0], [0], [1], [0, 0, 1, 1], [], []>} : vector<4x256xbf16>, vector<256x576xbf16>, vector<4x576xf32> -> vector<4x576xf32>
    %c0_4 = arith.constant 0 : index
    %c0_5 = arith.constant 0 : index
    %5 = vector.load %arg6[%c0_4, %c0_5] : memref<536x16xf32, #tpu.memory_space<vmem>>, vector<4x9xf32>
    %6 = vector.extract_strided_slice %5 {offsets = [0, 0], sizes = [4, 1], strides = [1, 1]} : vector<4x9xf32> to vector<4x1xf32>
    %7 = vector.extract_strided_slice %4 {offsets = [0, 0], sizes = [4, 64], strides = [1, 1]} : vector<4x576xf32> to vector<4x64xf32>
    %8 = vector.broadcast %6 : vector<4x1xf32> to vector<4x64xf32>
    %9 = arith.mulf %8, %7 : vector<4x64xf32>
    %10 = vector.extract_strided_slice %5 {offsets = [0, 1], sizes = [4, 1], strides = [1, 1]} : vector<4x9xf32> to vector<4x1xf32>
    %11 = vector.extract_strided_slice %4 {offsets = [0, 64], sizes = [4, 64], strides = [1, 1]} : vector<4x576xf32> to vector<4x64xf32>
    %12 = vector.broadcast %10 : vector<4x1xf32> to vector<4x64xf32>
    %13 = arith.mulf %12, %11 : vector<4x64xf32>
    %14 = arith.addf %9, %13 : vector<4x64xf32>
    %15 = vector.extract_strided_slice %5 {offsets = [0, 2], sizes = [4, 1], strides = [1, 1]} : vector<4x9xf32> to vector<4x1xf32>
    %16 = vector.extract_strided_slice %4 {offsets = [0, 128], sizes = [4, 64], strides = [1, 1]} : vector<4x576xf32> to vector<4x64xf32>
    %17 = vector.broadcast %15 : vector<4x1xf32> to vector<4x64xf32>
    %18 = arith.mulf %17, %16 : vector<4x64xf32>
    %19 = arith.addf %14, %18 : vector<4x64xf32>
    %20 = vector.extract_strided_slice %5 {offsets = [0, 3], sizes = [4, 1], strides = [1, 1]} : vector<4x9xf32> to vector<4x1xf32>
    %21 = vector.extract_strided_slice %4 {offsets = [0, 192], sizes = [4, 64], strides = [1, 1]} : vector<4x576xf32> to vector<4x64xf32>
    %22 = vector.broadcast %20 : vector<4x1xf32> to vector<4x64xf32>
    %23 = arith.mulf %22, %21 : vector<4x64xf32>
    %24 = arith.addf %19, %23 : vector<4x64xf32>
    %25 = vector.extract_strided_slice %5 {offsets = [0, 4], sizes = [4, 1], strides = [1, 1]} : vector<4x9xf32> to vector<4x1xf32>
    %26 = vector.extract_strided_slice %4 {offsets = [0, 256], sizes = [4, 64], strides = [1, 1]} : vector<4x576xf32> to vector<4x64xf32>
    %27 = vector.broadcast %25 : vector<4x1xf32> to vector<4x64xf32>
    %28 = arith.mulf %27, %26 : vector<4x64xf32>
    %29 = arith.addf %24, %28 : vector<4x64xf32>
    %30 = vector.extract_strided_slice %5 {offsets = [0, 5], sizes = [4, 1], strides = [1, 1]} : vector<4x9xf32> to vector<4x1xf32>
    %31 = vector.extract_strided_slice %4 {offsets = [0, 320], sizes = [4, 64], strides = [1, 1]} : vector<4x576xf32> to vector<4x64xf32>
    %32 = vector.broadcast %30 : vector<4x1xf32> to vector<4x64xf32>
    %33 = arith.mulf %32, %31 : vector<4x64xf32>
    %34 = arith.addf %29, %33 : vector<4x64xf32>
    %35 = vector.extract_strided_slice %5 {offsets = [0, 6], sizes = [4, 1], strides = [1, 1]} : vector<4x9xf32> to vector<4x1xf32>
    %36 = vector.extract_strided_slice %4 {offsets = [0, 384], sizes = [4, 64], strides = [1, 1]} : vector<4x576xf32> to vector<4x64xf32>
    %37 = vector.broadcast %35 : vector<4x1xf32> to vector<4x64xf32>
    %38 = arith.mulf %37, %36 : vector<4x64xf32>
    %39 = arith.addf %34, %38 : vector<4x64xf32>
    %40 = vector.extract_strided_slice %5 {offsets = [0, 7], sizes = [4, 1], strides = [1, 1]} : vector<4x9xf32> to vector<4x1xf32>
    %41 = vector.extract_strided_slice %4 {offsets = [0, 448], sizes = [4, 64], strides = [1, 1]} : vector<4x576xf32> to vector<4x64xf32>
    %42 = vector.broadcast %40 : vector<4x1xf32> to vector<4x64xf32>
    %43 = arith.mulf %42, %41 : vector<4x64xf32>
    %44 = arith.addf %39, %43 : vector<4x64xf32>
    %45 = vector.extract_strided_slice %5 {offsets = [0, 8], sizes = [4, 1], strides = [1, 1]} : vector<4x9xf32> to vector<4x1xf32>
    %46 = vector.extract_strided_slice %4 {offsets = [0, 512], sizes = [4, 64], strides = [1, 1]} : vector<4x576xf32> to vector<4x64xf32>
    %47 = vector.broadcast %45 : vector<4x1xf32> to vector<4x64xf32>
    %48 = arith.mulf %47, %46 : vector<4x64xf32>
    %49 = arith.addf %44, %48 : vector<4x64xf32>
    %c8 = arith.constant 8 : index
    %c0_6 = arith.constant 0 : index
    %50 = vector.load %arg6[%c8, %c0_6] : memref<536x16xf32, #tpu.memory_space<vmem>>, vector<4x1xf32>
    %51 = vector.broadcast %50 : vector<4x1xf32> to vector<4x64xf32>
    %52 = arith.addf %49, %51 : vector<4x64xf32>
    %cst_7 = arith.constant 0.000000e+00 : f32
    %53 = vector.broadcast %cst_7 : f32 to vector<4x64xf32>
    %54 = arith.maximumf %52, %53 : vector<4x64xf32>
    %c16 = arith.constant 16 : index
    %c0_8 = arith.constant 0 : index
    %55 = vector.load %arg6[%c16, %c0_8] : memref<536x16xf32, #tpu.memory_space<vmem>>, vector<8x4xf32>
    %cst_9 = arith.constant dense<0.000000e+00> : vector<8x64xf32>
    %56 = tpu.matmul %55, %54, %cst_9 {dimension_numbers = #tpu.dot_dimension_numbers<[1], [0], [0], [1], [0, 0, 1, 1], [], []>} : vector<8x4xf32>, vector<4x64xf32>, vector<8x64xf32> -> vector<8x64xf32>
    %c24 = arith.constant 24 : index
    %c0_10 = arith.constant 0 : index
    %57 = vector.load %arg6[%c24, %c0_10] : memref<536x16xf32, #tpu.memory_space<vmem>>, vector<8x1xf32>
    %58 = vector.broadcast %57 : vector<8x1xf32> to vector<8x64xf32>
    %59 = arith.addf %56, %58 : vector<8x64xf32>
    %cst_11 = arith.constant 0.000000e+00 : f32
    %60 = vector.broadcast %cst_11 : f32 to vector<8x64xf32>
    %61 = arith.maximumf %59, %60 : vector<8x64xf32>
    %62 = arith.truncf %61 : vector<8x64xf32> to vector<8x64xbf16>
    %c0_12 = arith.constant 0 : index
    %c0_13 = arith.constant 0 : index
    %63 = vector.load %arg3[%c0_12, %c0_13] : memref<64x144xbf16, #tpu.memory_space<vmem>>, vector<64x144xbf16>
    %cst_14 = arith.constant dense<0.000000e+00> : vector<8x144xf32>
    %64 = tpu.matmul %62, %63, %cst_14 {dimension_numbers = #tpu.dot_dimension_numbers<[1], [0], [0], [1], [0, 0, 1, 1], [], []>} : vector<8x64xbf16>, vector<64x144xbf16>, vector<8x144xf32> -> vector<8x144xf32>
    %c32 = arith.constant 32 : index
    %c0_15 = arith.constant 0 : index
    %65 = vector.load %arg6[%c32, %c0_15] : memref<536x16xf32, #tpu.memory_space<vmem>>, vector<8x9xf32>
    %66 = vector.extract_strided_slice %65 {offsets = [0, 0], sizes = [8, 1], strides = [1, 1]} : vector<8x9xf32> to vector<8x1xf32>
    %67 = vector.extract_strided_slice %64 {offsets = [0, 0], sizes = [8, 16], strides = [1, 1]} : vector<8x144xf32> to vector<8x16xf32>
    %68 = vector.broadcast %66 : vector<8x1xf32> to vector<8x16xf32>
    %69 = arith.mulf %68, %67 : vector<8x16xf32>
    %70 = vector.extract_strided_slice %65 {offsets = [0, 1], sizes = [8, 1], strides = [1, 1]} : vector<8x9xf32> to vector<8x1xf32>
    %71 = vector.extract_strided_slice %64 {offsets = [0, 16], sizes = [8, 16], strides = [1, 1]} : vector<8x144xf32> to vector<8x16xf32>
    %72 = vector.broadcast %70 : vector<8x1xf32> to vector<8x16xf32>
    %73 = arith.mulf %72, %71 : vector<8x16xf32>
    %74 = arith.addf %69, %73 : vector<8x16xf32>
    %75 = vector.extract_strided_slice %65 {offsets = [0, 2], sizes = [8, 1], strides = [1, 1]} : vector<8x9xf32> to vector<8x1xf32>
    %76 = vector.extract_strided_slice %64 {offsets = [0, 32], sizes = [8, 16], strides = [1, 1]} : vector<8x144xf32> to vector<8x16xf32>
    %77 = vector.broadcast %75 : vector<8x1xf32> to vector<8x16xf32>
    %78 = arith.mulf %77, %76 : vector<8x16xf32>
    %79 = arith.addf %74, %78 : vector<8x16xf32>
    %80 = vector.extract_strided_slice %65 {offsets = [0, 3], sizes = [8, 1], strides = [1, 1]} : vector<8x9xf32> to vector<8x1xf32>
    %81 = vector.extract_strided_slice %64 {offsets = [0, 48], sizes = [8, 16], strides = [1, 1]} : vector<8x144xf32> to vector<8x16xf32>
    %82 = vector.broadcast %80 : vector<8x1xf32> to vector<8x16xf32>
    %83 = arith.mulf %82, %81 : vector<8x16xf32>
    %84 = arith.addf %79, %83 : vector<8x16xf32>
    %85 = vector.extract_strided_slice %65 {offsets = [0, 4], sizes = [8, 1], strides = [1, 1]} : vector<8x9xf32> to vector<8x1xf32>
    %86 = vector.extract_strided_slice %64 {offsets = [0, 64], sizes = [8, 16], strides = [1, 1]} : vector<8x144xf32> to vector<8x16xf32>
    %87 = vector.broadcast %85 : vector<8x1xf32> to vector<8x16xf32>
    %88 = arith.mulf %87, %86 : vector<8x16xf32>
    %89 = arith.addf %84, %88 : vector<8x16xf32>
    %90 = vector.extract_strided_slice %65 {offsets = [0, 5], sizes = [8, 1], strides = [1, 1]} : vector<8x9xf32> to vector<8x1xf32>
    %91 = vector.extract_strided_slice %64 {offsets = [0, 80], sizes = [8, 16], strides = [1, 1]} : vector<8x144xf32> to vector<8x16xf32>
    %92 = vector.broadcast %90 : vector<8x1xf32> to vector<8x16xf32>
    %93 = arith.mulf %92, %91 : vector<8x16xf32>
    %94 = arith.addf %89, %93 : vector<8x16xf32>
    %95 = vector.extract_strided_slice %65 {offsets = [0, 6], sizes = [8, 1], strides = [1, 1]} : vector<8x9xf32> to vector<8x1xf32>
    %96 = vector.extract_strided_slice %64 {offsets = [0, 96], sizes = [8, 16], strides = [1, 1]} : vector<8x144xf32> to vector<8x16xf32>
    %97 = vector.broadcast %95 : vector<8x1xf32> to vector<8x16xf32>
    %98 = arith.mulf %97, %96 : vector<8x16xf32>
    %99 = arith.addf %94, %98 : vector<8x16xf32>
    %100 = vector.extract_strided_slice %65 {offsets = [0, 7], sizes = [8, 1], strides = [1, 1]} : vector<8x9xf32> to vector<8x1xf32>
    %101 = vector.extract_strided_slice %64 {offsets = [0, 112], sizes = [8, 16], strides = [1, 1]} : vector<8x144xf32> to vector<8x16xf32>
    %102 = vector.broadcast %100 : vector<8x1xf32> to vector<8x16xf32>
    %103 = arith.mulf %102, %101 : vector<8x16xf32>
    %104 = arith.addf %99, %103 : vector<8x16xf32>
    %105 = vector.extract_strided_slice %65 {offsets = [0, 8], sizes = [8, 1], strides = [1, 1]} : vector<8x9xf32> to vector<8x1xf32>
    %106 = vector.extract_strided_slice %64 {offsets = [0, 128], sizes = [8, 16], strides = [1, 1]} : vector<8x144xf32> to vector<8x16xf32>
    %107 = vector.broadcast %105 : vector<8x1xf32> to vector<8x16xf32>
    %108 = arith.mulf %107, %106 : vector<8x16xf32>
    %109 = arith.addf %104, %108 : vector<8x16xf32>
    %c40 = arith.constant 40 : index
    %c0_16 = arith.constant 0 : index
    %110 = vector.load %arg6[%c40, %c0_16] : memref<536x16xf32, #tpu.memory_space<vmem>>, vector<8x1xf32>
    %111 = vector.broadcast %110 : vector<8x1xf32> to vector<8x16xf32>
    %112 = arith.addf %109, %111 : vector<8x16xf32>
    %cst_17 = arith.constant 0.000000e+00 : f32
    %113 = vector.broadcast %cst_17 : f32 to vector<8x16xf32>
    %114 = arith.maximumf %112, %113 : vector<8x16xf32>
    %c48 = arith.constant 48 : index
    %c0_18 = arith.constant 0 : index
    %115 = vector.load %arg6[%c48, %c0_18] : memref<536x16xf32, #tpu.memory_space<vmem>>, vector<16x8xf32>
    %cst_19 = arith.constant dense<0.000000e+00> : vector<16x16xf32>
    %116 = tpu.matmul %115, %114, %cst_19 {dimension_numbers = #tpu.dot_dimension_numbers<[1], [0], [0], [1], [0, 0, 1, 1], [], []>} : vector<16x8xf32>, vector<8x16xf32>, vector<16x16xf32> -> vector<16x16xf32>
    %c64 = arith.constant 64 : index
    %c0_20 = arith.constant 0 : index
    %117 = vector.load %arg6[%c64, %c0_20] : memref<536x16xf32, #tpu.memory_space<vmem>>, vector<16x1xf32>
    %118 = vector.broadcast %117 : vector<16x1xf32> to vector<16x16xf32>
    %119 = arith.addf %116, %118 : vector<16x16xf32>
    %cst_21 = arith.constant 0.000000e+00 : f32
    %120 = vector.broadcast %cst_21 : f32 to vector<16x16xf32>
    %121 = arith.maximumf %119, %120 : vector<16x16xf32>
    %c80 = arith.constant 80 : index
    %c0_22 = arith.constant 0 : index
    %122 = vector.load %arg6[%c80, %c0_22] : memref<536x16xf32, #tpu.memory_space<vmem>>, vector<256x16xf32>
    %cst_23 = arith.constant dense<0.000000e+00> : vector<256x16xf32>
    %123 = tpu.matmul %122, %121, %cst_23 {dimension_numbers = #tpu.dot_dimension_numbers<[1], [0], [0], [1], [0, 0, 1, 1], [], []>} : vector<256x16xf32>, vector<16x16xf32>, vector<256x16xf32> -> vector<256x16xf32>
    %124 = vector.extract_strided_slice %123 {offsets = [0, 0], sizes = [16, 16], strides = [1, 1]} : vector<256x16xf32> to vector<16x16xf32>
    %125 = arith.truncf %124 : vector<16x16xf32> to vector<16x16xbf16>
    %c0_24 = arith.constant 0 : index
    %c0_25 = arith.constant 0 : index
    %c0_26 = arith.constant 0 : index
    %126 = vector.load %arg4[%c0_24, %c0_25, %c0_26] : memref<16x16x64xbf16, #tpu.memory_space<vmem>>, vector<1x16x64xbf16>
    %127 = vector.shape_cast %126 : vector<1x16x64xbf16> to vector<16x64xbf16>
    %cst_27 = arith.constant dense<0.000000e+00> : vector<16x64xf32>
    %128 = tpu.matmul %125, %127, %cst_27 {dimension_numbers = #tpu.dot_dimension_numbers<[1], [0], [0], [1], [0, 0, 1, 1], [], []>} : vector<16x16xbf16>, vector<16x64xbf16>, vector<16x64xf32> -> vector<16x64xf32>
    %129 = vector.extract_strided_slice %123 {offsets = [16, 0], sizes = [16, 16], strides = [1, 1]} : vector<256x16xf32> to vector<16x16xf32>
    %130 = arith.truncf %129 : vector<16x16xf32> to vector<16x16xbf16>
    %c1 = arith.constant 1 : index
    %c0_28 = arith.constant 0 : index
    %c0_29 = arith.constant 0 : index
    %131 = vector.load %arg4[%c1, %c0_28, %c0_29] : memref<16x16x64xbf16, #tpu.memory_space<vmem>>, vector<1x16x64xbf16>
    %132 = vector.shape_cast %131 : vector<1x16x64xbf16> to vector<16x64xbf16>
    %cst_30 = arith.constant dense<0.000000e+00> : vector<16x64xf32>
    %133 = tpu.matmul %130, %132, %cst_30 {dimension_numbers = #tpu.dot_dimension_numbers<[1], [0], [0], [1], [0, 0, 1, 1], [], []>} : vector<16x16xbf16>, vector<16x64xbf16>, vector<16x64xf32> -> vector<16x64xf32>
    %134 = arith.addf %128, %133 : vector<16x64xf32>
    %135 = vector.extract_strided_slice %123 {offsets = [32, 0], sizes = [16, 16], strides = [1, 1]} : vector<256x16xf32> to vector<16x16xf32>
    %136 = arith.truncf %135 : vector<16x16xf32> to vector<16x16xbf16>
    %c2 = arith.constant 2 : index
    %c0_31 = arith.constant 0 : index
    %c0_32 = arith.constant 0 : index
    %137 = vector.load %arg4[%c2, %c0_31, %c0_32] : memref<16x16x64xbf16, #tpu.memory_space<vmem>>, vector<1x16x64xbf16>
    %138 = vector.shape_cast %137 : vector<1x16x64xbf16> to vector<16x64xbf16>
    %cst_33 = arith.constant dense<0.000000e+00> : vector<16x64xf32>
    %139 = tpu.matmul %136, %138, %cst_33 {dimension_numbers = #tpu.dot_dimension_numbers<[1], [0], [0], [1], [0, 0, 1, 1], [], []>} : vector<16x16xbf16>, vector<16x64xbf16>, vector<16x64xf32> -> vector<16x64xf32>
    %140 = arith.addf %134, %139 : vector<16x64xf32>
    %141 = vector.extract_strided_slice %123 {offsets = [48, 0], sizes = [16, 16], strides = [1, 1]} : vector<256x16xf32> to vector<16x16xf32>
    %142 = arith.truncf %141 : vector<16x16xf32> to vector<16x16xbf16>
    %c3 = arith.constant 3 : index
    %c0_34 = arith.constant 0 : index
    %c0_35 = arith.constant 0 : index
    %143 = vector.load %arg4[%c3, %c0_34, %c0_35] : memref<16x16x64xbf16, #tpu.memory_space<vmem>>, vector<1x16x64xbf16>
    %144 = vector.shape_cast %143 : vector<1x16x64xbf16> to vector<16x64xbf16>
    %cst_36 = arith.constant dense<0.000000e+00> : vector<16x64xf32>
    %145 = tpu.matmul %142, %144, %cst_36 {dimension_numbers = #tpu.dot_dimension_numbers<[1], [0], [0], [1], [0, 0, 1, 1], [], []>} : vector<16x16xbf16>, vector<16x64xbf16>, vector<16x64xf32> -> vector<16x64xf32>
    %146 = arith.addf %140, %145 : vector<16x64xf32>
    %147 = vector.extract_strided_slice %123 {offsets = [64, 0], sizes = [16, 16], strides = [1, 1]} : vector<256x16xf32> to vector<16x16xf32>
    %148 = arith.truncf %147 : vector<16x16xf32> to vector<16x16xbf16>
    %c4 = arith.constant 4 : index
    %c0_37 = arith.constant 0 : index
    %c0_38 = arith.constant 0 : index
    %149 = vector.load %arg4[%c4, %c0_37, %c0_38] : memref<16x16x64xbf16, #tpu.memory_space<vmem>>, vector<1x16x64xbf16>
    %150 = vector.shape_cast %149 : vector<1x16x64xbf16> to vector<16x64xbf16>
    %cst_39 = arith.constant dense<0.000000e+00> : vector<16x64xf32>
    %151 = tpu.matmul %148, %150, %cst_39 {dimension_numbers = #tpu.dot_dimension_numbers<[1], [0], [0], [1], [0, 0, 1, 1], [], []>} : vector<16x16xbf16>, vector<16x64xbf16>, vector<16x64xf32> -> vector<16x64xf32>
    %152 = arith.addf %146, %151 : vector<16x64xf32>
    %153 = vector.extract_strided_slice %123 {offsets = [80, 0], sizes = [16, 16], strides = [1, 1]} : vector<256x16xf32> to vector<16x16xf32>
    %154 = arith.truncf %153 : vector<16x16xf32> to vector<16x16xbf16>
    %c5 = arith.constant 5 : index
    %c0_40 = arith.constant 0 : index
    %c0_41 = arith.constant 0 : index
    %155 = vector.load %arg4[%c5, %c0_40, %c0_41] : memref<16x16x64xbf16, #tpu.memory_space<vmem>>, vector<1x16x64xbf16>
    %156 = vector.shape_cast %155 : vector<1x16x64xbf16> to vector<16x64xbf16>
    %cst_42 = arith.constant dense<0.000000e+00> : vector<16x64xf32>
    %157 = tpu.matmul %154, %156, %cst_42 {dimension_numbers = #tpu.dot_dimension_numbers<[1], [0], [0], [1], [0, 0, 1, 1], [], []>} : vector<16x16xbf16>, vector<16x64xbf16>, vector<16x64xf32> -> vector<16x64xf32>
    %158 = arith.addf %152, %157 : vector<16x64xf32>
    %159 = vector.extract_strided_slice %123 {offsets = [96, 0], sizes = [16, 16], strides = [1, 1]} : vector<256x16xf32> to vector<16x16xf32>
    %160 = arith.truncf %159 : vector<16x16xf32> to vector<16x16xbf16>
    %c6 = arith.constant 6 : index
    %c0_43 = arith.constant 0 : index
    %c0_44 = arith.constant 0 : index
    %161 = vector.load %arg4[%c6, %c0_43, %c0_44] : memref<16x16x64xbf16, #tpu.memory_space<vmem>>, vector<1x16x64xbf16>
    %162 = vector.shape_cast %161 : vector<1x16x64xbf16> to vector<16x64xbf16>
    %cst_45 = arith.constant dense<0.000000e+00> : vector<16x64xf32>
    %163 = tpu.matmul %160, %162, %cst_45 {dimension_numbers = #tpu.dot_dimension_numbers<[1], [0], [0], [1], [0, 0, 1, 1], [], []>} : vector<16x16xbf16>, vector<16x64xbf16>, vector<16x64xf32> -> vector<16x64xf32>
    %164 = arith.addf %158, %163 : vector<16x64xf32>
    %165 = vector.extract_strided_slice %123 {offsets = [112, 0], sizes = [16, 16], strides = [1, 1]} : vector<256x16xf32> to vector<16x16xf32>
    %166 = arith.truncf %165 : vector<16x16xf32> to vector<16x16xbf16>
    %c7 = arith.constant 7 : index
    %c0_46 = arith.constant 0 : index
    %c0_47 = arith.constant 0 : index
    %167 = vector.load %arg4[%c7, %c0_46, %c0_47] : memref<16x16x64xbf16, #tpu.memory_space<vmem>>, vector<1x16x64xbf16>
    %168 = vector.shape_cast %167 : vector<1x16x64xbf16> to vector<16x64xbf16>
    %cst_48 = arith.constant dense<0.000000e+00> : vector<16x64xf32>
    %169 = tpu.matmul %166, %168, %cst_48 {dimension_numbers = #tpu.dot_dimension_numbers<[1], [0], [0], [1], [0, 0, 1, 1], [], []>} : vector<16x16xbf16>, vector<16x64xbf16>, vector<16x64xf32> -> vector<16x64xf32>
    %170 = arith.addf %164, %169 : vector<16x64xf32>
    %171 = vector.extract_strided_slice %123 {offsets = [128, 0], sizes = [16, 16], strides = [1, 1]} : vector<256x16xf32> to vector<16x16xf32>
    %172 = arith.truncf %171 : vector<16x16xf32> to vector<16x16xbf16>
    %c8_49 = arith.constant 8 : index
    %c0_50 = arith.constant 0 : index
    %c0_51 = arith.constant 0 : index
    %173 = vector.load %arg4[%c8_49, %c0_50, %c0_51] : memref<16x16x64xbf16, #tpu.memory_space<vmem>>, vector<1x16x64xbf16>
    %174 = vector.shape_cast %173 : vector<1x16x64xbf16> to vector<16x64xbf16>
    %cst_52 = arith.constant dense<0.000000e+00> : vector<16x64xf32>
    %175 = tpu.matmul %172, %174, %cst_52 {dimension_numbers = #tpu.dot_dimension_numbers<[1], [0], [0], [1], [0, 0, 1, 1], [], []>} : vector<16x16xbf16>, vector<16x64xbf16>, vector<16x64xf32> -> vector<16x64xf32>
    %176 = arith.addf %170, %175 : vector<16x64xf32>
    %177 = vector.extract_strided_slice %123 {offsets = [144, 0], sizes = [16, 16], strides = [1, 1]} : vector<256x16xf32> to vector<16x16xf32>
    %178 = arith.truncf %177 : vector<16x16xf32> to vector<16x16xbf16>
    %c9 = arith.constant 9 : index
    %c0_53 = arith.constant 0 : index
    %c0_54 = arith.constant 0 : index
    %179 = vector.load %arg4[%c9, %c0_53, %c0_54] : memref<16x16x64xbf16, #tpu.memory_space<vmem>>, vector<1x16x64xbf16>
    %180 = vector.shape_cast %179 : vector<1x16x64xbf16> to vector<16x64xbf16>
    %cst_55 = arith.constant dense<0.000000e+00> : vector<16x64xf32>
    %181 = tpu.matmul %178, %180, %cst_55 {dimension_numbers = #tpu.dot_dimension_numbers<[1], [0], [0], [1], [0, 0, 1, 1], [], []>} : vector<16x16xbf16>, vector<16x64xbf16>, vector<16x64xf32> -> vector<16x64xf32>
    %182 = arith.addf %176, %181 : vector<16x64xf32>
    %183 = vector.extract_strided_slice %123 {offsets = [160, 0], sizes = [16, 16], strides = [1, 1]} : vector<256x16xf32> to vector<16x16xf32>
    %184 = arith.truncf %183 : vector<16x16xf32> to vector<16x16xbf16>
    %c10 = arith.constant 10 : index
    %c0_56 = arith.constant 0 : index
    %c0_57 = arith.constant 0 : index
    %185 = vector.load %arg4[%c10, %c0_56, %c0_57] : memref<16x16x64xbf16, #tpu.memory_space<vmem>>, vector<1x16x64xbf16>
    %186 = vector.shape_cast %185 : vector<1x16x64xbf16> to vector<16x64xbf16>
    %cst_58 = arith.constant dense<0.000000e+00> : vector<16x64xf32>
    %187 = tpu.matmul %184, %186, %cst_58 {dimension_numbers = #tpu.dot_dimension_numbers<[1], [0], [0], [1], [0, 0, 1, 1], [], []>} : vector<16x16xbf16>, vector<16x64xbf16>, vector<16x64xf32> -> vector<16x64xf32>
    %188 = arith.addf %182, %187 : vector<16x64xf32>
    %189 = vector.extract_strided_slice %123 {offsets = [176, 0], sizes = [16, 16], strides = [1, 1]} : vector<256x16xf32> to vector<16x16xf32>
    %190 = arith.truncf %189 : vector<16x16xf32> to vector<16x16xbf16>
    %c11 = arith.constant 11 : index
    %c0_59 = arith.constant 0 : index
    %c0_60 = arith.constant 0 : index
    %191 = vector.load %arg4[%c11, %c0_59, %c0_60] : memref<16x16x64xbf16, #tpu.memory_space<vmem>>, vector<1x16x64xbf16>
    %192 = vector.shape_cast %191 : vector<1x16x64xbf16> to vector<16x64xbf16>
    %cst_61 = arith.constant dense<0.000000e+00> : vector<16x64xf32>
    %193 = tpu.matmul %190, %192, %cst_61 {dimension_numbers = #tpu.dot_dimension_numbers<[1], [0], [0], [1], [0, 0, 1, 1], [], []>} : vector<16x16xbf16>, vector<16x64xbf16>, vector<16x64xf32> -> vector<16x64xf32>
    %194 = arith.addf %188, %193 : vector<16x64xf32>
    %195 = vector.extract_strided_slice %123 {offsets = [192, 0], sizes = [16, 16], strides = [1, 1]} : vector<256x16xf32> to vector<16x16xf32>
    %196 = arith.truncf %195 : vector<16x16xf32> to vector<16x16xbf16>
    %c12 = arith.constant 12 : index
    %c0_62 = arith.constant 0 : index
    %c0_63 = arith.constant 0 : index
    %197 = vector.load %arg4[%c12, %c0_62, %c0_63] : memref<16x16x64xbf16, #tpu.memory_space<vmem>>, vector<1x16x64xbf16>
    %198 = vector.shape_cast %197 : vector<1x16x64xbf16> to vector<16x64xbf16>
    %cst_64 = arith.constant dense<0.000000e+00> : vector<16x64xf32>
    %199 = tpu.matmul %196, %198, %cst_64 {dimension_numbers = #tpu.dot_dimension_numbers<[1], [0], [0], [1], [0, 0, 1, 1], [], []>} : vector<16x16xbf16>, vector<16x64xbf16>, vector<16x64xf32> -> vector<16x64xf32>
    %200 = arith.addf %194, %199 : vector<16x64xf32>
    %201 = vector.extract_strided_slice %123 {offsets = [208, 0], sizes = [16, 16], strides = [1, 1]} : vector<256x16xf32> to vector<16x16xf32>
    %202 = arith.truncf %201 : vector<16x16xf32> to vector<16x16xbf16>
    %c13 = arith.constant 13 : index
    %c0_65 = arith.constant 0 : index
    %c0_66 = arith.constant 0 : index
    %203 = vector.load %arg4[%c13, %c0_65, %c0_66] : memref<16x16x64xbf16, #tpu.memory_space<vmem>>, vector<1x16x64xbf16>
    %204 = vector.shape_cast %203 : vector<1x16x64xbf16> to vector<16x64xbf16>
    %cst_67 = arith.constant dense<0.000000e+00> : vector<16x64xf32>
    %205 = tpu.matmul %202, %204, %cst_67 {dimension_numbers = #tpu.dot_dimension_numbers<[1], [0], [0], [1], [0, 0, 1, 1], [], []>} : vector<16x16xbf16>, vector<16x64xbf16>, vector<16x64xf32> -> vector<16x64xf32>
    %206 = arith.addf %200, %205 : vector<16x64xf32>
    %207 = vector.extract_strided_slice %123 {offsets = [224, 0], sizes = [16, 16], strides = [1, 1]} : vector<256x16xf32> to vector<16x16xf32>
    %208 = arith.truncf %207 : vector<16x16xf32> to vector<16x16xbf16>
    %c14 = arith.constant 14 : index
    %c0_68 = arith.constant 0 : index
    %c0_69 = arith.constant 0 : index
    %209 = vector.load %arg4[%c14, %c0_68, %c0_69] : memref<16x16x64xbf16, #tpu.memory_space<vmem>>, vector<1x16x64xbf16>
    %210 = vector.shape_cast %209 : vector<1x16x64xbf16> to vector<16x64xbf16>
    %cst_70 = arith.constant dense<0.000000e+00> : vector<16x64xf32>
    %211 = tpu.matmul %208, %210, %cst_70 {dimension_numbers = #tpu.dot_dimension_numbers<[1], [0], [0], [1], [0, 0, 1, 1], [], []>} : vector<16x16xbf16>, vector<16x64xbf16>, vector<16x64xf32> -> vector<16x64xf32>
    %212 = arith.addf %206, %211 : vector<16x64xf32>
    %213 = vector.extract_strided_slice %123 {offsets = [240, 0], sizes = [16, 16], strides = [1, 1]} : vector<256x16xf32> to vector<16x16xf32>
    %214 = arith.truncf %213 : vector<16x16xf32> to vector<16x16xbf16>
    %c15 = arith.constant 15 : index
    %c0_71 = arith.constant 0 : index
    %c0_72 = arith.constant 0 : index
    %215 = vector.load %arg4[%c15, %c0_71, %c0_72] : memref<16x16x64xbf16, #tpu.memory_space<vmem>>, vector<1x16x64xbf16>
    %216 = vector.shape_cast %215 : vector<1x16x64xbf16> to vector<16x64xbf16>
    %cst_73 = arith.constant dense<0.000000e+00> : vector<16x64xf32>
    %217 = tpu.matmul %214, %216, %cst_73 {dimension_numbers = #tpu.dot_dimension_numbers<[1], [0], [0], [1], [0, 0, 1, 1], [], []>} : vector<16x16xbf16>, vector<16x64xbf16>, vector<16x64xf32> -> vector<16x64xf32>
    %218 = arith.addf %212, %217 : vector<16x64xf32>
    %c336 = arith.constant 336 : index
    %c0_74 = arith.constant 0 : index
    %219 = vector.load %arg6[%c336, %c0_74] : memref<536x16xf32, #tpu.memory_space<vmem>>, vector<16x1xf32>
    %220 = vector.broadcast %219 : vector<16x1xf32> to vector<16x64xf32>
    %221 = arith.addf %218, %220 : vector<16x64xf32>
    %cst_75 = arith.constant 0.000000e+00 : f32
    %222 = vector.broadcast %cst_75 : f32 to vector<16x64xf32>
    %223 = arith.maximumf %221, %222 : vector<16x64xf32>
    %c352 = arith.constant 352 : index
    %c0_76 = arith.constant 0 : index
    %224 = vector.load %arg6[%c352, %c0_76] : memref<536x16xf32, #tpu.memory_space<vmem>>, vector<8x16xf32>
    %cst_77 = arith.constant dense<0.000000e+00> : vector<8x64xf32>
    %225 = tpu.matmul %224, %223, %cst_77 {dimension_numbers = #tpu.dot_dimension_numbers<[1], [0], [0], [1], [0, 0, 1, 1], [], []>} : vector<8x16xf32>, vector<16x64xf32>, vector<8x64xf32> -> vector<8x64xf32>
    %c360 = arith.constant 360 : index
    %c0_78 = arith.constant 0 : index
    %226 = vector.load %arg6[%c360, %c0_78] : memref<536x16xf32, #tpu.memory_space<vmem>>, vector<8x1xf32>
    %227 = vector.broadcast %226 : vector<8x1xf32> to vector<8x64xf32>
    %228 = arith.addf %225, %227 : vector<8x64xf32>
    %cst_79 = arith.constant 0.000000e+00 : f32
    %229 = vector.broadcast %cst_79 : f32 to vector<8x64xf32>
    %230 = arith.maximumf %228, %229 : vector<8x64xf32>
    %c368 = arith.constant 368 : index
    %c0_80 = arith.constant 0 : index
    %231 = vector.load %arg6[%c368, %c0_80] : memref<536x16xf32, #tpu.memory_space<vmem>>, vector<8x8xf32>
    %cst_81 = arith.constant dense<0.000000e+00> : vector<8x64xf32>
    %232 = tpu.matmul %231, %61, %cst_81 {dimension_numbers = #tpu.dot_dimension_numbers<[1], [0], [0], [1], [0, 0, 1, 1], [], []>} : vector<8x8xf32>, vector<8x64xf32>, vector<8x64xf32> -> vector<8x64xf32>
    %c376 = arith.constant 376 : index
    %c0_82 = arith.constant 0 : index
    %233 = vector.load %arg6[%c376, %c0_82] : memref<536x16xf32, #tpu.memory_space<vmem>>, vector<8x1xf32>
    %234 = vector.broadcast %233 : vector<8x1xf32> to vector<8x64xf32>
    %235 = arith.addf %232, %234 : vector<8x64xf32>
    %cst_83 = arith.constant 0.000000e+00 : f32
    %236 = vector.broadcast %cst_83 : f32 to vector<8x64xf32>
    %237 = arith.maximumf %235, %236 : vector<8x64xf32>
    %238 = arith.addf %237, %230 : vector<8x64xf32>
    tpu.wait_dma2 semaphore(%arg9 : memref<!tpu.dma_semaphore, #tpu.memory_space<semaphore_mem>>) src(%arg5 : memref<16x64x256xbf16, #tpu.memory_space<any>>) dst(%arg8 : memref<16x64x256xbf16, #tpu.memory_space<vmem>>)
    %c384 = arith.constant 384 : index
    %c0_84 = arith.constant 0 : index
    %239 = vector.load %arg6[%c384, %c0_84] : memref<536x16xf32, #tpu.memory_space<vmem>>, vector<128x8xf32>
    %cst_85 = arith.constant dense<0.000000e+00> : vector<128x64xf32>
    %240 = tpu.matmul %239, %238, %cst_85 {dimension_numbers = #tpu.dot_dimension_numbers<[1], [0], [0], [1], [0, 0, 1, 1], [], []>} : vector<128x8xf32>, vector<8x64xf32>, vector<128x64xf32> -> vector<128x64xf32>
    %241 = vector.extract_strided_slice %240 {offsets = [0, 0], sizes = [8, 64], strides = [1, 1]} : vector<128x64xf32> to vector<8x64xf32>
    %242 = arith.truncf %241 : vector<8x64xf32> to vector<8x64xbf16>
    %c0_86 = arith.constant 0 : index
    %c0_87 = arith.constant 0 : index
    %c0_88 = arith.constant 0 : index
    %243 = vector.load %arg8[%c0_86, %c0_87, %c0_88] : memref<16x64x256xbf16, #tpu.memory_space<vmem>>, vector<1x64x256xbf16>
    %244 = vector.shape_cast %243 : vector<1x64x256xbf16> to vector<64x256xbf16>
    %cst_89 = arith.constant dense<0.000000e+00> : vector<8x256xf32>
    %245 = tpu.matmul %242, %244, %cst_89 {dimension_numbers = #tpu.dot_dimension_numbers<[1], [0], [0], [1], [0, 0, 1, 1], [], []>} : vector<8x64xbf16>, vector<64x256xbf16>, vector<8x256xf32> -> vector<8x256xf32>
    %246 = vector.extract_strided_slice %240 {offsets = [8, 0], sizes = [8, 64], strides = [1, 1]} : vector<128x64xf32> to vector<8x64xf32>
    %247 = arith.truncf %246 : vector<8x64xf32> to vector<8x64xbf16>
    %c1_90 = arith.constant 1 : index
    %c0_91 = arith.constant 0 : index
    %c0_92 = arith.constant 0 : index
    %248 = vector.load %arg8[%c1_90, %c0_91, %c0_92] : memref<16x64x256xbf16, #tpu.memory_space<vmem>>, vector<1x64x256xbf16>
    %249 = vector.shape_cast %248 : vector<1x64x256xbf16> to vector<64x256xbf16>
    %cst_93 = arith.constant dense<0.000000e+00> : vector<8x256xf32>
    %250 = tpu.matmul %247, %249, %cst_93 {dimension_numbers = #tpu.dot_dimension_numbers<[1], [0], [0], [1], [0, 0, 1, 1], [], []>} : vector<8x64xbf16>, vector<64x256xbf16>, vector<8x256xf32> -> vector<8x256xf32>
    %251 = arith.addf %245, %250 : vector<8x256xf32>
    %252 = vector.extract_strided_slice %240 {offsets = [16, 0], sizes = [8, 64], strides = [1, 1]} : vector<128x64xf32> to vector<8x64xf32>
    %253 = arith.truncf %252 : vector<8x64xf32> to vector<8x64xbf16>
    %c2_94 = arith.constant 2 : index
    %c0_95 = arith.constant 0 : index
    %c0_96 = arith.constant 0 : index
    %254 = vector.load %arg8[%c2_94, %c0_95, %c0_96] : memref<16x64x256xbf16, #tpu.memory_space<vmem>>, vector<1x64x256xbf16>
    %255 = vector.shape_cast %254 : vector<1x64x256xbf16> to vector<64x256xbf16>
    %cst_97 = arith.constant dense<0.000000e+00> : vector<8x256xf32>
    %256 = tpu.matmul %253, %255, %cst_97 {dimension_numbers = #tpu.dot_dimension_numbers<[1], [0], [0], [1], [0, 0, 1, 1], [], []>} : vector<8x64xbf16>, vector<64x256xbf16>, vector<8x256xf32> -> vector<8x256xf32>
    %257 = arith.addf %251, %256 : vector<8x256xf32>
    %258 = vector.extract_strided_slice %240 {offsets = [24, 0], sizes = [8, 64], strides = [1, 1]} : vector<128x64xf32> to vector<8x64xf32>
    %259 = arith.truncf %258 : vector<8x64xf32> to vector<8x64xbf16>
    %c3_98 = arith.constant 3 : index
    %c0_99 = arith.constant 0 : index
    %c0_100 = arith.constant 0 : index
    %260 = vector.load %arg8[%c3_98, %c0_99, %c0_100] : memref<16x64x256xbf16, #tpu.memory_space<vmem>>, vector<1x64x256xbf16>
    %261 = vector.shape_cast %260 : vector<1x64x256xbf16> to vector<64x256xbf16>
    %cst_101 = arith.constant dense<0.000000e+00> : vector<8x256xf32>
    %262 = tpu.matmul %259, %261, %cst_101 {dimension_numbers = #tpu.dot_dimension_numbers<[1], [0], [0], [1], [0, 0, 1, 1], [], []>} : vector<8x64xbf16>, vector<64x256xbf16>, vector<8x256xf32> -> vector<8x256xf32>
    %263 = arith.addf %257, %262 : vector<8x256xf32>
    %264 = vector.extract_strided_slice %240 {offsets = [32, 0], sizes = [8, 64], strides = [1, 1]} : vector<128x64xf32> to vector<8x64xf32>
    %265 = arith.truncf %264 : vector<8x64xf32> to vector<8x64xbf16>
    %c4_102 = arith.constant 4 : index
    %c0_103 = arith.constant 0 : index
    %c0_104 = arith.constant 0 : index
    %266 = vector.load %arg8[%c4_102, %c0_103, %c0_104] : memref<16x64x256xbf16, #tpu.memory_space<vmem>>, vector<1x64x256xbf16>
    %267 = vector.shape_cast %266 : vector<1x64x256xbf16> to vector<64x256xbf16>
    %cst_105 = arith.constant dense<0.000000e+00> : vector<8x256xf32>
    %268 = tpu.matmul %265, %267, %cst_105 {dimension_numbers = #tpu.dot_dimension_numbers<[1], [0], [0], [1], [0, 0, 1, 1], [], []>} : vector<8x64xbf16>, vector<64x256xbf16>, vector<8x256xf32> -> vector<8x256xf32>
    %269 = arith.addf %263, %268 : vector<8x256xf32>
    %270 = vector.extract_strided_slice %240 {offsets = [40, 0], sizes = [8, 64], strides = [1, 1]} : vector<128x64xf32> to vector<8x64xf32>
    %271 = arith.truncf %270 : vector<8x64xf32> to vector<8x64xbf16>
    %c5_106 = arith.constant 5 : index
    %c0_107 = arith.constant 0 : index
    %c0_108 = arith.constant 0 : index
    %272 = vector.load %arg8[%c5_106, %c0_107, %c0_108] : memref<16x64x256xbf16, #tpu.memory_space<vmem>>, vector<1x64x256xbf16>
    %273 = vector.shape_cast %272 : vector<1x64x256xbf16> to vector<64x256xbf16>
    %cst_109 = arith.constant dense<0.000000e+00> : vector<8x256xf32>
    %274 = tpu.matmul %271, %273, %cst_109 {dimension_numbers = #tpu.dot_dimension_numbers<[1], [0], [0], [1], [0, 0, 1, 1], [], []>} : vector<8x64xbf16>, vector<64x256xbf16>, vector<8x256xf32> -> vector<8x256xf32>
    %275 = arith.addf %269, %274 : vector<8x256xf32>
    %276 = vector.extract_strided_slice %240 {offsets = [48, 0], sizes = [8, 64], strides = [1, 1]} : vector<128x64xf32> to vector<8x64xf32>
    %277 = arith.truncf %276 : vector<8x64xf32> to vector<8x64xbf16>
    %c6_110 = arith.constant 6 : index
    %c0_111 = arith.constant 0 : index
    %c0_112 = arith.constant 0 : index
    %278 = vector.load %arg8[%c6_110, %c0_111, %c0_112] : memref<16x64x256xbf16, #tpu.memory_space<vmem>>, vector<1x64x256xbf16>
    %279 = vector.shape_cast %278 : vector<1x64x256xbf16> to vector<64x256xbf16>
    %cst_113 = arith.constant dense<0.000000e+00> : vector<8x256xf32>
    %280 = tpu.matmul %277, %279, %cst_113 {dimension_numbers = #tpu.dot_dimension_numbers<[1], [0], [0], [1], [0, 0, 1, 1], [], []>} : vector<8x64xbf16>, vector<64x256xbf16>, vector<8x256xf32> -> vector<8x256xf32>
    %281 = arith.addf %275, %280 : vector<8x256xf32>
    %282 = vector.extract_strided_slice %240 {offsets = [56, 0], sizes = [8, 64], strides = [1, 1]} : vector<128x64xf32> to vector<8x64xf32>
    %283 = arith.truncf %282 : vector<8x64xf32> to vector<8x64xbf16>
    %c7_114 = arith.constant 7 : index
    %c0_115 = arith.constant 0 : index
    %c0_116 = arith.constant 0 : index
    %284 = vector.load %arg8[%c7_114, %c0_115, %c0_116] : memref<16x64x256xbf16, #tpu.memory_space<vmem>>, vector<1x64x256xbf16>
    %285 = vector.shape_cast %284 : vector<1x64x256xbf16> to vector<64x256xbf16>
    %cst_117 = arith.constant dense<0.000000e+00> : vector<8x256xf32>
    %286 = tpu.matmul %283, %285, %cst_117 {dimension_numbers = #tpu.dot_dimension_numbers<[1], [0], [0], [1], [0, 0, 1, 1], [], []>} : vector<8x64xbf16>, vector<64x256xbf16>, vector<8x256xf32> -> vector<8x256xf32>
    %287 = arith.addf %281, %286 : vector<8x256xf32>
    %288 = vector.extract_strided_slice %240 {offsets = [64, 0], sizes = [8, 64], strides = [1, 1]} : vector<128x64xf32> to vector<8x64xf32>
    %289 = arith.truncf %288 : vector<8x64xf32> to vector<8x64xbf16>
    %c8_118 = arith.constant 8 : index
    %c0_119 = arith.constant 0 : index
    %c0_120 = arith.constant 0 : index
    %290 = vector.load %arg8[%c8_118, %c0_119, %c0_120] : memref<16x64x256xbf16, #tpu.memory_space<vmem>>, vector<1x64x256xbf16>
    %291 = vector.shape_cast %290 : vector<1x64x256xbf16> to vector<64x256xbf16>
    %cst_121 = arith.constant dense<0.000000e+00> : vector<8x256xf32>
    %292 = tpu.matmul %289, %291, %cst_121 {dimension_numbers = #tpu.dot_dimension_numbers<[1], [0], [0], [1], [0, 0, 1, 1], [], []>} : vector<8x64xbf16>, vector<64x256xbf16>, vector<8x256xf32> -> vector<8x256xf32>
    %293 = arith.addf %287, %292 : vector<8x256xf32>
    %294 = vector.extract_strided_slice %240 {offsets = [72, 0], sizes = [8, 64], strides = [1, 1]} : vector<128x64xf32> to vector<8x64xf32>
    %295 = arith.truncf %294 : vector<8x64xf32> to vector<8x64xbf16>
    %c9_122 = arith.constant 9 : index
    %c0_123 = arith.constant 0 : index
    %c0_124 = arith.constant 0 : index
    %296 = vector.load %arg8[%c9_122, %c0_123, %c0_124] : memref<16x64x256xbf16, #tpu.memory_space<vmem>>, vector<1x64x256xbf16>
    %297 = vector.shape_cast %296 : vector<1x64x256xbf16> to vector<64x256xbf16>
    %cst_125 = arith.constant dense<0.000000e+00> : vector<8x256xf32>
    %298 = tpu.matmul %295, %297, %cst_125 {dimension_numbers = #tpu.dot_dimension_numbers<[1], [0], [0], [1], [0, 0, 1, 1], [], []>} : vector<8x64xbf16>, vector<64x256xbf16>, vector<8x256xf32> -> vector<8x256xf32>
    %299 = arith.addf %293, %298 : vector<8x256xf32>
    %300 = vector.extract_strided_slice %240 {offsets = [80, 0], sizes = [8, 64], strides = [1, 1]} : vector<128x64xf32> to vector<8x64xf32>
    %301 = arith.truncf %300 : vector<8x64xf32> to vector<8x64xbf16>
    %c10_126 = arith.constant 10 : index
    %c0_127 = arith.constant 0 : index
    %c0_128 = arith.constant 0 : index
    %302 = vector.load %arg8[%c10_126, %c0_127, %c0_128] : memref<16x64x256xbf16, #tpu.memory_space<vmem>>, vector<1x64x256xbf16>
    %303 = vector.shape_cast %302 : vector<1x64x256xbf16> to vector<64x256xbf16>
    %cst_129 = arith.constant dense<0.000000e+00> : vector<8x256xf32>
    %304 = tpu.matmul %301, %303, %cst_129 {dimension_numbers = #tpu.dot_dimension_numbers<[1], [0], [0], [1], [0, 0, 1, 1], [], []>} : vector<8x64xbf16>, vector<64x256xbf16>, vector<8x256xf32> -> vector<8x256xf32>
    %305 = arith.addf %299, %304 : vector<8x256xf32>
    %306 = vector.extract_strided_slice %240 {offsets = [88, 0], sizes = [8, 64], strides = [1, 1]} : vector<128x64xf32> to vector<8x64xf32>
    %307 = arith.truncf %306 : vector<8x64xf32> to vector<8x64xbf16>
    %c11_130 = arith.constant 11 : index
    %c0_131 = arith.constant 0 : index
    %c0_132 = arith.constant 0 : index
    %308 = vector.load %arg8[%c11_130, %c0_131, %c0_132] : memref<16x64x256xbf16, #tpu.memory_space<vmem>>, vector<1x64x256xbf16>
    %309 = vector.shape_cast %308 : vector<1x64x256xbf16> to vector<64x256xbf16>
    %cst_133 = arith.constant dense<0.000000e+00> : vector<8x256xf32>
    %310 = tpu.matmul %307, %309, %cst_133 {dimension_numbers = #tpu.dot_dimension_numbers<[1], [0], [0], [1], [0, 0, 1, 1], [], []>} : vector<8x64xbf16>, vector<64x256xbf16>, vector<8x256xf32> -> vector<8x256xf32>
    %311 = arith.addf %305, %310 : vector<8x256xf32>
    %312 = vector.extract_strided_slice %240 {offsets = [96, 0], sizes = [8, 64], strides = [1, 1]} : vector<128x64xf32> to vector<8x64xf32>
    %313 = arith.truncf %312 : vector<8x64xf32> to vector<8x64xbf16>
    %c12_134 = arith.constant 12 : index
    %c0_135 = arith.constant 0 : index
    %c0_136 = arith.constant 0 : index
    %314 = vector.load %arg8[%c12_134, %c0_135, %c0_136] : memref<16x64x256xbf16, #tpu.memory_space<vmem>>, vector<1x64x256xbf16>
    %315 = vector.shape_cast %314 : vector<1x64x256xbf16> to vector<64x256xbf16>
    %cst_137 = arith.constant dense<0.000000e+00> : vector<8x256xf32>
    %316 = tpu.matmul %313, %315, %cst_137 {dimension_numbers = #tpu.dot_dimension_numbers<[1], [0], [0], [1], [0, 0, 1, 1], [], []>} : vector<8x64xbf16>, vector<64x256xbf16>, vector<8x256xf32> -> vector<8x256xf32>
    %317 = arith.addf %311, %316 : vector<8x256xf32>
    %318 = vector.extract_strided_slice %240 {offsets = [104, 0], sizes = [8, 64], strides = [1, 1]} : vector<128x64xf32> to vector<8x64xf32>
    %319 = arith.truncf %318 : vector<8x64xf32> to vector<8x64xbf16>
    %c13_138 = arith.constant 13 : index
    %c0_139 = arith.constant 0 : index
    %c0_140 = arith.constant 0 : index
    %320 = vector.load %arg8[%c13_138, %c0_139, %c0_140] : memref<16x64x256xbf16, #tpu.memory_space<vmem>>, vector<1x64x256xbf16>
    %321 = vector.shape_cast %320 : vector<1x64x256xbf16> to vector<64x256xbf16>
    %cst_141 = arith.constant dense<0.000000e+00> : vector<8x256xf32>
    %322 = tpu.matmul %319, %321, %cst_141 {dimension_numbers = #tpu.dot_dimension_numbers<[1], [0], [0], [1], [0, 0, 1, 1], [], []>} : vector<8x64xbf16>, vector<64x256xbf16>, vector<8x256xf32> -> vector<8x256xf32>
    %323 = arith.addf %317, %322 : vector<8x256xf32>
    %324 = vector.extract_strided_slice %240 {offsets = [112, 0], sizes = [8, 64], strides = [1, 1]} : vector<128x64xf32> to vector<8x64xf32>
    %325 = arith.truncf %324 : vector<8x64xf32> to vector<8x64xbf16>
    %c14_142 = arith.constant 14 : index
    %c0_143 = arith.constant 0 : index
    %c0_144 = arith.constant 0 : index
    %326 = vector.load %arg8[%c14_142, %c0_143, %c0_144] : memref<16x64x256xbf16, #tpu.memory_space<vmem>>, vector<1x64x256xbf16>
    %327 = vector.shape_cast %326 : vector<1x64x256xbf16> to vector<64x256xbf16>
    %cst_145 = arith.constant dense<0.000000e+00> : vector<8x256xf32>
    %328 = tpu.matmul %325, %327, %cst_145 {dimension_numbers = #tpu.dot_dimension_numbers<[1], [0], [0], [1], [0, 0, 1, 1], [], []>} : vector<8x64xbf16>, vector<64x256xbf16>, vector<8x256xf32> -> vector<8x256xf32>
    %329 = arith.addf %323, %328 : vector<8x256xf32>
    %330 = vector.extract_strided_slice %240 {offsets = [120, 0], sizes = [8, 64], strides = [1, 1]} : vector<128x64xf32> to vector<8x64xf32>
    %331 = arith.truncf %330 : vector<8x64xf32> to vector<8x64xbf16>
    %c15_146 = arith.constant 15 : index
    %c0_147 = arith.constant 0 : index
    %c0_148 = arith.constant 0 : index
    %332 = vector.load %arg8[%c15_146, %c0_147, %c0_148] : memref<16x64x256xbf16, #tpu.memory_space<vmem>>, vector<1x64x256xbf16>
    %333 = vector.shape_cast %332 : vector<1x64x256xbf16> to vector<64x256xbf16>
    %cst_149 = arith.constant dense<0.000000e+00> : vector<8x256xf32>
    %334 = tpu.matmul %331, %333, %cst_149 {dimension_numbers = #tpu.dot_dimension_numbers<[1], [0], [0], [1], [0, 0, 1, 1], [], []>} : vector<8x64xbf16>, vector<64x256xbf16>, vector<8x256xf32> -> vector<8x256xf32>
    %335 = arith.addf %329, %334 : vector<8x256xf32>
    %c512 = arith.constant 512 : index
    %c0_150 = arith.constant 0 : index
    %336 = vector.load %arg6[%c512, %c0_150] : memref<536x16xf32, #tpu.memory_space<vmem>>, vector<8x1xf32>
    %337 = vector.broadcast %336 : vector<8x1xf32> to vector<8x256xf32>
    %338 = arith.addf %335, %337 : vector<8x256xf32>
    %cst_151 = arith.constant 0.000000e+00 : f32
    %339 = vector.broadcast %cst_151 : f32 to vector<8x256xf32>
    %340 = arith.maximumf %338, %339 : vector<8x256xf32>
    %c520 = arith.constant 520 : index
    %c0_152 = arith.constant 0 : index
    %341 = vector.load %arg6[%c520, %c0_152] : memref<536x16xf32, #tpu.memory_space<vmem>>, vector<3x8xf32>
    %cst_153 = arith.constant dense<0.000000e+00> : vector<3x256xf32>
    %342 = tpu.matmul %341, %340, %cst_153 {dimension_numbers = #tpu.dot_dimension_numbers<[1], [0], [0], [1], [0, 0, 1, 1], [], []>} : vector<3x8xf32>, vector<8x256xf32>, vector<3x256xf32> -> vector<3x256xf32>
    %c528 = arith.constant 528 : index
    %c0_154 = arith.constant 0 : index
    %343 = vector.load %arg6[%c528, %c0_154] : memref<536x16xf32, #tpu.memory_space<vmem>>, vector<3x1xf32>
    %344 = vector.broadcast %343 : vector<3x1xf32> to vector<3x256xf32>
    %345 = arith.addf %342, %344 : vector<3x256xf32>
    %cst_155 = arith.constant 0.000000e+00 : f32
    %346 = vector.broadcast %cst_155 : f32 to vector<3x256xf32>
    %347 = arith.maximumf %345, %346 : vector<3x256xf32>
    %c0_156 = arith.constant 0 : index
    %c0_157 = arith.constant 0 : index
    %c0_158 = arith.constant 0 : index
    %348 = vector.load %arg7[%c0_156, %c0_157, %c0_158] : memref<1x3x256xf32, #tpu.memory_space<vmem>>, vector<1x3x256xf32>
    %349 = vector.shape_cast %348 : vector<1x3x256xf32> to vector<3x256xf32>
    %350 = vector.shape_cast %347 : vector<3x256xf32> to vector<1x3x256xf32>
    tpu.vector_store %arg7[%c0_156, %c0_157, %c0_158], %350 {strides = array<i32>} : memref<1x3x256xf32, #tpu.memory_space<vmem>>, vector<1x3x256xf32>,
    return
  }
  func.func @transform_0(%arg0: i32) -> (i32, i32, i32) {
    %c0_i32 = arith.constant 0 : i32
    %c0_i32_0 = arith.constant 0 : i32
    %c0_i32_1 = arith.constant 0 : i32
    return %arg0, %c0_i32, %c0_i32_0 : i32, i32, i32
  }
  func.func @transform_1(%arg0: i32) -> (i32, i32) {
    %c0_i32 = arith.constant 0 : i32
    %c0_i32_0 = arith.constant 0 : i32
    %c0_i32_1 = arith.constant 0 : i32
    return %c0_i32, %c0_i32_0 : i32, i32
  }
  func.func @transform_2(%arg0: i32) -> (i32, i32) {
    %c0_i32 = arith.constant 0 : i32
    %c0_i32_0 = arith.constant 0 : i32
    %c0_i32_1 = arith.constant 0 : i32
    return %c0_i32, %c0_i32_0 : i32, i32
  }
  func.func @transform_3(%arg0: i32) -> (i32, i32, i32) {
    %c0_i32 = arith.constant 0 : i32
    %c0_i32_0 = arith.constant 0 : i32
    %c0_i32_1 = arith.constant 0 : i32
    %c0_i32_2 = arith.constant 0 : i32
    return %c0_i32, %c0_i32_0, %c0_i32_1 : i32, i32, i32
  }
  func.func @transform_5(%arg0: i32) -> (i32, i32) {
    %c0_i32 = arith.constant 0 : i32
    %c0_i32_0 = arith.constant 0 : i32
    %c0_i32_1 = arith.constant 0 : i32
    return %c0_i32, %c0_i32_0 : i32, i32
  }
  func.func @transform_6(%arg0: i32) -> (i32, i32, i32) {
    %c0_i32 = arith.constant 0 : i32
    %c0_i32_0 = arith.constant 0 : i32
    %c0_i32_1 = arith.constant 0 : i32
    return %arg0, %c0_i32, %c0_i32_0 : i32, i32, i32
  }
}

</mosaic_0001>

<llo_original>
// kernel: _lambda_.1
$region0: #{_lambda_.1}
  #allocation0 [shape = 'u32[]', space=smem, size = 0x4, offset = 0x4, fixed_abs, tag = 'smem constant byte address 0x4 - core index']
  #allocation1 [shape = 'u32[144,128]{1,0:T(1,128)}', space=vmem, size = 0x12000, scoped, tag = 'internal scratch']
  #allocation2 [shape = 'bf16[16,64,256]{2,1,0:T(8,128)(2,1)}', space=vmem, size = 0x80000, scoped, tag = 'scratch operand']
  #allocation3 [shape = 's32[1]{0}', space=sflag, size = 0x4, scoped, tag = 'scratch operand']
  #allocation9 [shape = 's32[]', space=sflag, size = 0x4, offset = 0, fixed_abs, tag = 'sflag constant byte address 0x0 - dummy sync flag']
  #allocation10 [shape = 's32[]', space=sflag, size = 0x4, offset = 0, fixed_abs, tag = 'sflag constant byte address 0x0 - dummy sync flag']
  #allocation11 [shape = 'u32[]', space=smem, size = 0x4, offset = 0x44, fixed_abs, tag = 'smem constant byte address 0x44 - assertion arg 0']
  #allocation12 [shape = 'u32[]', space=smem, size = 0x4, offset = 0x48, fixed_abs, tag = 'smem constant byte address 0x48 - assertion arg 1']
  %s0 = inlined_call_operand.vmem [shape: f32[2,4,256], index: 0, kind: input, shape index: {}]
  %s1 = inlined_call_operand.hbm [shape: bf16[256,576], index: 1, kind: input, shape index: {}]
  %s2 = inlined_call_operand.hbm [shape: bf16[64,144], index: 2, kind: input, shape index: {}]
  %s3 = inlined_call_operand.vmem [shape: bf16[16,16,64], index: 3, kind: input, shape index: {}]
  %s4 = inlined_call_operand.hbm [shape: bf16[16,64,256], index: 4, kind: input, shape index: {}]
  %s5 = inlined_call_operand.hbm [shape: f32[536,16], index: 5, kind: input, shape index: {}]
  %s6 = inlined_call_operand.vmem [shape: f32[2,3,256], index: 6, kind: output, shape index: {}]
  %s7 = sld [smem:[#allocation0]]
  $region69: #{_lambda_.1} parent=0
    _
  %s9 = ssub.s32 1, %s7
  %s10 = scalar_select 0, %s9, %s7
  $region1: #{_lambda_.1} parent=0
    #allocation4 [shape = 'u8[327680]{0}', space=vmem, size = 0x50000, scoped, tag = 'input window, operand 1, single buffered']
    #allocation5 [shape = 's32[2]{0}', space=sflag, size = 0x8, scoped, tag = 'scoped memory for _lambda_.1']
    #allocation6 [shape = 'u8[32768]{0}', space=vmem, size = 0x8000, scoped, tag = 'input window, operand 2, single buffered']
    #allocation7 [shape = 's32[1]{0}', space=sflag, size = 0x4, scoped, tag = 'scoped memory for _lambda_.1']
    #allocation8 [shape = 'u8[274432]{0}', space=vmem, size = 0x43000, scoped, tag = 'input window, operand 5, single buffered']
    %11 = vsyncpa [#allocation5], 0
    %12 = vsyncpa [#allocation7], 0
    loop: start=0, step=1, limit=4
    $region2: #{_lambda_.1} parent=1 // loop_pre_header
      _
    $region3: #{_lambda_.1} parent=1 // loop_header
      %s14 = sphi 0, %s18
      %p15 = scmp.ge.s32.totalorder %s14, 4
      %s24 = sphi 0, %s26
      %s27 = sphi 0, %s24
      %s28 = sphi 0, %s27
      %s44 = sphi 0, %s28
      %s48 = sphi 0, %s48
      %s50 = sphi 0, %s48
      %s51 = sphi 0, %s50
      %s65 = sphi 0, %s51
      %s69 = sphi 0, %s69
      %s71 = sphi 0, %s69
      %s72 = sphi 0, %s71
      %s86 = sphi 0, %s72
      %s90 = sphi 0, %s90
      %s92 = sphi 0, %s90
      %s93 = sphi 0, %s92
      %s107 = sphi 0, %s93
      %s111 = sphi 0, %s111
      %s113 = sphi 0, %s111
      %s114 = sphi 0, %s113
      %s128 = sphi 0, %s114
      %s134 = sphi 0, %s136
      %s137 = sphi 0, %s134
      %s138 = sphi 0, %s137
      %s154 = sphi 0, %s138
    $region4: #{_lambda_.1} parent=1 // loop_header_branch
      %17 = sbr.rel (%p15) target = $region8
    $region5: #{_lambda_.1} parent=1 // loop_body
      %s19 = ssub.s32 %s14, 1
      %s20 = ssub.s32 %s14, 2
      %s21 = sadd.s32 %s14, 1
      %s22 = ssub.s32 %s14, %s21
      %p23 = scmp.eq.s32.totalorder %s22, 0
      %s25 = sadd.s32 %s24, 1
      %s26 = scalar_select %p23, %s24, %s25
      %p29 = pneg %p23
      %p30 = scmp.eq.s32.totalorder %s14, 1
      %p31 = por %p29, %p30
      %p32 = scmp.ne.s32.totalorder %s24, %s27
      %p33 = scmp.eq.s32.totalorder %s14, 0
      %p34 = por %p32, %p33
      %p35 = scmp.ne.s32.totalorder %s24, %s27
      %p36 = scmp.eq.s32.totalorder %s19, 1
      %p37 = por %p35, %p36
      %p38 = scmp.ne.s32.totalorder %s27, %s28
      %p39 = scmp.eq.s32.totalorder %s19, 0
      %p40 = por %p38, %p39
      %p41 = scmp.ne.s32.totalorder %s27, %s28
      %p42 = scmp.eq.s32.totalorder %s20, 1
      %p43 = por %p41, %p42
      %p45 = scmp.ne.s32.totalorder %s28, %s44
      %p46 = scmp.eq.s32.totalorder %s20, 0
      %p47 = por %p45, %p46
      %s49 = sadd.s32 %s48, 1
      %p52 = scmp.eq.s32.totalorder %s14, 1
      %p53 = scmp.ne.s32.totalorder %s48, %s50
      %p54 = scmp.eq.s32.totalorder %s14, 0
      %p55 = por %p53, %p54
      %p56 = scmp.ne.s32.totalorder %s48, %s50
      %p57 = scmp.eq.s32.totalorder %s19, 1
      %p58 = por %p56, %p57
      %p59 = scmp.ne.s32.totalorder %s50, %s51
      %p60 = scmp.eq.s32.totalorder %s19, 0
      %p61 = por %p59, %p60
      %p62 = scmp.ne.s32.totalorder %s50, %s51
      %p63 = scmp.eq.s32.totalorder %s20, 1
      %p64 = por %p62, %p63
      %p66 = scmp.ne.s32.totalorder %s51, %s65
      %p67 = scmp.eq.s32.totalorder %s20, 0
      %p68 = por %p66, %p67
      %s70 = sadd.s32 %s69, 1
      %p73 = scmp.eq.s32.totalorder %s14, 1
      %p74 = scmp.ne.s32.totalorder %s69, %s71
      %p75 = scmp.eq.s32.totalorder %s14, 0
      %p76 = por %p74, %p75
      %p77 = scmp.ne.s32.totalorder %s69, %s71
      %p78 = scmp.eq.s32.totalorder %s19, 1
      %p79 = por %p77, %p78
      %p80 = scmp.ne.s32.totalorder %s71, %s72
      %p81 = scmp.eq.s32.totalorder %s19, 0
      %p82 = por %p80, %p81
      %p83 = scmp.ne.s32.totalorder %s71, %s72
      %p84 = scmp.eq.s32.totalorder %s20, 1
      %p85 = por %p83, %p84
      %p87 = scmp.ne.s32.totalorder %s72, %s86
      %p88 = scmp.eq.s32.totalorder %s20, 0
      %p89 = por %p87, %p88
      %s91 = sadd.s32 %s90, 1
      %p94 = scmp.eq.s32.totalorder %s14, 1
      %p95 = scmp.ne.s32.totalorder %s90, %s92
      %p96 = scmp.eq.s32.totalorder %s14, 0
      %p97 = por %p95, %p96
      %p98 = scmp.ne.s32.totalorder %s90, %s92
      %p99 = scmp.eq.s32.totalorder %s19, 1
      %p100 = por %p98, %p99
      %p101 = scmp.ne.s32.totalorder %s92, %s93
      %p102 = scmp.eq.s32.totalorder %s19, 0
      %p103 = por %p101, %p102
      %p104 = scmp.ne.s32.totalorder %s92, %s93
      %p105 = scmp.eq.s32.totalorder %s20, 1
      %p106 = por %p104, %p105
      %p108 = scmp.ne.s32.totalorder %s93, %s107
      %p109 = scmp.eq.s32.totalorder %s20, 0
      %p110 = por %p108, %p109
      %s112 = sadd.s32 %s111, 1
      %p115 = scmp.eq.s32.totalorder %s14, 1
      %p116 = scmp.ne.s32.totalorder %s111, %s113
      %p117 = scmp.eq.s32.totalorder %s14, 0
      %p118 = por %p116, %p117
      %p119 = scmp.ne.s32.totalorder %s111, %s113
      %p120 = scmp.eq.s32.totalorder %s19, 1
      %p121 = por %p119, %p120
      %p122 = scmp.ne.s32.totalorder %s113, %s114
      %p123 = scmp.eq.s32.totalorder %s19, 0
      %p124 = por %p122, %p123
      %p125 = scmp.ne.s32.totalorder %s113, %s114
      %p126 = scmp.eq.s32.totalorder %s20, 1
      %p127 = por %p125, %p126
      %p129 = scmp.ne.s32.totalorder %s114, %s128
      %p130 = scmp.eq.s32.totalorder %s20, 0
      %p131 = por %p129, %p130
      %s132 = ssub.s32 %s14, %s21
      %p133 = scmp.eq.s32.totalorder %s132, 0
      %s135 = sadd.s32 %s134, 1
      %s136 = scalar_select %p133, %s134, %s135
      %p139 = pneg %p133
      %p140 = scmp.eq.s32.totalorder %s14, 1
      %p141 = por %p139, %p140
      %p142 = scmp.ne.s32.totalorder %s134, %s137
      %p143 = scmp.eq.s32.totalorder %s14, 0
      %p144 = por %p142, %p143
      %p145 = scmp.ne.s32.totalorder %s134, %s137
      %p146 = scmp.eq.s32.totalorder %s19, 1
      %p147 = por %p145, %p146
      %p148 = scmp.ne.s32.totalorder %s137, %s138
      %p149 = scmp.eq.s32.totalorder %s19, 0
      %p150 = por %p148, %p149
      %p151 = scmp.ne.s32.totalorder %s137, %s138
      %p152 = scmp.eq.s32.totalorder %s20, 1
      %p153 = por %p151, %p152
      %p155 = scmp.ne.s32.totalorder %s138, %s154
      %p156 = scmp.eq.s32.totalorder %s20, 0
      %p157 = por %p155, %p156
      %p158 = scmp.le.s32.totalorder 1, %s14
      %p159 = scmp.lt.s32.totalorder %s14, 3
      %p160 = pnand %p158, %p159
      %p161 = pneg %p160
      // Predicated region
      $region9: #{_lambda_.1} parent=5 // pred_check
        _
      $region10: #{_lambda_.1} parent=5 // pred_check_branch
        %163 = sbr.rel (%p160) target = $region12
      $region11: #{_lambda_.1} parent=5 // pred_region
        %s164 = ssub.s32 %s14, 1
        // Predicated region
        $region13: #{_lambda_.1} parent=11 // pred_check
          %p165 = pneg %p61
        $region14: #{_lambda_.1} parent=11 // pred_check_branch
          %167 = sbr.rel (%p165) target = $region16
        $region15: #{_lambda_.1} parent=11 // pred_region
          %s169 = ssub.s32 10240, 10240
          %170 = vsyncadd [#allocation5], %s169
          %s171 = sshll.u32 [#allocation4], 4
          %s172 = int_to_ptr.vmem [resolvable:$true] %s171
          %177 = dma.hbm_to_vmem [thread:$0]  %s1, 10240, %s172, [#allocation5], 320, 320, 20
        $region16: #{_lambda_.1} parent=11 // pred_fallthru
          _
        // Predicated region
        $region17: #{_lambda_.1} parent=11 // pred_check
          %p178 = pneg %p82
        $region18: #{_lambda_.1} parent=11 // pred_check_branch
          %180 = sbr.rel (%p178) target = $region20
        $region19: #{_lambda_.1} parent=11 // pred_region
          %s182 = ssub.s32 1024, 1024
          %183 = vsyncadd [#allocation7], %s182
          %s184 = sshll.u32 [#allocation6], 4
          %s185 = int_to_ptr.vmem [resolvable:$true] %s184
          %190 = dma.hbm_to_vmem [thread:$0]  %s2, 1024, %s185, [#allocation7], 128, 128, 8
        $region20: #{_lambda_.1} parent=11 // pred_fallthru
          _
        // Predicated region
        $region21: #{_lambda_.1} parent=11 // pred_check
          %p191 = pneg %p103
        $region22: #{_lambda_.1} parent=11 // pred_check_branch
          %193 = sbr.rel (%p191) target = $region24
        $region23: #{_lambda_.1} parent=11 // pred_region
          _
        $region24: #{_lambda_.1} parent=11 // pred_fallthru
          _
        // Predicated region
        $region25: #{_lambda_.1} parent=11 // pred_check
          %p194 = pneg %p124
        $region26: #{_lambda_.1} parent=11 // pred_check_branch
          %196 = sbr.rel (%p194) target = $region28
        $region27: #{_lambda_.1} parent=11 // pred_region
          %s198 = ssub.s32 8576, 8576
          %199 = vsyncadd [#allocation7], %s198
          %s200 = sshll.u32 [#allocation8], 4
          %s201 = int_to_ptr.vmem [resolvable:$true] %s200
          %206 = dma.hbm_to_vmem [thread:$0]  %s5, 8576, %s201, [#allocation7], 128, 128, 8
        $region28: #{_lambda_.1} parent=11 // pred_fallthru
          _
      $region12: #{_lambda_.1} parent=5 // pred_fallthru
        _
      %p207 = scmp.lt.s32.totalorder %s14, 2
      // Predicated region
      $region29: #{_lambda_.1} parent=5 // pred_check
        %p208 = pneg %p207
      $region30: #{_lambda_.1} parent=5 // pred_check_branch
        %210 = sbr.rel (%p208) target = $region32
      $region31: #{_lambda_.1} parent=5 // pred_region
        // Predicated region
        $region33: #{_lambda_.1} parent=31 // pred_check
          %p211 = pneg %p34
        $region34: #{_lambda_.1} parent=31 // pred_check_branch
          %213 = sbr.rel (%p211) target = $region36
        $region35: #{_lambda_.1} parent=31 // pred_region
          %p214 = scmp.lt.s32.totalorder %s14, 1
          %s215 = scalar_select %p214, %s14, 1
          %s216 = smul.addr %s215, 2
          %s217 = smul.addr %s216, 4
          %s218 = scalar_lea.vmem %s0, %s217
        $region36: #{_lambda_.1} parent=31 // pred_fallthru
          _
      $region32: #{_lambda_.1} parent=5 // pred_fallthru
        _
      %p219 = scmp.le.s32.totalorder 1, %s14
      %p220 = scmp.lt.s32.totalorder %s14, 3
      %p221 = pnand %p219, %p220
      %p222 = pneg %p221
      // Predicated region
      $region37: #{_lambda_.1} parent=5 // pred_check
        _
      $region38: #{_lambda_.1} parent=5 // pred_check_branch
        %224 = sbr.rel (%p221) target = $region40
      $region39: #{_lambda_.1} parent=5 // pred_region
        %s225 = ssub.s32 %s14, 1
        // Predicated region
        $region41: #{_lambda_.1} parent=39 // pred_check
          %p226 = pneg %p61
        $region42: #{_lambda_.1} parent=39 // pred_check_branch
          %228 = sbr.rel (%p226) target = $region44
        $region43: #{_lambda_.1} parent=39 // pred_region
          %229 = dma.done [#allocation5], 10240
        $region44: #{_lambda_.1} parent=39 // pred_fallthru
          _
        // Predicated region
        $region45: #{_lambda_.1} parent=39 // pred_check
          %p230 = pneg %p82
        $region46: #{_lambda_.1} parent=39 // pred_check_branch
          %232 = sbr.rel (%p230) target = $region48
        $region47: #{_lambda_.1} parent=39 // pred_region
          %233 = dma.done [#allocation7], 1024
        $region48: #{_lambda_.1} parent=39 // pred_fallthru
          _
        // Predicated region
        $region49: #{_lambda_.1} parent=39 // pred_check
          %p234 = pneg %p124
        $region50: #{_lambda_.1} parent=39 // pred_check_branch
          %236 = sbr.rel (%p234) target = $region52
        $region51: #{_lambda_.1} parent=39 // pred_region
          %237 = dma.done [#allocation7], 8576
        $region52: #{_lambda_.1} parent=39 // pred_fallthru
          _
        %p238 = scmp.lt.s32.totalorder %s19, 1
        %s239 = scalar_select %p238, %s19, 1
        %s240 = smul.addr %s239, 2
        %s241 = smul.addr %s240, 4
        %s242 = scalar_lea.vmem %s0, %s241
        %p243 = pneg %p40
        %p244 = pneg %p37
        %p245 = pneg %p61
        %p246 = pneg %p58
        %p247 = pneg %p82
        %p248 = pneg %p79
        %p249 = pneg %p103
        %p250 = pneg %p100
        %p251 = pneg %p124
        %p252 = pneg %p121
        %p253 = pneg %p150
        %p254 = pneg %p147
        %p255 = scmp.lt.s32.totalorder %s19, 1
        %s256 = scalar_select %p255, %s19, 1
        %s257 = smul.addr %s256, 2
        %s258 = smul.addr %s257, 4
        %s259 = scalar_lea.vmem %s6, %s258
        %p260 = scmp.lt.s32.totalorder %s19, 1
        %s261 = scalar_select %p260, %s19, 1
        %s262 = smul.addr %s261, 2
        %s263 = smul.addr %s262, 4
        %s264 = scalar_lea.vmem %s0, %s263
        %p265 = scmp.lt.s32.totalorder %s19, 1
        %s266 = scalar_select %p265, %s19, 1
        %s267 = smul.addr %s266, 2
        %s268 = smul.addr %s267, 4
        %s269 = scalar_lea.vmem %s6, %s268
        // Predicated region
        $region53: #{_lambda_.1} parent=39 // pred_check
          _
        $region54: #{_lambda_.1} parent=39 // pred_check_branch
          %272 = sbr.rel target = $region56
        $region55: #{_lambda_.1} parent=39 // pred_region
          %273 = sst [smem:[#allocation11]] [#allocation10]
          %274 = sst [smem:[#allocation12]] [#allocation9]
        $region56: #{_lambda_.1} parent=39 // pred_fallthru
          _
        %276 = shalt.err (0)
        %s278 = sshll.u32 [#allocation2], 4
        %s279 = int_to_ptr.vmem [resolvable:$true] %s278
        %281 = dma.hbm_to_vmem [thread:$0]  %s4, 16384, %s279, [#allocation3]
        %v282 = vld [vmem:[%s264] sm:$0xff]
        %v284 = vcombine.high %v282, %v282
        %v286 = vpack.c.bf16 %v282, %v282
        %v287 = vpack.c.bf16 %v284, %v284
        %v288 = vld [vmem:[#allocation4] sm:$0xff]
        %v289 = vld [vmem:[#allocation4 + $0x8] sm:$0xff]
        %v290 = vld [vmem:[#allocation4 + $0x10] sm:$0xf]
        %v291 = vld [vmem:[#allocation4 + $0x14] sm:$0xff]
        %v292 = vld [vmem:[#allocation4 + $0x1c] sm:$0xff]
        %v293 = vld [vmem:[#allocation4 + $0x24] sm:$0xf]
        %v294 = vld [vmem:[#allocation4 + $0x28] sm:$0xff]
        %v295 = vld [vmem:[#allocation4 + $0x30] sm:$0xff]
        %v296 = vld [vmem:[#allocation4 + $0x38] sm:$0xf]
        %v297 = vld [vmem:[#allocation4 + $0x3c] sm:$0xff]
        %v298 = vld [vmem:[#allocation4 + $0x44] sm:$0xff]
        %v299 = vld [vmem:[#allocation4 + $0x4c] sm:$0xf]
        %v300 = vld [vmem:[#allocation4 + $0x50] sm:$0xff]
        %v301 = vld [vmem:[#allocation4 + $0x58] sm:$0xff]
        %v302 = vld [vmem:[#allocation4 + $0x60] sm:$0xf]
        %v303 = vld [vmem:[#allocation4 + $0x64] sm:$0xff]
        %v304 = vld [vmem:[#allocation4 + $0x6c] sm:$0xff]
        %v305 = vld [vmem:[#allocation4 + $0x74] sm:$0xf]
        %v306 = vld [vmem:[#allocation4 + $0x78] sm:$0xff]
        %v307 = vld [vmem:[#allocation4 + $0x80] sm:$0xff]
        %v308 = vld [vmem:[#allocation4 + $0x88] sm:$0xf]
        %v309 = vld [vmem:[#allocation4 + $0x8c] sm:$0xff]
        %v310 = vld [vmem:[#allocation4 + $0x94] sm:$0xff]
        %v311 = vld [vmem:[#allocation4 + $0x9c] sm:$0xf]
        %v312 = vld [vmem:[#allocation4 + $0xa0] sm:$0xff]
        %v313 = vld [vmem:[#allocation4 + $0xa8] sm:$0xff]
        %v314 = vld [vmem:[#allocation4 + $0xb0] sm:$0xf]
        %v315 = vld [vmem:[#allocation4 + $0xb4] sm:$0xff]
        %v316 = vld [vmem:[#allocation4 + $0xbc] sm:$0xff]
        %v317 = vld [vmem:[#allocation4 + $0xc4] sm:$0xf]
        %v318 = vld [vmem:[#allocation4 + $0xc8] sm:$0xff]
        %v319 = vld [vmem:[#allocation4 + $0xd0] sm:$0xff]
        %v320 = vld [vmem:[#allocation4 + $0xd8] sm:$0xf]
        %v321 = vld [vmem:[#allocation4 + $0xdc] sm:$0xff]
        %v322 = vld [vmem:[#allocation4 + $0xe4] sm:$0xff]
        %v323 = vld [vmem:[#allocation4 + $0xec] sm:$0xf]
        %v324 = vld [vmem:[#allocation4 + $0xf0] sm:$0xff]
        %v325 = vld [vmem:[#allocation4 + $0xf8] sm:$0xff]
        %v326 = vld [vmem:[#allocation4 + $0x100] sm:$0xf]
        %v327 = vld [vmem:[#allocation4 + $0x104] sm:$0xff]
        %v328 = vld [vmem:[#allocation4 + $0x10c] sm:$0xff]
        %v329 = vld [vmem:[#allocation4 + $0x114] sm:$0xf]
        %v330 = vld [vmem:[#allocation4 + $0x118] sm:$0xff]
        %v331 = vld [vmem:[#allocation4 + $0x120] sm:$0xff]
        %v332 = vld [vmem:[#allocation4 + $0x128] sm:$0xf]
        %v333 = vld [vmem:[#allocation4 + $0x12c] sm:$0xff]
        %v334 = vld [vmem:[#allocation4 + $0x134] sm:$0xff]
        %v335 = vld [vmem:[#allocation4 + $0x13c] sm:$0xf]
        %v336 = vld [vmem:[#allocation4 + $0x140] sm:$0xff]
        %v337 = vld [vmem:[#allocation4 + $0x148] sm:$0xff]
        %v338 = vld [vmem:[#allocation4 + $0x150] sm:$0xf]
        %v339 = vld [vmem:[#allocation4 + $0x154] sm:$0xff]
        %v340 = vld [vmem:[#allocation4 + $0x15c] sm:$0xff]
        %v341 = vld [vmem:[#allocation4 + $0x164] sm:$0xf]
        %v342 = vld [vmem:[#allocation4 + $0x168] sm:$0xff]
        %v343 = vld [vmem:[#allocation4 + $0x170] sm:$0xff]
        %v344 = vld [vmem:[#allocation4 + $0x178] sm:$0xf]
        %v345 = vld [vmem:[#allocation4 + $0x17c] sm:$0xff]
        %v346 = vld [vmem:[#allocation4 + $0x184] sm:$0xff]
        %v347 = vld [vmem:[#allocation4 + $0x18c] sm:$0xf]
        %v348 = vld [vmem:[#allocation4 + $0x190] sm:$0xff]
        %v349 = vld [vmem:[#allocation4 + $0x198] sm:$0xff]
        %v350 = vld [vmem:[#allocation4 + $0x1a0] sm:$0xf]
        %v351 = vld [vmem:[#allocation4 + $0x1a4] sm:$0xff]
        %v352 = vld [vmem:[#allocation4 + $0x1ac] sm:$0xff]
        %v353 = vld [vmem:[#allocation4 + $0x1b4] sm:$0xf]
        %v354 = vld [vmem:[#allocation4 + $0x1b8] sm:$0xff]
        %v355 = vld [vmem:[#allocation4 + $0x1c0] sm:$0xff]
        %v356 = vld [vmem:[#allocation4 + $0x1c8] sm:$0xf]
        %v357 = vld [vmem:[#allocation4 + $0x1cc] sm:$0xff]
        %v358 = vld [vmem:[#allocation4 + $0x1d4] sm:$0xff]
        %v359 = vld [vmem:[#allocation4 + $0x1dc] sm:$0xf]
        %v360 = vld [vmem:[#allocation4 + $0x1e0] sm:$0xff]
        %v361 = vld [vmem:[#allocation4 + $0x1e8] sm:$0xff]
        %v362 = vld [vmem:[#allocation4 + $0x1f0] sm:$0xf]
        %v363 = vld [vmem:[#allocation4 + $0x1f4] sm:$0xff]
        %v364 = vld [vmem:[#allocation4 + $0x1fc] sm:$0xff]
        %v365 = vld [vmem:[#allocation4 + $0x204] sm:$0xf]
        %v366 = vld [vmem:[#allocation4 + $0x208] sm:$0xff]
        %v367 = vld [vmem:[#allocation4 + $0x210] sm:$0xff]
        %v368 = vld [vmem:[#allocation4 + $0x218] sm:$0xf]
        %v369 = vld [vmem:[#allocation4 + $0x21c] sm:$0xff]
        %v370 = vld [vmem:[#allocation4 + $0x224] sm:$0xff]
        %v371 = vld [vmem:[#allocation4 + $0x22c] sm:$0xf]
        %v372 = vld [vmem:[#allocation4 + $0x230] sm:$0xff]
        %v373 = vld [vmem:[#allocation4 + $0x238] sm:$0xff]
        %v374 = vld [vmem:[#allocation4 + $0x240] sm:$0xf]
        %v375 = vld [vmem:[#allocation4 + $0x244] sm:$0xff]
        %v376 = vld [vmem:[#allocation4 + $0x24c] sm:$0xff]
        %v377 = vld [vmem:[#allocation4 + $0x254] sm:$0xf]
        %v378 = vld [vmem:[#allocation4 + $0x258] sm:$0xff]
        %v379 = vld [vmem:[#allocation4 + $0x260] sm:$0xff]
        %v380 = vld [vmem:[#allocation4 + $0x268] sm:$0xf]
        %v381 = vld [vmem:[#allocation4 + $0x26c] sm:$0xff]
        %v382 = vld [vmem:[#allocation4 + $0x274] sm:$0xff]
        %v383 = vld [vmem:[#allocation4 + $0x27c] sm:$0xf]
        %v480 = vunpack.c.l.b16 %v288
        %v481 = vunpack.c.h.b16 %v288
        %v482 = vunpack.c.l.b16 %v289
        %v483 = vunpack.c.h.b16 %v289
        %v484 = vunpack.c.l.b16 %v290
        %v485 = vunpack.c.l.b16 %v291
        %v486 = vunpack.c.h.b16 %v291
        %v487 = vunpack.c.l.b16 %v292
        %v488 = vunpack.c.h.b16 %v292
        %v489 = vunpack.c.l.b16 %v293
        %v490 = vunpack.c.l.b16 %v294
        %v491 = vunpack.c.h.b16 %v294
        %v492 = vunpack.c.l.b16 %v295
        %v493 = vunpack.c.h.b16 %v295
        %v494 = vunpack.c.l.b16 %v296
        %v495 = vunpack.c.l.b16 %v297
        %v496 = vunpack.c.h.b16 %v297
        %v497 = vunpack.c.l.b16 %v298
        %v498 = vunpack.c.h.b16 %v298
        %v499 = vunpack.c.l.b16 %v299
        %v500 = vunpack.c.l.b16 %v300
        %v501 = vunpack.c.h.b16 %v300
        %v502 = vunpack.c.l.b16 %v301
        %v503 = vunpack.c.h.b16 %v301
        %v504 = vunpack.c.l.b16 %v302
        %v505 = vunpack.c.l.b16 %v303
        %v506 = vunpack.c.h.b16 %v303
        %v507 = vunpack.c.l.b16 %v304
        %v508 = vunpack.c.h.b16 %v304
        %v509 = vunpack.c.l.b16 %v305
        %v510 = vunpack.c.l.b16 %v306
        %v511 = vunpack.c.h.b16 %v306
        %v512 = vunpack.c.l.b16 %v307
        %v513 = vunpack.c.h.b16 %v307
        %v514 = vunpack.c.l.b16 %v308
        %v515 = vunpack.c.l.b16 %v309
        %v516 = vunpack.c.h.b16 %v309
        %v517 = vunpack.c.l.b16 %v310
        %v518 = vunpack.c.h.b16 %v310
        %v519 = vunpack.c.l.b16 %v311
        %v520 = vunpack.c.l.b16 %v312
        %v521 = vunpack.c.h.b16 %v312
        %v522 = vunpack.c.l.b16 %v313
        %v523 = vunpack.c.h.b16 %v313
        %v524 = vunpack.c.l.b16 %v314
        %v525 = vunpack.c.l.b16 %v315
        %v526 = vunpack.c.h.b16 %v315
        %v527 = vunpack.c.l.b16 %v316
        %v528 = vunpack.c.h.b16 %v316
        %v529 = vunpack.c.l.b16 %v317
        %v530 = vunpack.c.l.b16 %v318
        %v531 = vunpack.c.h.b16 %v318
        %v532 = vunpack.c.l.b16 %v319
        %v533 = vunpack.c.h.b16 %v319
        %v534 = vunpack.c.l.b16 %v320
        %v535 = vunpack.c.l.b16 %v321
        %v536 = vunpack.c.h.b16 %v321
        %v537 = vunpack.c.l.b16 %v322
        %v538 = vunpack.c.h.b16 %v322
        %v539 = vunpack.c.l.b16 %v323
        %v540 = vunpack.c.l.b16 %v324
        %v541 = vunpack.c.h.b16 %v324
        %v542 = vunpack.c.l.b16 %v325
        %v543 = vunpack.c.h.b16 %v325
        %v544 = vunpack.c.l.b16 %v326
        %v545 = vunpack.c.l.b16 %v327
        %v546 = vunpack.c.h.b16 %v327
        %v547 = vunpack.c.l.b16 %v328
        %v548 = vunpack.c.h.b16 %v328
        %v549 = vunpack.c.l.b16 %v329
        %v550 = vunpack.c.l.b16 %v330
        %v551 = vunpack.c.h.b16 %v330
        %v552 = vunpack.c.l.b16 %v331
        %v553 = vunpack.c.h.b16 %v331
        %v554 = vunpack.c.l.b16 %v332
        %v555 = vunpack.c.l.b16 %v333
        %v556 = vunpack.c.h.b16 %v333
        %v557 = vunpack.c.l.b16 %v334
        %v558 = vunpack.c.h.b16 %v334
        %v559 = vunpack.c.l.b16 %v335
        %v560 = vunpack.c.l.b16 %v336
        %v561 = vunpack.c.h.b16 %v336
        %v562 = vunpack.c.l.b16 %v337
        %v563 = vunpack.c.h.b16 %v337
        %v564 = vunpack.c.l.b16 %v338
        %v565 = vunpack.c.l.b16 %v339
        %v566 = vunpack.c.h.b16 %v339
        %v567 = vunpack.c.l.b16 %v340
        %v568 = vunpack.c.h.b16 %v340
        %v569 = vunpack.c.l.b16 %v341
        %v570 = vunpack.c.l.b16 %v342
        %v571 = vunpack.c.h.b16 %v342
        %v572 = vunpack.c.l.b16 %v343
        %v573 = vunpack.c.h.b16 %v343
        %v574 = vunpack.c.l.b16 %v344
        %v575 = vunpack.c.l.b16 %v345
        %v576 = vunpack.c.h.b16 %v345
        %v577 = vunpack.c.l.b16 %v346
        %v578 = vunpack.c.h.b16 %v346
        %v579 = vunpack.c.l.b16 %v347
        %v580 = vunpack.c.l.b16 %v348
        %v581 = vunpack.c.h.b16 %v348
        %v582 = vunpack.c.l.b16 %v349
        %v583 = vunpack.c.h.b16 %v349
        %v584 = vunpack.c.l.b16 %v350
        %v585 = vunpack.c.l.b16 %v351
        %v586 = vunpack.c.h.b16 %v351
        %v587 = vunpack.c.l.b16 %v352
        %v588 = vunpack.c.h.b16 %v352
        %v589 = vunpack.c.l.b16 %v353
        %v590 = vunpack.c.l.b16 %v354
        %v591 = vunpack.c.h.b16 %v354
        %v592 = vunpack.c.l.b16 %v355
        %v593 = vunpack.c.h.b16 %v355
        %v594 = vunpack.c.l.b16 %v356
        %v595 = vunpack.c.l.b16 %v357
        %v596 = vunpack.c.h.b16 %v357
        %v597 = vunpack.c.l.b16 %v358
        %v598 = vunpack.c.h.b16 %v358
        %v599 = vunpack.c.l.b16 %v359
        %v600 = vunpack.c.l.b16 %v360
        %v601 = vunpack.c.h.b16 %v360
        %v602 = vunpack.c.l.b16 %v361
        %v603 = vunpack.c.h.b16 %v361
        %v604 = vunpack.c.l.b16 %v362
        %v605 = vunpack.c.l.b16 %v363
        %v606 = vunpack.c.h.b16 %v363
        %v607 = vunpack.c.l.b16 %v364
        %v608 = vunpack.c.h.b16 %v364
        %v609 = vunpack.c.l.b16 %v365
        %v610 = vunpack.c.l.b16 %v366
        %v611 = vunpack.c.h.b16 %v366
        %v612 = vunpack.c.l.b16 %v367
        %v613 = vunpack.c.h.b16 %v367
        %v614 = vunpack.c.l.b16 %v368
        %v615 = vunpack.c.l.b16 %v369
        %v616 = vunpack.c.h.b16 %v369
        %v617 = vunpack.c.l.b16 %v370
        %v618 = vunpack.c.h.b16 %v370
        %v619 = vunpack.c.l.b16 %v371
        %v620 = vunpack.c.l.b16 %v372
        %v621 = vunpack.c.h.b16 %v372
        %v622 = vunpack.c.l.b16 %v373
        %v623 = vunpack.c.h.b16 %v373
        %v624 = vunpack.c.l.b16 %v374
        %v625 = vunpack.c.l.b16 %v375
        %v626 = vunpack.c.h.b16 %v375
        %v627 = vunpack.c.l.b16 %v376
        %v628 = vunpack.c.h.b16 %v376
        %v629 = vunpack.c.l.b16 %v377
        %v630 = vunpack.c.l.b16 %v378
        %v631 = vunpack.c.h.b16 %v378
        %v632 = vunpack.c.l.b16 %v379
        %v633 = vunpack.c.h.b16 %v379
        %v634 = vunpack.c.l.b16 %v380
        %v635 = vunpack.c.l.b16 %v381
        %v636 = vunpack.c.h.b16 %v381
        %v637 = vunpack.c.l.b16 %v382
        %v638 = vunpack.c.h.b16 %v382
        %v639 = vunpack.c.l.b16 %v383
        %v640 = vpack.c.b16 %v485, %v480
        %v641 = vpack.c.b16 %v486, %v481
        %v642 = vpack.c.b16 %v487, %v482
        %v643 = vpack.c.b16 %v488, %v483
        %v644 = vpack.c.b16 %v489, %v484
        %v645 = vpack.c.b16 %v495, %v490
        %v646 = vpack.c.b16 %v496, %v491
        %v647 = vpack.c.b16 %v497, %v492
        %v648 = vpack.c.b16 %v498, %v493
        %v649 = vpack.c.b16 %v499, %v494
        %v650 = vpack.c.b16 %v505, %v500
        %v651 = vpack.c.b16 %v506, %v501
        %v652 = vpack.c.b16 %v507, %v502
        %v653 = vpack.c.b16 %v508, %v503
        %v654 = vpack.c.b16 %v509, %v504
        %v655 = vpack.c.b16 %v515, %v510
        %v656 = vpack.c.b16 %v516, %v511
        %v657 = vpack.c.b16 %v517, %v512
        %v658 = vpack.c.b16 %v518, %v513
        %v659 = vpack.c.b16 %v519, %v514
        %v660 = vpack.c.b16 %v525, %v520
        %v661 = vpack.c.b16 %v526, %v521
        %v662 = vpack.c.b16 %v527, %v522
        %v663 = vpack.c.b16 %v528, %v523
        %v664 = vpack.c.b16 %v529, %v524
        %v665 = vpack.c.b16 %v535, %v530
        %v666 = vpack.c.b16 %v536, %v531
        %v667 = vpack.c.b16 %v537, %v532
        %v668 = vpack.c.b16 %v538, %v533
        %v669 = vpack.c.b16 %v539, %v534
        %v670 = vpack.c.b16 %v545, %v540
        %v671 = vpack.c.b16 %v546, %v541
        %v672 = vpack.c.b16 %v547, %v542
        %v673 = vpack.c.b16 %v548, %v543
        %v674 = vpack.c.b16 %v549, %v544
        %v675 = vpack.c.b16 %v555, %v550
        %v676 = vpack.c.b16 %v556, %v551
        %v677 = vpack.c.b16 %v557, %v552
        %v678 = vpack.c.b16 %v558, %v553
        %v679 = vpack.c.b16 %v559, %v554
        %v680 = vpack.c.b16 %v565, %v560
        %v681 = vpack.c.b16 %v566, %v561
        %v682 = vpack.c.b16 %v567, %v562
        %v683 = vpack.c.b16 %v568, %v563
        %v684 = vpack.c.b16 %v569, %v564
        %v685 = vpack.c.b16 %v575, %v570
        %v686 = vpack.c.b16 %v576, %v571
        %v687 = vpack.c.b16 %v577, %v572
        %v688 = vpack.c.b16 %v578, %v573
        %v689 = vpack.c.b16 %v579, %v574
        %v690 = vpack.c.b16 %v585, %v580
        %v691 = vpack.c.b16 %v586, %v581
        %v692 = vpack.c.b16 %v587, %v582
        %v693 = vpack.c.b16 %v588, %v583
        %v694 = vpack.c.b16 %v589, %v584
        %v695 = vpack.c.b16 %v595, %v590
        %v696 = vpack.c.b16 %v596, %v591
        %v697 = vpack.c.b16 %v597, %v592
        %v698 = vpack.c.b16 %v598, %v593
        %v699 = vpack.c.b16 %v599, %v594
        %v700 = vpack.c.b16 %v605, %v600
        %v701 = vpack.c.b16 %v606, %v601
        %v702 = vpack.c.b16 %v607, %v602
        %v703 = vpack.c.b16 %v608, %v603
        %v704 = vpack.c.b16 %v609, %v604
        %v705 = vpack.c.b16 %v615, %v610
        %v706 = vpack.c.b16 %v616, %v611
        %v707 = vpack.c.b16 %v617, %v612
        %v708 = vpack.c.b16 %v618, %v613
        %v709 = vpack.c.b16 %v619, %v614
        %v710 = vpack.c.b16 %v625, %v620
        %v711 = vpack.c.b16 %v626, %v621
        %v712 = vpack.c.b16 %v627, %v622
        %v713 = vpack.c.b16 %v628, %v623
        %v714 = vpack.c.b16 %v629, %v624
        %v715 = vpack.c.b16 %v635, %v630
        %v716 = vpack.c.b16 %v636, %v631
        %v717 = vpack.c.b16 %v637, %v632
        %v718 = vpack.c.b16 %v638, %v633
        %v719 = vpack.c.b16 %v639, %v634
        %800 = vmatprep.subr.bf16.mxu0 %v676
        %801 = vmatpush1.bf16.msra.mxu0 %v675
        %802 = vmatprep.subr.bf16.mxu0 %v671
        %803 = vmatpush1.bf16.msra.mxu0 %v670
        %804 = vmatprep.subr.bf16.mxu0 %v666
        %805 = vmatpush1.bf16.msra.mxu0 %v665
        %806 = vmatprep.subr.bf16.mxu0 %v661
        %807 = vmatpush1.bf16.msra.mxu0 %v660
        %808 = vmatprep.subr.bf16.mxu0 %v656
        %809 = vmatpush1.bf16.msra.mxu0 %v655
        %810 = vmatprep.subr.bf16.mxu0 %v651
        %811 = vmatpush1.bf16.msra.mxu0 %v650
        %812 = vmatprep.subr.bf16.mxu0 %v646
        %813 = vmatpush1.bf16.msra.mxu0 %v645
        %814 = vmatprep.subr.bf16.mxu0 %v641
        %815 = vmatpush1.bf16.msra.mxu0 %v640
        %816 = vmatprep.subr.bf16.mxu0 %v716
        %817 = vmatpush2.bf16.msra.mxu0 %v715
        %818 = vmatprep.subr.bf16.mxu0 %v711
        %819 = vmatpush2.bf16.msra.mxu0 %v710
        %820 = vmatprep.subr.bf16.mxu0 %v706
        %821 = vmatpush2.bf16.msra.mxu0 %v705
        %822 = vmatprep.subr.bf16.mxu0 %v701
        %823 = vmatpush2.bf16.msra.mxu0 %v700
        %824 = vmatprep.subr.bf16.mxu0 %v696
        %825 = vmatpush2.bf16.msra.mxu0 %v695
        %826 = vmatprep.subr.bf16.mxu0 %v691
        %827 = vmatpush2.bf16.msra.mxu0 %v690
        %828 = vmatprep.subr.bf16.mxu0 %v686
        %829 = vmatpush2.bf16.msra.mxu0 %v685
        %830 = vmatprep.subr.bf16.mxu0 %v681
        %831 = vmatpush2.bf16.msra.mxu0 %v680
        %832 = vmatprep.mubr.bf16.mxu0 %v287
        %833 = vmatmul.mubr.bf16.gmra.mxu0 %v286
        %v834 = vpop.f32.mrf.mxu0
        %v835 = vadd.f32 0.0, %v834
        %v836 = vpop.f32.mrf.mxu0
        %v837 = vadd.f32 0.0, %v836
        %v838 = vpop.f32.mrf.mxu0
        %v839 = vpop.f32.mrf.mxu0
        %840 = vdwg.mxu0
        %841 = vmatprep.subr.bf16.mxu0 %v678
        %842 = vmatpush1.bf16.msra.mxu0 %v677
        %843 = vmatprep.subr.bf16.mxu0 %v673
        %844 = vmatpush1.bf16.msra.mxu0 %v672
        %845 = vmatprep.subr.bf16.mxu0 %v668
        %846 = vmatpush1.bf16.msra.mxu0 %v667
        %847 = vmatprep.subr.bf16.mxu0 %v663
        %848 = vmatpush1.bf16.msra.mxu0 %v662
        %849 = vmatprep.subr.bf16.mxu0 %v658
        %850 = vmatpush1.bf16.msra.mxu0 %v657
        %851 = vmatprep.subr.bf16.mxu0 %v653
        %852 = vmatpush1.bf16.msra.mxu0 %v652
        %853 = vmatprep.subr.bf16.mxu0 %v648
        %854 = vmatpush1.bf16.msra.mxu0 %v647
        %855 = vmatprep.subr.bf16.mxu0 %v643
        %856 = vmatpush1.bf16.msra.mxu0 %v642
        %857 = vmatprep.subr.bf16.mxu0 %v718
        %858 = vmatpush2.bf16.msra.mxu0 %v717
        %859 = vmatprep.subr.bf16.mxu0 %v713
        %860 = vmatpush2.bf16.msra.mxu0 %v712
        %861 = vmatprep.subr.bf16.mxu0 %v708
        %862 = vmatpush2.bf16.msra.mxu0 %v707
        %863 = vmatprep.subr.bf16.mxu0 %v703
        %864 = vmatpush2.bf16.msra.mxu0 %v702
        %865 = vmatprep.subr.bf16.mxu0 %v698
        %866 = vmatpush2.bf16.msra.mxu0 %v697
        %867 = vmatprep.subr.bf16.mxu0 %v693
        %868 = vmatpush2.bf16.msra.mxu0 %v692
        %869 = vmatprep.subr.bf16.mxu0 %v688
        %870 = vmatpush2.bf16.msra.mxu0 %v687
        %871 = vmatprep.subr.bf16.mxu0 %v683
        %872 = vmatpush2.bf16.msra.mxu0 %v682
        %873 = vmatprep.mubr.bf16.mxu0 %v287
        %874 = vmatmul.mubr.bf16.gmra.mxu0 %v286
        %v875 = vpop.f32.mrf.mxu0
        %v876 = vadd.f32 0.0, %v875
        %v877 = vpop.f32.mrf.mxu0
        %v878 = vadd.f32 0.0, %v877
        %v879 = vpop.f32.mrf.mxu0
        %v880 = vpop.f32.mrf.mxu0
        %881 = vdwg.mxu0
        %882 = vmatprep.subr.bf16.mxu0 0
        %883 = vmatpush1.bf16.msra.mxu0 %v679
        %884 = vmatprep.subr.bf16.mxu0 0
        %885 = vmatpush1.bf16.msra.mxu0 %v674
        %886 = vmatprep.subr.bf16.mxu0 0
        %887 = vmatpush1.bf16.msra.mxu0 %v669
        %888 = vmatprep.subr.bf16.mxu0 0
        %889 = vmatpush1.bf16.msra.mxu0 %v664
        %890 = vmatprep.subr.bf16.mxu0 0
        %891 = vmatpush1.bf16.msra.mxu0 %v659
        %892 = vmatprep.subr.bf16.mxu0 0
        %893 = vmatpush1.bf16.msra.mxu0 %v654
        %894 = vmatprep.subr.bf16.mxu0 0
        %895 = vmatpush1.bf16.msra.mxu0 %v649
        %896 = vmatprep.subr.bf16.mxu0 0
        %897 = vmatpush1.bf16.msra.mxu0 %v644
        %898 = vmatprep.subr.bf16.mxu0 0
        %899 = vmatpush2.bf16.msra.mxu0 %v719
        %900 = vmatprep.subr.bf16.mxu0 0
        %901 = vmatpush2.bf16.msra.mxu0 %v714
        %902 = vmatprep.subr.bf16.mxu0 0
        %903 = vmatpush2.bf16.msra.mxu0 %v709
        %904 = vmatprep.subr.bf16.mxu0 0
        %905 = vmatpush2.bf16.msra.mxu0 %v704
        %906 = vmatprep.subr.bf16.mxu0 0
        %907 = vmatpush2.bf16.msra.mxu0 %v699
        %908 = vmatprep.subr.bf16.mxu0 0
        %909 = vmatpush2.bf16.msra.mxu0 %v694
        %910 = vmatprep.subr.bf16.mxu0 0
        %911 = vmatpush2.bf16.msra.mxu0 %v689
        %912 = vmatprep.subr.bf16.mxu0 0
        %913 = vmatpush2.bf16.msra.mxu0 %v684
        %914 = vmatprep.mubr.bf16.mxu0 %v287
        %915 = vmatmul.mubr.bf16.gmra.mxu0 %v286
        %v916 = vpop.f32.mrf.mxu0
        %v917 = vadd.f32 0.0, %v916
        %v918 = vpop.f32.mrf.mxu0
        %v919 = vpop.f32.mrf.mxu0
        %v920 = vpop.f32.mrf.mxu0
        %921 = vdwg.mxu0
        %v922 = vld [vmem:[#allocation8] sm:$0xf]
        %924 = vset.pattern.permute.xlu0 0
        %925 = vperm.xlu0 %924, %v922
        %v926 = vpop.permute.xlu0 %925
        %v928 = vmul.f32 %v926, %v835
        %929 = vset.pattern.permute.xlu0 1
        %930 = vperm.xlu0 %929, %v922
        %v931 = vpop.permute.xlu0 %930
        %v933 = vmul.f32 %v931, %v835
        %935 = vrot.lane.b32.xlu0 %v933, 64
        %v936 = vpop.permute.xlu0 %935
        %v938 = vadd.f32 %v928, %v936
        %939 = vset.pattern.permute.xlu0 2
        %940 = vperm.xlu0 %939, %v922
        %v941 = vpop.permute.xlu0 %940
        %v943 = vmul.f32 %v941, %v837
        %v944 = vadd.f32 %v938, %v943
        %945 = vset.pattern.permute.xlu0 3
        %946 = vperm.xlu0 %945, %v922
        %v947 = vpop.permute.xlu0 %946
        %v949 = vmul.f32 %v947, %v837
        %951 = vrot.lane.b32.xlu0 %v949, 64
        %v952 = vpop.permute.xlu0 %951
        %v954 = vadd.f32 %v944, %v952
        %955 = vset.pattern.permute.xlu0 4
        %956 = vperm.xlu0 %955, %v922
        %v957 = vpop.permute.xlu0 %956
        %v959 = vmul.f32 %v957, %v876
        %v960 = vadd.f32 %v954, %v959
        %961 = vset.pattern.permute.xlu0 5
        %962 = vperm.xlu0 %961, %v922
        %v963 = vpop.permute.xlu0 %962
        %v965 = vmul.f32 %v963, %v876
        %967 = vrot.lane.b32.xlu0 %v965, 64
        %v968 = vpop.permute.xlu0 %967
        %v970 = vadd.f32 %v960, %v968
        %971 = vset.pattern.permute.xlu0 6
        %972 = vperm.xlu0 %971, %v922
        %v973 = vpop.permute.xlu0 %972
        %v975 = vmul.f32 %v973, %v878
        %v976 = vadd.f32 %v970, %v975
        %977 = vset.pattern.permute.xlu0 7
        %978 = vperm.xlu0 %977, %v922
        %v979 = vpop.permute.xlu0 %978
        %v981 = vmul.f32 %v979, %v878
        %983 = vrot.lane.b32.xlu0 %v981, 64
        %v984 = vpop.permute.xlu0 %983
        %v986 = vadd.f32 %v976, %v984
        %987 = vset.pattern.permute.xlu0 8
        %988 = vperm.xlu0 %987, %v922
        %v989 = vpop.permute.xlu0 %988
        %v991 = vmul.f32 %v989, %v917
        %v992 = vadd.f32 %v986, %v991
        %v993 = vld [vmem:[#allocation8 + $0x8] sm:$0xf]
        %995 = vset.pattern.permute.xlu0 0
        %996 = vperm.xlu0 %995, %v993
        %v997 = vpop.permute.xlu0 %996
        %v999 = vadd.f32 %v992, %v997
        %v1000 = vmax.f32 %v999, 0.0
        %v1001 = vld [vmem:[#allocation8 + $0x10] sm:$0xff]
        %v1002 = vld [vmem:[#allocation8 + $0x18] sm:$0xff]
        %1004 = vset.pattern.permute.xlu0 0
        %1005 = vperm.xlu0 %1004, %v1002
        %v1006 = vpop.permute.xlu0 %1005
        %vm1008 = vcmask 31744
        %v1010 = vsel %vm1008, %v1001, 0
        %vm1012 = vcmask 1043456
        %v1014 = vsel %vm1012, %v1000, 0
        %1016 = vmatprep.subr.mxu0 0.0
        %1017 = vmatpush1.msra.mxu0 0.0
        %1018 = vmatprep.subr.mxu0 0.0
        %1019 = vmatpush1.msra.mxu0 0.0
        %1020 = vmatprep.subr.mxu0 0.0
        %1021 = vmatpush1.msra.mxu0 0.0
        %1022 = vmatprep.subr.mxu0 0.0
        %1023 = vmatpush1.msra.mxu0 0.0
        %1024 = vmatprep.subr.mxu0 0.0
        %1025 = vmatpush1.msra.mxu0 0.0
        %1026 = vmatprep.subr.mxu0 0.0
        %1027 = vmatpush1.msra.mxu0 0.0
        %1028 = vmatprep.subr.mxu0 0.0
        %1029 = vmatpush1.msra.mxu0 0.0
        %1030 = vmatprep.subr.mxu0 0.0
        %1031 = vmatpush1.msra.mxu0 0.0
        %1032 = vmatprep.subr.mxu0 0.0
        %1033 = vmatpush1.msra.mxu0 0.0
        %1034 = vmatprep.subr.mxu0 0.0
        %1035 = vmatpush1.msra.mxu0 0.0
        %1036 = vmatprep.subr.mxu0 0.0
        %1037 = vmatpush1.msra.mxu0 0.0
        %1038 = vmatprep.subr.mxu0 0.0
        %1039 = vmatpush1.msra.mxu0 0.0
        %1040 = vmatprep.subr.mxu0 0.0
        %1041 = vmatpush1.msra.mxu0 0.0
        %1042 = vmatprep.subr.mxu0 0.0
        %1043 = vmatpush1.msra.mxu0 0.0
        %1044 = vmatprep.subr.mxu0 0.0
        %1045 = vmatpush1.msra.mxu0 0.0
        %1046 = vmatprep.subr.mxu0 0.0
        %1047 = vmatpush1.msra.mxu0 %v1014
        %1048 = vmatprep.subr.mxu0 0.0
        %1049 = vmatpush2.msra.mxu0 0.0
        %1050 = vmatprep.subr.mxu0 0.0
        %1051 = vmatpush2.msra.mxu0 0.0
        %1052 = vmatprep.subr.mxu0 0.0
        %1053 = vmatpush2.msra.mxu0 0.0
        %1054 = vmatprep.subr.mxu0 0.0
        %1055 = vmatpush2.msra.mxu0 0.0
        %1056 = vmatprep.subr.mxu0 0.0
        %1057 = vmatpush2.msra.mxu0 0.0
        %1058 = vmatprep.subr.mxu0 0.0
        %1059 = vmatpush2.msra.mxu0 0.0
        %1060 = vmatprep.subr.mxu0 0.0
        %1061 = vmatpush2.msra.mxu0 0.0
        %1062 = vmatprep.subr.mxu0 0.0
        %1063 = vmatpush2.msra.mxu0 0.0
        %1064 = vmatprep.subr.mxu0 0.0
        %1065 = vmatpush2.msra.mxu0 0.0
        %1066 = vmatprep.subr.mxu0 0.0
        %1067 = vmatpush2.msra.mxu0 0.0
        %1068 = vmatprep.subr.mxu0 0.0
        %1069 = vmatpush2.msra.mxu0 0.0
        %1070 = vmatprep.subr.mxu0 0.0
        %1071 = vmatpush2.msra.mxu0 0.0
        %1072 = vmatprep.subr.mxu0 0.0
        %1073 = vmatpush2.msra.mxu0 0.0
        %1074 = vmatprep.subr.mxu0 0.0
        %1075 = vmatpush2.msra.mxu0 0.0
        %1076 = vmatprep.subr.mxu0 0.0
        %1077 = vmatpush2.msra.mxu0 0.0
        %1078 = vmatprep.subr.mxu0 0.0
        %1079 = vmatpush2.msra.mxu0 0.0
        %1080 = vmatprep.mubr.f32.mxu0 0.0
        %1081 = vmatmul.mubr.f32.gmra.mxu0 %v1010
        %v1082 = vpop.f32.mrf.mxu0
        %v1083 = vadd.f32 %v1006, %v1082
        %v1084 = vpop.f32.mrf.mxu0
        %1085 = vdwg.mxu0
        %v1086 = vmax.f32 %v1083, 0.0
        %v1087 = vpack.c.bf16 %v1086, %v1086
        %v1088 = vld [vmem:[#allocation6] sm:$0xff]
        %v1089 = vld [vmem:[#allocation6 + $0x8] sm:$0xff]
        %v1090 = vld [vmem:[#allocation6 + $0x10] sm:$0xff]
        %v1091 = vld [vmem:[#allocation6 + $0x18] sm:$0xff]
        %v1092 = vld [vmem:[#allocation6 + $0x20] sm:$0xff]
        %v1093 = vld [vmem:[#allocation6 + $0x28] sm:$0xff]
        %v1094 = vld [vmem:[#allocation6 + $0x30] sm:$0xff]
        %v1095 = vld [vmem:[#allocation6 + $0x38] sm:$0xff]
        %v1104 = vunpack.c.l.b16 %v1088
        %v1105 = vunpack.c.h.b16 %v1088
        %v1106 = vunpack.c.l.b16 %v1089
        %v1107 = vunpack.c.h.b16 %v1089
        %v1108 = vunpack.c.l.b16 %v1090
        %v1109 = vunpack.c.h.b16 %v1090
        %v1110 = vunpack.c.l.b16 %v1091
        %v1111 = vunpack.c.h.b16 %v1091
        %v1112 = vunpack.c.l.b16 %v1092
        %v1113 = vunpack.c.h.b16 %v1092
        %v1114 = vunpack.c.l.b16 %v1093
        %v1115 = vunpack.c.h.b16 %v1093
        %v1116 = vunpack.c.l.b16 %v1094
        %v1117 = vunpack.c.h.b16 %v1094
        %v1118 = vunpack.c.l.b16 %v1095
        %v1119 = vunpack.c.h.b16 %v1095
        %v1120 = vpack.c.b16 %v1106, %v1104
        %v1121 = vpack.c.b16 %v1107, %v1105
        %v1122 = vpack.c.b16 %v1110, %v1108
        %v1123 = vpack.c.b16 %v1111, %v1109
        %v1124 = vpack.c.b16 %v1114, %v1112
        %v1125 = vpack.c.b16 %v1115, %v1113
        %v1126 = vpack.c.b16 %v1118, %v1116
        %v1127 = vpack.c.b16 %v1119, %v1117
        %vm1136 = vcmask 523264
        %v1138 = vsel %vm1136, %v1087, 0
        %1140 = vmatprep.subr.bf16.mxu0 0
        %1141 = vmatpush1.bf16.msra.mxu0 0
        %1142 = vmatprep.subr.bf16.mxu0 0
        %1143 = vmatpush1.bf16.msra.mxu0 0
        %1144 = vmatprep.subr.bf16.mxu0 0
        %1145 = vmatpush1.bf16.msra.mxu0 0
        %1146 = vmatprep.subr.bf16.mxu0 0
        %1147 = vmatpush1.bf16.msra.mxu0 0
        %1148 = vmatprep.subr.bf16.mxu0 %v1127
        %1149 = vmatpush1.bf16.msra.mxu0 %v1126
        %1150 = vmatprep.subr.bf16.mxu0 %v1125
        %1151 = vmatpush1.bf16.msra.mxu0 %v1124
        %1152 = vmatprep.subr.bf16.mxu0 %v1123
        %1153 = vmatpush1.bf16.msra.mxu0 %v1122
        %1154 = vmatprep.subr.bf16.mxu0 %v1121
        %1155 = vmatpush1.bf16.msra.mxu0 %v1120
        %1156 = vmatprep.subr.bf16.mxu0 0
        %1157 = vmatpush2.bf16.msra.mxu0 0
        %1158 = vmatprep.subr.bf16.mxu0 0
        %1159 = vmatpush2.bf16.msra.mxu0 0
        %1160 = vmatprep.subr.bf16.mxu0 0
        %1161 = vmatpush2.bf16.msra.mxu0 0
        %1162 = vmatprep.subr.bf16.mxu0 0
        %1163 = vmatpush2.bf16.msra.mxu0 0
        %1164 = vmatprep.subr.bf16.mxu0 0
        %1165 = vmatpush2.bf16.msra.mxu0 0
        %1166 = vmatprep.subr.bf16.mxu0 0
        %1167 = vmatpush2.bf16.msra.mxu0 0
        %1168 = vmatprep.subr.bf16.mxu0 0
        %1169 = vmatpush2.bf16.msra.mxu0 0
        %1170 = vmatprep.subr.bf16.mxu0 0
        %1171 = vmatpush2.bf16.msra.mxu0 0
        %1172 = vmatprep.mubr.bf16.mxu0 0
        %1173 = vmatmul.mubr.bf16.gmra.mxu0 %v1138
        %v1174 = vpop.f32.mrf.mxu0
        %v1175 = vadd.f32 0.0, %v1174
        %v1176 = vpop.f32.mrf.mxu0
        %v1177 = vadd.f32 0.0, %v1176
        %v1178 = vpop.f32.mrf.mxu0
        %v1179 = vpop.f32.mrf.mxu0
        %1180 = vdwg.mxu0
        %v1181 = vld [vmem:[#allocation8 + $0x20] sm:$0xff]
        %1183 = vset.pattern.permute.xlu0 0
        %1184 = vperm.xlu0 %1183, %v1181
        %v1185 = vpop.permute.xlu0 %1184
        %v1187 = vmul.f32 %v1185, %v1175
        %1188 = vset.pattern.permute.xlu0 1
        %1189 = vperm.xlu0 %1188, %v1181
        %v1190 = vpop.permute.xlu0 %1189
        %v1192 = vmul.f32 %v1190, %v1175
        %1194 = vrot.lane.b32.xlu0 %v1192, 112
        %v1195 = vpop.permute.xlu0 %1194
        %v1197 = vadd.f32 %v1187, %v1195
        %1198 = vset.pattern.permute.xlu0 2
        %1199 = vperm.xlu0 %1198, %v1181
        %v1200 = vpop.permute.xlu0 %1199
        %v1202 = vmul.f32 %v1200, %v1175
        %1204 = vrot.lane.b32.xlu0 %v1202, 96
        %v1205 = vpop.permute.xlu0 %1204
        %v1207 = vadd.f32 %v1197, %v1205
        %1208 = vset.pattern.permute.xlu0 3
        %1209 = vperm.xlu0 %1208, %v1181
        %v1210 = vpop.permute.xlu0 %1209
        %v1212 = vmul.f32 %v1210, %v1175
        %1214 = vrot.lane.b32.xlu0 %v1212, 80
        %v1215 = vpop.permute.xlu0 %1214
        %v1217 = vadd.f32 %v1207, %v1215
        %1218 = vset.pattern.permute.xlu0 4
        %1219 = vperm.xlu0 %1218, %v1181
        %v1220 = vpop.permute.xlu0 %1219
        %v1222 = vmul.f32 %v1220, %v1175
        %1224 = vrot.lane.b32.xlu0 %v1222, 64
        %v1225 = vpop.permute.xlu0 %1224
        %v1227 = vadd.f32 %v1217, %v1225
        %1228 = vset.pattern.permute.xlu0 5
        %1229 = vperm.xlu0 %1228, %v1181
        %v1230 = vpop.permute.xlu0 %1229
        %v1232 = vmul.f32 %v1230, %v1175
        %1234 = vrot.lane.b32.xlu0 %v1232, 48
        %v1235 = vpop.permute.xlu0 %1234
        %v1237 = vadd.f32 %v1227, %v1235
        %1238 = vset.pattern.permute.xlu0 6
        %1239 = vperm.xlu0 %1238, %v1181
        %v1240 = vpop.permute.xlu0 %1239
        %v1242 = vmul.f32 %v1240, %v1175
        %1244 = vrot.lane.b32.xlu0 %v1242, 32
        %v1245 = vpop.permute.xlu0 %1244
        %v1247 = vadd.f32 %v1237, %v1245
        %1248 = vset.pattern.permute.xlu0 7
        %1249 = vperm.xlu0 %1248, %v1181
        %v1250 = vpop.permute.xlu0 %1249
        %v1252 = vmul.f32 %v1250, %v1175
        %1254 = vrot.lane.b32.xlu0 %v1252, 16
        %v1255 = vpop.permute.xlu0 %1254
        %v1257 = vadd.f32 %v1247, %v1255
        %1258 = vset.pattern.permute.xlu0 8
        %1259 = vperm.xlu0 %1258, %v1181
        %v1260 = vpop.permute.xlu0 %1259
        %v1262 = vmul.f32 %v1260, %v1177
        %v1263 = vadd.f32 %v1257, %v1262
        %v1264 = vld [vmem:[#allocation8 + $0x28] sm:$0xff]
        %1266 = vset.pattern.permute.xlu0 0
        %1267 = vperm.xlu0 %1266, %v1264
        %v1268 = vpop.permute.xlu0 %1267
        %v1270 = vadd.f32 %v1263, %v1268
        %v1271 = vmax.f32 %v1270, 0.0
        %v1272 = vld [vmem:[#allocation8 + $0x30] sm:$0xff]
        %v1273 = vld [vmem:[#allocation8 + $0x38] sm:$0xff]
        %v1274 = vld [vmem:[#allocation8 + $0x40] sm:$0xff]
        %v1275 = vld [vmem:[#allocation8 + $0x48] sm:$0xff]
        %1277 = vset.pattern.permute.xlu0 0
        %1278 = vperm.xlu0 %1277, %v1274
        %v1279 = vpop.permute.xlu0 %1278
        %1282 = vset.pattern.permute.xlu0 0
        %1283 = vperm.xlu0 %1282, %v1275
        %v1284 = vpop.permute.xlu0 %1283
        %vm1286 = vcmask 64512
        %v1288 = vsel %vm1286, %v1272, 0
        %v1291 = vsel %vm1286, %v1273, 0
        %1293 = vmatprep.subr.mxu0 0.0
        %1294 = vmatpush1.msra.mxu0 0.0
        %1295 = vmatprep.subr.mxu0 0.0
        %1296 = vmatpush1.msra.mxu0 0.0
        %1297 = vmatprep.subr.mxu0 0.0
        %1298 = vmatpush1.msra.mxu0 0.0
        %1299 = vmatprep.subr.mxu0 0.0
        %1300 = vmatpush1.msra.mxu0 0.0
        %1301 = vmatprep.subr.mxu0 0.0
        %1302 = vmatpush1.msra.mxu0 0.0
        %1303 = vmatprep.subr.mxu0 0.0
        %1304 = vmatpush1.msra.mxu0 0.0
        %1305 = vmatprep.subr.mxu0 0.0
        %1306 = vmatpush1.msra.mxu0 0.0
        %1307 = vmatprep.subr.mxu0 0.0
        %1308 = vmatpush1.msra.mxu0 0.0
        %1309 = vmatprep.subr.mxu0 0.0
        %1310 = vmatpush1.msra.mxu0 0.0
        %1311 = vmatprep.subr.mxu0 0.0
        %1312 = vmatpush1.msra.mxu0 0.0
        %1313 = vmatprep.subr.mxu0 0.0
        %1314 = vmatpush1.msra.mxu0 0.0
        %1315 = vmatprep.subr.mxu0 0.0
        %1316 = vmatpush1.msra.mxu0 0.0
        %1317 = vmatprep.subr.mxu0 0.0
        %1318 = vmatpush1.msra.mxu0 0.0
        %1319 = vmatprep.subr.mxu0 0.0
        %1320 = vmatpush1.msra.mxu0 0.0
        %1321 = vmatprep.subr.mxu0 0.0
        %1322 = vmatpush1.msra.mxu0 0.0
        %1323 = vmatprep.subr.mxu0 0.0
        %1324 = vmatpush1.msra.mxu0 %v1271
        %1325 = vmatprep.subr.mxu0 0.0
        %1326 = vmatpush2.msra.mxu0 0.0
        %1327 = vmatprep.subr.mxu0 0.0
        %1328 = vmatpush2.msra.mxu0 0.0
        %1329 = vmatprep.subr.mxu0 0.0
        %1330 = vmatpush2.msra.mxu0 0.0
        %1331 = vmatprep.subr.mxu0 0.0
        %1332 = vmatpush2.msra.mxu0 0.0
        %1333 = vmatprep.subr.mxu0 0.0
        %1334 = vmatpush2.msra.mxu0 0.0
        %1335 = vmatprep.subr.mxu0 0.0
        %1336 = vmatpush2.msra.mxu0 0.0
        %1337 = vmatprep.subr.mxu0 0.0
        %1338 = vmatpush2.msra.mxu0 0.0
        %1339 = vmatprep.subr.mxu0 0.0
        %1340 = vmatpush2.msra.mxu0 0.0
        %1341 = vmatprep.subr.mxu0 0.0
        %1342 = vmatpush2.msra.mxu0 0.0
        %1343 = vmatprep.subr.mxu0 0.0
        %1344 = vmatpush2.msra.mxu0 0.0
        %1345 = vmatprep.subr.mxu0 0.0
        %1346 = vmatpush2.msra.mxu0 0.0
        %1347 = vmatprep.subr.mxu0 0.0
        %1348 = vmatpush2.msra.mxu0 0.0
        %1349 = vmatprep.subr.mxu0 0.0
        %1350 = vmatpush2.msra.mxu0 0.0
        %1351 = vmatprep.subr.mxu0 0.0
        %1352 = vmatpush2.msra.mxu0 0.0
        %1353 = vmatprep.subr.mxu0 0.0
        %1354 = vmatpush2.msra.mxu0 0.0
        %1355 = vmatprep.subr.mxu0 0.0
        %1356 = vmatpush2.msra.mxu0 0.0
        %1357 = vmatprep.mubr.f32.mxu0 0.0
        %1358 = vmatmul.mubr.f32.gmra.mxu0 %v1288
        %v1359 = vpop.f32.mrf.mxu0
        %v1360 = vadd.f32 %v1279, %v1359
        %v1361 = vpop.f32.mrf.mxu0
        %1362 = vmatprep.mubr.f32.mxu0 0.0
        %1363 = vmatmul.mubr.f32.gmra.mxu0 %v1291
        %v1364 = vpop.f32.mrf.mxu0
        %v1365 = vadd.f32 %v1284, %v1364
        %v1366 = vpop.f32.mrf.mxu0
        %1367 = vdwg.mxu0
        %v1368 = vmax.f32 %v1360, 0.0
        %v1369 = vmax.f32 %v1365, 0.0
        %v1370 = vld [vmem:[#allocation8 + $0x50] sm:$0xff]
        %v1371 = vld [vmem:[#allocation8 + $0x58] sm:$0xff]
        %v1372 = vld [vmem:[#allocation8 + $0x60] sm:$0xff]
        %v1373 = vld [vmem:[#allocation8 + $0x68] sm:$0xff]
        %v1374 = vld [vmem:[#allocation8 + $0x70] sm:$0xff]
        %v1375 = vld [vmem:[#allocation8 + $0x78] sm:$0xff]
        %v1376 = vld [vmem:[#allocation8 + $0x80] sm:$0xff]
        %v1377 = vld [vmem:[#allocation8 + $0x88] sm:$0xff]
        %v1378 = vld [vmem:[#allocation8 + $0x90] sm:$0xff]
        %v1379 = vld [vmem:[#allocation8 + $0x98] sm:$0xff]
        %v1380 = vld [vmem:[#allocation8 + $0xa0] sm:$0xff]
        %v1381 = vld [vmem:[#allocation8 + $0xa8] sm:$0xff]
        %v1382 = vld [vmem:[#allocation8 + $0xb0] sm:$0xff]
        %v1383 = vld [vmem:[#allocation8 + $0xb8] sm:$0xff]
        %v1384 = vld [vmem:[#allocation8 + $0xc0] sm:$0xff]
        %v1385 = vld [vmem:[#allocation8 + $0xc8] sm:$0xff]
        %v1386 = vld [vmem:[#allocation8 + $0xd0] sm:$0xff]
        %v1387 = vld [vmem:[#allocation8 + $0xd8] sm:$0xff]
        %v1388 = vld [vmem:[#allocation8 + $0xe0] sm:$0xff]
        %v1389 = vld [vmem:[#allocation8 + $0xe8] sm:$0xff]
        %v1390 = vld [vmem:[#allocation8 + $0xf0] sm:$0xff]
        %v1391 = vld [vmem:[#allocation8 + $0xf8] sm:$0xff]
        %v1392 = vld [vmem:[#allocation8 + $0x100] sm:$0xff]
        %v1393 = vld [vmem:[#allocation8 + $0x108] sm:$0xff]
        %v1394 = vld [vmem:[#allocation8 + $0x110] sm:$0xff]
        %v1395 = vld [vmem:[#allocation8 + $0x118] sm:$0xff]
        %v1396 = vld [vmem:[#allocation8 + $0x120] sm:$0xff]
        %v1397 = vld [vmem:[#allocation8 + $0x128] sm:$0xff]
        %v1398 = vld [vmem:[#allocation8 + $0x130] sm:$0xff]
        %v1399 = vld [vmem:[#allocation8 + $0x138] sm:$0xff]
        %v1400 = vld [vmem:[#allocation8 + $0x140] sm:$0xff]
        %v1401 = vld [vmem:[#allocation8 + $0x148] sm:$0xff]
        %vm1402 = vcmask 130048
        %v1404 = vsel %vm1402, %v1370, 0
        %v1407 = vsel %vm1402, %v1371, 0
        %v1410 = vsel %vm1402, %v1372, 0
        %v1413 = vsel %vm1402, %v1373, 0
        %v1416 = vsel %vm1402, %v1374, 0
        %v1419 = vsel %vm1402, %v1375, 0
        %v1422 = vsel %vm1402, %v1376, 0
        %v1425 = vsel %vm1402, %v1377, 0
        %v1428 = vsel %vm1402, %v1378, 0
        %v1431 = vsel %vm1402, %v1379, 0
        %v1434 = vsel %vm1402, %v1380, 0
        %v1437 = vsel %vm1402, %v1381, 0
        %v1440 = vsel %vm1402, %v1382, 0
        %v1443 = vsel %vm1402, %v1383, 0
        %v1446 = vsel %vm1402, %v1384, 0
        %v1449 = vsel %vm1402, %v1385, 0
        %v1452 = vsel %vm1402, %v1386, 0
        %v1455 = vsel %vm1402, %v1387, 0
        %v1458 = vsel %vm1402, %v1388, 0
        %v1461 = vsel %vm1402, %v1389, 0
        %v1464 = vsel %vm1402, %v1390, 0
        %v1467 = vsel %vm1402, %v1391, 0
        %v1470 = vsel %vm1402, %v1392, 0
        %v1473 = vsel %vm1402, %v1393, 0
        %v1476 = vsel %vm1402, %v1394, 0
        %v1479 = vsel %vm1402, %v1395, 0
        %v1482 = vsel %vm1402, %v1396, 0
        %v1485 = vsel %vm1402, %v1397, 0
        %v1488 = vsel %vm1402, %v1398, 0
        %v1491 = vsel %vm1402, %v1399, 0
        %v1494 = vsel %vm1402, %v1400, 0
        %v1497 = vsel %vm1402, %v1401, 0
        %1499 = vmatprep.subr.mxu0 0.0
        %1500 = vmatpush1.msra.mxu0 0.0
        %1501 = vmatprep.subr.mxu0 0.0
        %1502 = vmatpush1.msra.mxu0 0.0
        %1503 = vmatprep.subr.mxu0 0.0
        %1504 = vmatpush1.msra.mxu0 0.0
        %1505 = vmatprep.subr.mxu0 0.0
        %1506 = vmatpush1.msra.mxu0 0.0
        %1507 = vmatprep.subr.mxu0 0.0
        %1508 = vmatpush1.msra.mxu0 0.0
        %1509 = vmatprep.subr.mxu0 0.0
        %1510 = vmatpush1.msra.mxu0 0.0
        %1511 = vmatprep.subr.mxu0 0.0
        %1512 = vmatpush1.msra.mxu0 0.0
        %1513 = vmatprep.subr.mxu0 0.0
        %1514 = vmatpush1.msra.mxu0 0.0
        %1515 = vmatprep.subr.mxu0 0.0
        %1516 = vmatpush1.msra.mxu0 0.0
        %1517 = vmatprep.subr.mxu0 0.0
        %1518 = vmatpush1.msra.mxu0 0.0
        %1519 = vmatprep.subr.mxu0 0.0
        %1520 = vmatpush1.msra.mxu0 0.0
        %1521 = vmatprep.subr.mxu0 0.0
        %1522 = vmatpush1.msra.mxu0 0.0
        %1523 = vmatprep.subr.mxu0 0.0
        %1524 = vmatpush1.msra.mxu0 0.0
        %1525 = vmatprep.subr.mxu0 0.0
        %1526 = vmatpush1.msra.mxu0 0.0
        %1527 = vmatprep.subr.mxu0 0.0
        %1528 = vmatpush1.msra.mxu0 %v1369
        %1529 = vmatprep.subr.mxu0 0.0
        %1530 = vmatpush1.msra.mxu0 %v1368
        %1531 = vmatprep.subr.mxu0 0.0
        %1532 = vmatpush2.msra.mxu0 0.0
        %1533 = vmatprep.subr.mxu0 0.0
        %1534 = vmatpush2.msra.mxu0 0.0
        %1535 = vmatprep.subr.mxu0 0.0
        %1536 = vmatpush2.msra.mxu0 0.0
        %1537 = vmatprep.subr.mxu0 0.0
        %1538 = vmatpush2.msra.mxu0 0.0
        %1539 = vmatprep.subr.mxu0 0.0
        %1540 = vmatpush2.msra.mxu0 0.0
        %1541 = vmatprep.subr.mxu0 0.0
        %1542 = vmatpush2.msra.mxu0 0.0
        %1543 = vmatprep.subr.mxu0 0.0
        %1544 = vmatpush2.msra.mxu0 0.0
        %1545 = vmatprep.subr.mxu0 0.0
        %1546 = vmatpush2.msra.mxu0 0.0
        %1547 = vmatprep.subr.mxu0 0.0
        %1548 = vmatpush2.msra.mxu0 0.0
        %1549 = vmatprep.subr.mxu0 0.0
        %1550 = vmatpush2.msra.mxu0 0.0
        %1551 = vmatprep.subr.mxu0 0.0
        %1552 = vmatpush2.msra.mxu0 0.0
        %1553 = vmatprep.subr.mxu0 0.0
        %1554 = vmatpush2.msra.mxu0 0.0
        %1555 = vmatprep.subr.mxu0 0.0
        %1556 = vmatpush2.msra.mxu0 0.0
        %1557 = vmatprep.subr.mxu0 0.0
        %1558 = vmatpush2.msra.mxu0 0.0
        %1559 = vmatprep.subr.mxu0 0.0
        %1560 = vmatpush2.msra.mxu0 0.0
        %1561 = vmatprep.subr.mxu0 0.0
        %1562 = vmatpush2.msra.mxu0 0.0
        %1563 = vmatprep.mubr.f32.mxu0 0.0
        %1564 = vmatmul.mubr.f32.gmra.mxu0 %v1404
        %v1565 = vpop.f32.mrf.mxu0
        %v1566 = vadd.f32 0.0, %v1565
        %v1567 = vpop.f32.mrf.mxu0
        %1568 = vmatprep.mubr.f32.mxu0 0.0
        %1569 = vmatmul.mubr.f32.gmra.mxu0 %v1407
        %v1570 = vpop.f32.mrf.mxu0
        %v1571 = vadd.f32 0.0, %v1570
        %v1572 = vpop.f32.mrf.mxu0
        %1573 = vmatprep.mubr.f32.mxu0 0.0
        %1574 = vmatmul.mubr.f32.gmra.mxu0 %v1410
        %v1575 = vpop.f32.mrf.mxu0
        %v1576 = vadd.f32 0.0, %v1575
        %v1577 = vpop.f32.mrf.mxu0
        %1578 = vmatprep.mubr.f32.mxu0 0.0
        %1579 = vmatmul.mubr.f32.gmra.mxu0 %v1413
        %v1580 = vpop.f32.mrf.mxu0
        %v1581 = vadd.f32 0.0, %v1580
        %v1582 = vpop.f32.mrf.mxu0
        %1583 = vmatprep.mubr.f32.mxu0 0.0
        %1584 = vmatmul.mubr.f32.gmra.mxu0 %v1416
        %v1585 = vpop.f32.mrf.mxu0
        %v1586 = vadd.f32 0.0, %v1585
        %v1587 = vpop.f32.mrf.mxu0
        %1588 = vmatprep.mubr.f32.mxu0 0.0
        %1589 = vmatmul.mubr.f32.gmra.mxu0 %v1419
        %v1590 = vpop.f32.mrf.mxu0
        %v1591 = vadd.f32 0.0, %v1590
        %v1592 = vpop.f32.mrf.mxu0
        %1593 = vmatprep.mubr.f32.mxu0 0.0
        %1594 = vmatmul.mubr.f32.gmra.mxu0 %v1422
        %v1595 = vpop.f32.mrf.mxu0
        %v1596 = vadd.f32 0.0, %v1595
        %v1597 = vpop.f32.mrf.mxu0
        %1598 = vmatprep.mubr.f32.mxu0 0.0
        %1599 = vmatmul.mubr.f32.gmra.mxu0 %v1425
        %v1600 = vpop.f32.mrf.mxu0
        %v1601 = vadd.f32 0.0, %v1600
        %v1602 = vpop.f32.mrf.mxu0
        %1603 = vmatprep.mubr.f32.mxu0 0.0
        %1604 = vmatmul.mubr.f32.gmra.mxu0 %v1428
        %v1605 = vpop.f32.mrf.mxu0
        %v1606 = vadd.f32 0.0, %v1605
        %v1607 = vpop.f32.mrf.mxu0
        %1608 = vmatprep.mubr.f32.mxu0 0.0
        %1609 = vmatmul.mubr.f32.gmra.mxu0 %v1431
        %v1610 = vpop.f32.mrf.mxu0
        %v1611 = vadd.f32 0.0, %v1610
        %v1612 = vpop.f32.mrf.mxu0
        %1613 = vmatprep.mubr.f32.mxu0 0.0
        %1614 = vmatmul.mubr.f32.gmra.mxu0 %v1434
        %v1615 = vpop.f32.mrf.mxu0
        %v1616 = vadd.f32 0.0, %v1615
        %v1617 = vpop.f32.mrf.mxu0
        %1618 = vmatprep.mubr.f32.mxu0 0.0
        %1619 = vmatmul.mubr.f32.gmra.mxu0 %v1437
        %v1620 = vpop.f32.mrf.mxu0
        %v1621 = vadd.f32 0.0, %v1620
        %v1622 = vpop.f32.mrf.mxu0
        %1623 = vmatprep.mubr.f32.mxu0 0.0
        %1624 = vmatmul.mubr.f32.gmra.mxu0 %v1440
        %v1625 = vpop.f32.mrf.mxu0
        %v1626 = vadd.f32 0.0, %v1625
        %v1627 = vpop.f32.mrf.mxu0
        %1628 = vmatprep.mubr.f32.mxu0 0.0
        %1629 = vmatmul.mubr.f32.gmra.mxu0 %v1443
        %v1630 = vpop.f32.mrf.mxu0
        %v1631 = vadd.f32 0.0, %v1630
        %v1632 = vpop.f32.mrf.mxu0
        %1633 = vmatprep.mubr.f32.mxu0 0.0
        %1634 = vmatmul.mubr.f32.gmra.mxu0 %v1446
        %v1635 = vpop.f32.mrf.mxu0
        %v1636 = vadd.f32 0.0, %v1635
        %v1637 = vpop.f32.mrf.mxu0
        %1638 = vmatprep.mubr.f32.mxu0 0.0
        %1639 = vmatmul.mubr.f32.gmra.mxu0 %v1449
        %v1640 = vpop.f32.mrf.mxu0
        %v1641 = vadd.f32 0.0, %v1640
        %v1642 = vpop.f32.mrf.mxu0
        %1643 = vmatprep.mubr.f32.mxu0 0.0
        %1644 = vmatmul.mubr.f32.gmra.mxu0 %v1452
        %v1645 = vpop.f32.mrf.mxu0
        %v1646 = vadd.f32 0.0, %v1645
        %v1647 = vpop.f32.mrf.mxu0
        %1648 = vmatprep.mubr.f32.mxu0 0.0
        %1649 = vmatmul.mubr.f32.gmra.mxu0 %v1455
        %v1650 = vpop.f32.mrf.mxu0
        %v1651 = vadd.f32 0.0, %v1650
        %v1652 = vpop.f32.mrf.mxu0
        %1653 = vmatprep.mubr.f32.mxu0 0.0
        %1654 = vmatmul.mubr.f32.gmra.mxu0 %v1458
        %v1655 = vpop.f32.mrf.mxu0
        %v1656 = vadd.f32 0.0, %v1655
        %v1657 = vpop.f32.mrf.mxu0
        %1658 = vmatprep.mubr.f32.mxu0 0.0
        %1659 = vmatmul.mubr.f32.gmra.mxu0 %v1461
        %v1660 = vpop.f32.mrf.mxu0
        %v1661 = vadd.f32 0.0, %v1660
        %v1662 = vpop.f32.mrf.mxu0
        %1663 = vmatprep.mubr.f32.mxu0 0.0
        %1664 = vmatmul.mubr.f32.gmra.mxu0 %v1464
        %v1665 = vpop.f32.mrf.mxu0
        %v1666 = vadd.f32 0.0, %v1665
        %v1667 = vpop.f32.mrf.mxu0
        %1668 = vmatprep.mubr.f32.mxu0 0.0
        %1669 = vmatmul.mubr.f32.gmra.mxu0 %v1467
        %v1670 = vpop.f32.mrf.mxu0
        %v1671 = vadd.f32 0.0, %v1670
        %v1672 = vpop.f32.mrf.mxu0
        %1673 = vmatprep.mubr.f32.mxu0 0.0
        %1674 = vmatmul.mubr.f32.gmra.mxu0 %v1470
        %v1675 = vpop.f32.mrf.mxu0
        %v1676 = vadd.f32 0.0, %v1675
        %v1677 = vpop.f32.mrf.mxu0
        %1678 = vmatprep.mubr.f32.mxu0 0.0
        %1679 = vmatmul.mubr.f32.gmra.mxu0 %v1473
        %v1680 = vpop.f32.mrf.mxu0
        %v1681 = vadd.f32 0.0, %v1680
        %v1682 = vpop.f32.mrf.mxu0
        %1683 = vmatprep.mubr.f32.mxu0 0.0
        %1684 = vmatmul.mubr.f32.gmra.mxu0 %v1476
        %v1685 = vpop.f32.mrf.mxu0
        %v1686 = vadd.f32 0.0, %v1685
        %v1687 = vpop.f32.mrf.mxu0
        %1688 = vmatprep.mubr.f32.mxu0 0.0
        %1689 = vmatmul.mubr.f32.gmra.mxu0 %v1479
        %v1690 = vpop.f32.mrf.mxu0
        %v1691 = vadd.f32 0.0, %v1690
        %v1692 = vpop.f32.mrf.mxu0
        %1693 = vmatprep.mubr.f32.mxu0 0.0
        %1694 = vmatmul.mubr.f32.gmra.mxu0 %v1482
        %v1695 = vpop.f32.mrf.mxu0
        %v1696 = vadd.f32 0.0, %v1695
        %v1697 = vpop.f32.mrf.mxu0
        %1698 = vmatprep.mubr.f32.mxu0 0.0
        %1699 = vmatmul.mubr.f32.gmra.mxu0 %v1485
        %v1700 = vpop.f32.mrf.mxu0
        %v1701 = vadd.f32 0.0, %v1700
        %v1702 = vpop.f32.mrf.mxu0
        %1703 = vmatprep.mubr.f32.mxu0 0.0
        %1704 = vmatmul.mubr.f32.gmra.mxu0 %v1488
        %v1705 = vpop.f32.mrf.mxu0
        %v1706 = vadd.f32 0.0, %v1705
        %v1707 = vpop.f32.mrf.mxu0
        %1708 = vmatprep.mubr.f32.mxu0 0.0
        %1709 = vmatmul.mubr.f32.gmra.mxu0 %v1491
        %v1710 = vpop.f32.mrf.mxu0
        %v1711 = vadd.f32 0.0, %v1710
        %v1712 = vpop.f32.mrf.mxu0
        %1713 = vmatprep.mubr.f32.mxu0 0.0
        %1714 = vmatmul.mubr.f32.gmra.mxu0 %v1494
        %v1715 = vpop.f32.mrf.mxu0
        %v1716 = vadd.f32 0.0, %v1715
        %v1717 = vpop.f32.mrf.mxu0
        %1718 = vmatprep.mubr.f32.mxu0 0.0
        %1719 = vmatmul.mubr.f32.gmra.mxu0 %v1497
        %v1720 = vpop.f32.mrf.mxu0
        %v1721 = vadd.f32 0.0, %v1720
        %v1722 = vpop.f32.mrf.mxu0
        %1723 = vdwg.mxu0
        %v1724 = vpack.c.bf16 %v1571, %v1566
        %v1725 = vld [vmem:[%s3] sm:$0xf]
        %v1726 = vld [vmem:[%s3 + $0x4] sm:$0xf]
        %v1727 = vpack.c.bf16 %v1581, %v1576
        %s1728 = scalar_lea.vmem %s3, 8
        %v1729 = vld [vmem:[%s1728] sm:$0xf]
        %v1730 = vld [vmem:[%s1728 + $0x4] sm:$0xf]
        %v1733 = vunpack.c.l.b16 %v1729
        %v1734 = vunpack.c.l.b16 %v1730
        %v1735 = vpack.c.b16 %v1734, %v1733
        %v1738 = vsel %vm1402, %v1727, 0
        %1740 = vmatprep.subr.bf16.mxu0 0
        %1741 = vmatpush1.bf16.msra.mxu0 0
        %1742 = vmatprep.subr.bf16.mxu0 0
        %1743 = vmatpush1.bf16.msra.mxu0 0
        %1744 = vmatprep.subr.bf16.mxu0 0
        %1745 = vmatpush1.bf16.msra.mxu0 0
        %1746 = vmatprep.subr.bf16.mxu0 0
        %1747 = vmatpush1.bf16.msra.mxu0 0
        %1748 = vmatprep.subr.bf16.mxu0 0
        %1749 = vmatpush1.bf16.msra.mxu0 0
        %1750 = vmatprep.subr.bf16.mxu0 0
        %1751 = vmatpush1.bf16.msra.mxu0 0
        %1752 = vmatprep.subr.bf16.mxu0 0
        %1753 = vmatpush1.bf16.msra.mxu0 0
        %1754 = vmatprep.subr.bf16.mxu0 0
        %1755 = vmatpush1.bf16.msra.mxu0 %v1735
        %1756 = vmatprep.subr.bf16.mxu0 0
        %1757 = vmatpush2.bf16.msra.mxu0 0
        %1758 = vmatprep.subr.bf16.mxu0 0
        %1759 = vmatpush2.bf16.msra.mxu0 0
        %1760 = vmatprep.subr.bf16.mxu0 0
        %1761 = vmatpush2.bf16.msra.mxu0 0
        %1762 = vmatprep.subr.bf16.mxu0 0
        %1763 = vmatpush2.bf16.msra.mxu0 0
        %1764 = vmatprep.subr.bf16.mxu0 0
        %1765 = vmatpush2.bf16.msra.mxu0 0
        %1766 = vmatprep.subr.bf16.mxu0 0
        %1767 = vmatpush2.bf16.msra.mxu0 0
        %1768 = vmatprep.subr.bf16.mxu0 0
        %1769 = vmatpush2.bf16.msra.mxu0 0
        %1770 = vmatprep.subr.bf16.mxu0 0
        %1771 = vmatpush2.bf16.msra.mxu0 0
        %1772 = vmatprep.mubr.bf16.mxu0 0
        %1773 = vmatmul.mubr.bf16.gmra.mxu0 %v1738
        %v1774 = vpop.f32.mrf.mxu0
        %v1775 = vadd.f32 0.0, %v1774
        %v1776 = vpop.f32.mrf.mxu0
        %v1777 = vpop.f32.mrf.mxu0
        %v1778 = vadd.f32 0.0, %v1777
        %v1779 = vpop.f32.mrf.mxu0
        %1780 = vdwg.mxu0
        %v1783 = vunpack.c.l.b16 %v1725
        %v1784 = vunpack.c.l.b16 %v1726
        %v1785 = vpack.c.b16 %v1784, %v1783
        %v1788 = vsel %vm1402, %v1724, 0
        %1790 = vmatprep.subr.bf16.mxu0 0
        %1791 = vmatpush1.bf16.msra.mxu0 0
        %1792 = vmatprep.subr.bf16.mxu0 0
        %1793 = vmatpush1.bf16.msra.mxu0 0
        %1794 = vmatprep.subr.bf16.mxu0 0
        %1795 = vmatpush1.bf16.msra.mxu0 0
        %1796 = vmatprep.subr.bf16.mxu0 0
        %1797 = vmatpush1.bf16.msra.mxu0 0
        %1798 = vmatprep.subr.bf16.mxu0 0
        %1799 = vmatpush1.bf16.msra.mxu0 0
        %1800 = vmatprep.subr.bf16.mxu0 0
        %1801 = vmatpush1.bf16.msra.mxu0 0
        %1802 = vmatprep.subr.bf16.mxu0 0
        %1803 = vmatpush1.bf16.msra.mxu0 0
        %1804 = vmatprep.subr.bf16.mxu0 0
        %1805 = vmatpush1.bf16.msra.mxu0 %v1785
        %1806 = vmatprep.subr.bf16.mxu0 0
        %1807 = vmatpush2.bf16.msra.mxu0 0
        %1808 = vmatprep.subr.bf16.mxu0 0
        %1809 = vmatpush2.bf16.msra.mxu0 0
        %1810 = vmatprep.subr.bf16.mxu0 0
        %1811 = vmatpush2.bf16.msra.mxu0 0
        %1812 = vmatprep.subr.bf16.mxu0 0
        %1813 = vmatpush2.bf16.msra.mxu0 0
        %1814 = vmatprep.subr.bf16.mxu0 0
        %1815 = vmatpush2.bf16.msra.mxu0 0
        %1816 = vmatprep.subr.bf16.mxu0 0
        %1817 = vmatpush2.bf16.msra.mxu0 0
        %1818 = vmatprep.subr.bf16.mxu0 0
        %1819 = vmatpush2.bf16.msra.mxu0 0
        %1820 = vmatprep.subr.bf16.mxu0 0
        %1821 = vmatpush2.bf16.msra.mxu0 0
        %1822 = vmatprep.mubr.bf16.mxu0 0
        %1823 = vmatmul.mubr.bf16.gmra.mxu0 %v1788
        %v1824 = vpop.f32.mrf.mxu0
        %v1825 = vadd.f32 %v1775, %v1824
        %v1826 = vpop.f32.mrf.mxu0
        %v1827 = vpop.f32.mrf.mxu0
        %v1828 = vadd.f32 %v1778, %v1827
        %v1829 = vpop.f32.mrf.mxu0
        %1830 = vdwg.mxu0
        %v1831 = vpack.c.bf16 %v1591, %v1586
        %s1832 = scalar_lea.vmem %s3, 16
        %v1833 = vld [vmem:[%s1832] sm:$0xf]
        %v1834 = vld [vmem:[%s1832 + $0x4] sm:$0xf]
        %v1837 = vunpack.c.l.b16 %v1833
        %v1838 = vunpack.c.l.b16 %v1834
        %v1839 = vpack.c.b16 %v1838, %v1837
        %v1842 = vsel %vm1402, %v1831, 0
        %1844 = vmatprep.subr.bf16.mxu0 0
        %1845 = vmatpush1.bf16.msra.mxu0 0
        %1846 = vmatprep.subr.bf16.mxu0 0
        %1847 = vmatpush1.bf16.msra.mxu0 0
        %1848 = vmatprep.subr.bf16.mxu0 0
        %1849 = vmatpush1.bf16.msra.mxu0 0
        %1850 = vmatprep.subr.bf16.mxu0 0
        %1851 = vmatpush1.bf16.msra.mxu0 0
        %1852 = vmatprep.subr.bf16.mxu0 0
        %1853 = vmatpush1.bf16.msra.mxu0 0
        %1854 = vmatprep.subr.bf16.mxu0 0
        %1855 = vmatpush1.bf16.msra.mxu0 0
        %1856 = vmatprep.subr.bf16.mxu0 0
        %1857 = vmatpush1.bf16.msra.mxu0 0
        %1858 = vmatprep.subr.bf16.mxu0 0
        %1859 = vmatpush1.bf16.msra.mxu0 %v1839
        %1860 = vmatprep.subr.bf16.mxu0 0
        %1861 = vmatpush2.bf16.msra.mxu0 0
        %1862 = vmatprep.subr.bf16.mxu0 0
        %1863 = vmatpush2.bf16.msra.mxu0 0
        %1864 = vmatprep.subr.bf16.mxu0 0
        %1865 = vmatpush2.bf16.msra.mxu0 0
        %1866 = vmatprep.subr.bf16.mxu0 0
        %1867 = vmatpush2.bf16.msra.mxu0 0
        %1868 = vmatprep.subr.bf16.mxu0 0
        %1869 = vmatpush2.bf16.msra.mxu0 0
        %1870 = vmatprep.subr.bf16.mxu0 0
        %1871 = vmatpush2.bf16.msra.mxu0 0
        %1872 = vmatprep.subr.bf16.mxu0 0
        %1873 = vmatpush2.bf16.msra.mxu0 0
        %1874 = vmatprep.subr.bf16.mxu0 0
        %1875 = vmatpush2.bf16.msra.mxu0 0
        %1876 = vmatprep.mubr.bf16.mxu0 0
        %1877 = vmatmul.mubr.bf16.gmra.mxu0 %v1842
        %v1878 = vpop.f32.mrf.mxu0
        %v1879 = vadd.f32 0.0, %v1878
        %v1880 = vpop.f32.mrf.mxu0
        %v1881 = vpop.f32.mrf.mxu0
        %v1882 = vadd.f32 0.0, %v1881
        %v1883 = vpop.f32.mrf.mxu0
        %1884 = vdwg.mxu0
        %v1885 = vadd.f32 %v1825, %v1879
        %v1886 = vadd.f32 %v1828, %v1882
        %v1887 = vpack.c.bf16 %v1601, %v1596
        %s1888 = scalar_lea.vmem %s3, 24
        %v1889 = vld [vmem:[%s1888] sm:$0xf]
        %v1890 = vld [vmem:[%s1888 + $0x4] sm:$0xf]
        %v1893 = vunpack.c.l.b16 %v1889
        %v1894 = vunpack.c.l.b16 %v1890
        %v1895 = vpack.c.b16 %v1894, %v1893
        %v1898 = vsel %vm1402, %v1887, 0
        %1900 = vmatprep.subr.bf16.mxu0 0
        %1901 = vmatpush1.bf16.msra.mxu0 0
        %1902 = vmatprep.subr.bf16.mxu0 0
        %1903 = vmatpush1.bf16.msra.mxu0 0
        %1904 = vmatprep.subr.bf16.mxu0 0
        %1905 = vmatpush1.bf16.msra.mxu0 0
        %1906 = vmatprep.subr.bf16.mxu0 0
        %1907 = vmatpush1.bf16.msra.mxu0 0
        %1908 = vmatprep.subr.bf16.mxu0 0
        %1909 = vmatpush1.bf16.msra.mxu0 0
        %1910 = vmatprep.subr.bf16.mxu0 0
        %1911 = vmatpush1.bf16.msra.mxu0 0
        %1912 = vmatprep.subr.bf16.mxu0 0
        %1913 = vmatpush1.bf16.msra.mxu0 0
        %1914 = vmatprep.subr.bf16.mxu0 0
        %1915 = vmatpush1.bf16.msra.mxu0 %v1895
        %1916 = vmatprep.subr.bf16.mxu0 0
        %1917 = vmatpush2.bf16.msra.mxu0 0
        %1918 = vmatprep.subr.bf16.mxu0 0
        %1919 = vmatpush2.bf16.msra.mxu0 0
        %1920 = vmatprep.subr.bf16.mxu0 0
        %1921 = vmatpush2.bf16.msra.mxu0 0
        %1922 = vmatprep.subr.bf16.mxu0 0
        %1923 = vmatpush2.bf16.msra.mxu0 0
        %1924 = vmatprep.subr.bf16.mxu0 0
        %1925 = vmatpush2.bf16.msra.mxu0 0
        %1926 = vmatprep.subr.bf16.mxu0 0
        %1927 = vmatpush2.bf16.msra.mxu0 0
        %1928 = vmatprep.subr.bf16.mxu0 0
        %1929 = vmatpush2.bf16.msra.mxu0 0
        %1930 = vmatprep.subr.bf16.mxu0 0
        %1931 = vmatpush2.bf16.msra.mxu0 0
        %1932 = vmatprep.mubr.bf16.mxu0 0
        %1933 = vmatmul.mubr.bf16.gmra.mxu0 %v1898
        %v1934 = vpop.f32.mrf.mxu0
        %v1935 = vadd.f32 0.0, %v1934
        %v1936 = vpop.f32.mrf.mxu0
        %v1937 = vpop.f32.mrf.mxu0
        %v1938 = vadd.f32 0.0, %v1937
        %v1939 = vpop.f32.mrf.mxu0
        %1940 = vdwg.mxu0
        %v1941 = vadd.f32 %v1885, %v1935
        %v1942 = vadd.f32 %v1886, %v1938
        %v1943 = vpack.c.bf16 %v1611, %v1606
        %s1944 = scalar_lea.vmem %s3, 32
        %v1945 = vld [vmem:[%s1944] sm:$0xf]
        %v1946 = vld [vmem:[%s1944 + $0x4] sm:$0xf]
        %v1949 = vunpack.c.l.b16 %v1945
        %v1950 = vunpack.c.l.b16 %v1946
        %v1951 = vpack.c.b16 %v1950, %v1949
        %v1954 = vsel %vm1402, %v1943, 0
        %1956 = vmatprep.subr.bf16.mxu0 0
        %1957 = vmatpush1.bf16.msra.mxu0 0
        %1958 = vmatprep.subr.bf16.mxu0 0
        %1959 = vmatpush1.bf16.msra.mxu0 0
        %1960 = vmatprep.subr.bf16.mxu0 0
        %1961 = vmatpush1.bf16.msra.mxu0 0
        %1962 = vmatprep.subr.bf16.mxu0 0
        %1963 = vmatpush1.bf16.msra.mxu0 0
        %1964 = vmatprep.subr.bf16.mxu0 0
        %1965 = vmatpush1.bf16.msra.mxu0 0
        %1966 = vmatprep.subr.bf16.mxu0 0
        %1967 = vmatpush1.bf16.msra.mxu0 0
        %1968 = vmatprep.subr.bf16.mxu0 0
        %1969 = vmatpush1.bf16.msra.mxu0 0
        %1970 = vmatprep.subr.bf16.mxu0 0
        %1971 = vmatpush1.bf16.msra.mxu0 %v1951
        %1972 = vmatprep.subr.bf16.mxu0 0
        %1973 = vmatpush2.bf16.msra.mxu0 0
        %1974 = vmatprep.subr.bf16.mxu0 0
        %1975 = vmatpush2.bf16.msra.mxu0 0
        %1976 = vmatprep.subr.bf16.mxu0 0
        %1977 = vmatpush2.bf16.msra.mxu0 0
        %1978 = vmatprep.subr.bf16.mxu0 0
        %1979 = vmatpush2.bf16.msra.mxu0 0
        %1980 = vmatprep.subr.bf16.mxu0 0
        %1981 = vmatpush2.bf16.msra.mxu0 0
        %1982 = vmatprep.subr.bf16.mxu0 0
        %1983 = vmatpush2.bf16.msra.mxu0 0
        %1984 = vmatprep.subr.bf16.mxu0 0
        %1985 = vmatpush2.bf16.msra.mxu0 0
        %1986 = vmatprep.subr.bf16.mxu0 0
        %1987 = vmatpush2.bf16.msra.mxu0 0
        %1988 = vmatprep.mubr.bf16.mxu0 0
        %1989 = vmatmul.mubr.bf16.gmra.mxu0 %v1954
        %v1990 = vpop.f32.mrf.mxu0
        %v1991 = vadd.f32 0.0, %v1990
        %v1992 = vpop.f32.mrf.mxu0
        %v1993 = vpop.f32.mrf.mxu0
        %v1994 = vadd.f32 0.0, %v1993
        %v1995 = vpop.f32.mrf.mxu0
        %1996 = vdwg.mxu0
        %v1997 = vadd.f32 %v1941, %v1991
        %v1998 = vadd.f32 %v1942, %v1994
        %v1999 = vpack.c.bf16 %v1621, %v1616
        %s2000 = scalar_lea.vmem %s3, 40
        %v2001 = vld [vmem:[%s2000] sm:$0xf]
        %v2002 = vld [vmem:[%s2000 + $0x4] sm:$0xf]
        %v2005 = vunpack.c.l.b16 %v2001
        %v2006 = vunpack.c.l.b16 %v2002
        %v2007 = vpack.c.b16 %v2006, %v2005
        %v2010 = vsel %vm1402, %v1999, 0
        %2012 = vmatprep.subr.bf16.mxu0 0
        %2013 = vmatpush1.bf16.msra.mxu0 0
        %2014 = vmatprep.subr.bf16.mxu0 0
        %2015 = vmatpush1.bf16.msra.mxu0 0
        %2016 = vmatprep.subr.bf16.mxu0 0
        %2017 = vmatpush1.bf16.msra.mxu0 0
        %2018 = vmatprep.subr.bf16.mxu0 0
        %2019 = vmatpush1.bf16.msra.mxu0 0
        %2020 = vmatprep.subr.bf16.mxu0 0
        %2021 = vmatpush1.bf16.msra.mxu0 0
        %2022 = vmatprep.subr.bf16.mxu0 0
        %2023 = vmatpush1.bf16.msra.mxu0 0
        %2024 = vmatprep.subr.bf16.mxu0 0
        %2025 = vmatpush1.bf16.msra.mxu0 0
        %2026 = vmatprep.subr.bf16.mxu0 0
        %2027 = vmatpush1.bf16.msra.mxu0 %v2007
        %2028 = vmatprep.subr.bf16.mxu0 0
        %2029 = vmatpush2.bf16.msra.mxu0 0
        %2030 = vmatprep.subr.bf16.mxu0 0
        %2031 = vmatpush2.bf16.msra.mxu0 0
        %2032 = vmatprep.subr.bf16.mxu0 0
        %2033 = vmatpush2.bf16.msra.mxu0 0
        %2034 = vmatprep.subr.bf16.mxu0 0
        %2035 = vmatpush2.bf16.msra.mxu0 0
        %2036 = vmatprep.subr.bf16.mxu0 0
        %2037 = vmatpush2.bf16.msra.mxu0 0
        %2038 = vmatprep.subr.bf16.mxu0 0
        %2039 = vmatpush2.bf16.msra.mxu0 0
        %2040 = vmatprep.subr.bf16.mxu0 0
        %2041 = vmatpush2.bf16.msra.mxu0 0
        %2042 = vmatprep.subr.bf16.mxu0 0
        %2043 = vmatpush2.bf16.msra.mxu0 0
        %2044 = vmatprep.mubr.bf16.mxu0 0
        %2045 = vmatmul.mubr.bf16.gmra.mxu0 %v2010
        %v2046 = vpop.f32.mrf.mxu0
        %v2047 = vadd.f32 0.0, %v2046
        %v2048 = vpop.f32.mrf.mxu0
        %v2049 = vpop.f32.mrf.mxu0
        %v2050 = vadd.f32 0.0, %v2049
        %v2051 = vpop.f32.mrf.mxu0
        %2052 = vdwg.mxu0
        %v2053 = vadd.f32 %v1997, %v2047
        %v2054 = vadd.f32 %v1998, %v2050
        %v2055 = vpack.c.bf16 %v1631, %v1626
        %s2056 = scalar_lea.vmem %s3, 48
        %v2057 = vld [vmem:[%s2056] sm:$0xf]
        %v2058 = vld [vmem:[%s2056 + $0x4] sm:$0xf]
        %v2061 = vunpack.c.l.b16 %v2057
        %v2062 = vunpack.c.l.b16 %v2058
        %v2063 = vpack.c.b16 %v2062, %v2061
        %v2066 = vsel %vm1402, %v2055, 0
        %2068 = vmatprep.subr.bf16.mxu0 0
        %2069 = vmatpush1.bf16.msra.mxu0 0
        %2070 = vmatprep.subr.bf16.mxu0 0
        %2071 = vmatpush1.bf16.msra.mxu0 0
        %2072 = vmatprep.subr.bf16.mxu0 0
        %2073 = vmatpush1.bf16.msra.mxu0 0
        %2074 = vmatprep.subr.bf16.mxu0 0
        %2075 = vmatpush1.bf16.msra.mxu0 0
        %2076 = vmatprep.subr.bf16.mxu0 0
        %2077 = vmatpush1.bf16.msra.mxu0 0
        %2078 = vmatprep.subr.bf16.mxu0 0
        %2079 = vmatpush1.bf16.msra.mxu0 0
        %2080 = vmatprep.subr.bf16.mxu0 0
        %2081 = vmatpush1.bf16.msra.mxu0 0
        %2082 = vmatprep.subr.bf16.mxu0 0
        %2083 = vmatpush1.bf16.msra.mxu0 %v2063
        %2084 = vmatprep.subr.bf16.mxu0 0
        %2085 = vmatpush2.bf16.msra.mxu0 0
        %2086 = vmatprep.subr.bf16.mxu0 0
        %2087 = vmatpush2.bf16.msra.mxu0 0
        %2088 = vmatprep.subr.bf16.mxu0 0
        %2089 = vmatpush2.bf16.msra.mxu0 0
        %2090 = vmatprep.subr.bf16.mxu0 0
        %2091 = vmatpush2.bf16.msra.mxu0 0
        %2092 = vmatprep.subr.bf16.mxu0 0
        %2093 = vmatpush2.bf16.msra.mxu0 0
        %2094 = vmatprep.subr.bf16.mxu0 0
        %2095 = vmatpush2.bf16.msra.mxu0 0
        %2096 = vmatprep.subr.bf16.mxu0 0
        %2097 = vmatpush2.bf16.msra.mxu0 0
        %2098 = vmatprep.subr.bf16.mxu0 0
        %2099 = vmatpush2.bf16.msra.mxu0 0
        %2100 = vmatprep.mubr.bf16.mxu0 0
        %2101 = vmatmul.mubr.bf16.gmra.mxu0 %v2066
        %v2102 = vpop.f32.mrf.mxu0
        %v2103 = vadd.f32 0.0, %v2102
        %v2104 = vpop.f32.mrf.mxu0
        %v2105 = vpop.f32.mrf.mxu0
        %v2106 = vadd.f32 0.0, %v2105
        %v2107 = vpop.f32.mrf.mxu0
        %2108 = vdwg.mxu0
        %v2109 = vadd.f32 %v2053, %v2103
        %v2110 = vadd.f32 %v2054, %v2106
        %v2111 = vpack.c.bf16 %v1641, %v1636
        %s2112 = scalar_lea.vmem %s3, 56
        %v2113 = vld [vmem:[%s2112] sm:$0xf]
        %v2114 = vld [vmem:[%s2112 + $0x4] sm:$0xf]
        %v2117 = vunpack.c.l.b16 %v2113
        %v2118 = vunpack.c.l.b16 %v2114
        %v2119 = vpack.c.b16 %v2118, %v2117
        %v2122 = vsel %vm1402, %v2111, 0
        %2124 = vmatprep.subr.bf16.mxu0 0
        %2125 = vmatpush1.bf16.msra.mxu0 0
        %2126 = vmatprep.subr.bf16.mxu0 0
        %2127 = vmatpush1.bf16.msra.mxu0 0
        %2128 = vmatprep.subr.bf16.mxu0 0
        %2129 = vmatpush1.bf16.msra.mxu0 0
        %2130 = vmatprep.subr.bf16.mxu0 0
        %2131 = vmatpush1.bf16.msra.mxu0 0
        %2132 = vmatprep.subr.bf16.mxu0 0
        %2133 = vmatpush1.bf16.msra.mxu0 0
        %2134 = vmatprep.subr.bf16.mxu0 0
        %2135 = vmatpush1.bf16.msra.mxu0 0
        %2136 = vmatprep.subr.bf16.mxu0 0
        %2137 = vmatpush1.bf16.msra.mxu0 0
        %2138 = vmatprep.subr.bf16.mxu0 0
        %2139 = vmatpush1.bf16.msra.mxu0 %v2119
        %2140 = vmatprep.subr.bf16.mxu0 0
        %2141 = vmatpush2.bf16.msra.mxu0 0
        %2142 = vmatprep.subr.bf16.mxu0 0
        %2143 = vmatpush2.bf16.msra.mxu0 0
        %2144 = vmatprep.subr.bf16.mxu0 0
        %2145 = vmatpush2.bf16.msra.mxu0 0
        %2146 = vmatprep.subr.bf16.mxu0 0
        %2147 = vmatpush2.bf16.msra.mxu0 0
        %2148 = vmatprep.subr.bf16.mxu0 0
        %2149 = vmatpush2.bf16.msra.mxu0 0
        %2150 = vmatprep.subr.bf16.mxu0 0
        %2151 = vmatpush2.bf16.msra.mxu0 0
        %2152 = vmatprep.subr.bf16.mxu0 0
        %2153 = vmatpush2.bf16.msra.mxu0 0
        %2154 = vmatprep.subr.bf16.mxu0 0
        %2155 = vmatpush2.bf16.msra.mxu0 0
        %2156 = vmatprep.mubr.bf16.mxu0 0
        %2157 = vmatmul.mubr.bf16.gmra.mxu0 %v2122
        %v2158 = vpop.f32.mrf.mxu0
        %v2159 = vadd.f32 0.0, %v2158
        %v2160 = vpop.f32.mrf.mxu0
        %v2161 = vpop.f32.mrf.mxu0
        %v2162 = vadd.f32 0.0, %v2161
        %v2163 = vpop.f32.mrf.mxu0
        %2164 = vdwg.mxu0
        %v2165 = vadd.f32 %v2109, %v2159
        %v2166 = vadd.f32 %v2110, %v2162
        %v2167 = vpack.c.bf16 %v1651, %v1646
        %s2168 = scalar_lea.vmem %s3, 64
        %v2169 = vld [vmem:[%s2168] sm:$0xf]
        %v2170 = vld [vmem:[%s2168 + $0x4] sm:$0xf]
        %v2173 = vunpack.c.l.b16 %v2169
        %v2174 = vunpack.c.l.b16 %v2170
        %v2175 = vpack.c.b16 %v2174, %v2173
        %v2178 = vsel %vm1402, %v2167, 0
        %2180 = vmatprep.subr.bf16.mxu0 0
        %2181 = vmatpush1.bf16.msra.mxu0 0
        %2182 = vmatprep.subr.bf16.mxu0 0
        %2183 = vmatpush1.bf16.msra.mxu0 0
        %2184 = vmatprep.subr.bf16.mxu0 0
        %2185 = vmatpush1.bf16.msra.mxu0 0
        %2186 = vmatprep.subr.bf16.mxu0 0
        %2187 = vmatpush1.bf16.msra.mxu0 0
        %2188 = vmatprep.subr.bf16.mxu0 0
        %2189 = vmatpush1.bf16.msra.mxu0 0
        %2190 = vmatprep.subr.bf16.mxu0 0
        %2191 = vmatpush1.bf16.msra.mxu0 0
        %2192 = vmatprep.subr.bf16.mxu0 0
        %2193 = vmatpush1.bf16.msra.mxu0 0
        %2194 = vmatprep.subr.bf16.mxu0 0
        %2195 = vmatpush1.bf16.msra.mxu0 %v2175
        %2196 = vmatprep.subr.bf16.mxu0 0
        %2197 = vmatpush2.bf16.msra.mxu0 0
        %2198 = vmatprep.subr.bf16.mxu0 0
        %2199 = vmatpush2.bf16.msra.mxu0 0
        %2200 = vmatprep.subr.bf16.mxu0 0
        %2201 = vmatpush2.bf16.msra.mxu0 0
        %2202 = vmatprep.subr.bf16.mxu0 0
        %2203 = vmatpush2.bf16.msra.mxu0 0
        %2204 = vmatprep.subr.bf16.mxu0 0
        %2205 = vmatpush2.bf16.msra.mxu0 0
        %2206 = vmatprep.subr.bf16.mxu0 0
        %2207 = vmatpush2.bf16.msra.mxu0 0
        %2208 = vmatprep.subr.bf16.mxu0 0
        %2209 = vmatpush2.bf16.msra.mxu0 0
        %2210 = vmatprep.subr.bf16.mxu0 0
        %2211 = vmatpush2.bf16.msra.mxu0 0
        %2212 = vmatprep.mubr.bf16.mxu0 0
        %2213 = vmatmul.mubr.bf16.gmra.mxu0 %v2178
        %v2214 = vpop.f32.mrf.mxu0
        %v2215 = vadd.f32 0.0, %v2214
        %v2216 = vpop.f32.mrf.mxu0
        %v2217 = vpop.f32.mrf.mxu0
        %v2218 = vadd.f32 0.0, %v2217
        %v2219 = vpop.f32.mrf.mxu0
        %2220 = vdwg.mxu0
        %v2221 = vadd.f32 %v2165, %v2215
        %v2222 = vadd.f32 %v2166, %v2218
        %v2223 = vpack.c.bf16 %v1661, %v1656
        %s2224 = scalar_lea.vmem %s3, 72
        %v2225 = vld [vmem:[%s2224] sm:$0xf]
        %v2226 = vld [vmem:[%s2224 + $0x4] sm:$0xf]
        %v2229 = vunpack.c.l.b16 %v2225
        %v2230 = vunpack.c.l.b16 %v2226
        %v2231 = vpack.c.b16 %v2230, %v2229
        %v2234 = vsel %vm1402, %v2223, 0
        %2236 = vmatprep.subr.bf16.mxu0 0
        %2237 = vmatpush1.bf16.msra.mxu0 0
        %2238 = vmatprep.subr.bf16.mxu0 0
        %2239 = vmatpush1.bf16.msra.mxu0 0
        %2240 = vmatprep.subr.bf16.mxu0 0
        %2241 = vmatpush1.bf16.msra.mxu0 0
        %2242 = vmatprep.subr.bf16.mxu0 0
        %2243 = vmatpush1.bf16.msra.mxu0 0
        %2244 = vmatprep.subr.bf16.mxu0 0
        %2245 = vmatpush1.bf16.msra.mxu0 0
        %2246 = vmatprep.subr.bf16.mxu0 0
        %2247 = vmatpush1.bf16.msra.mxu0 0
        %2248 = vmatprep.subr.bf16.mxu0 0
        %2249 = vmatpush1.bf16.msra.mxu0 0
        %2250 = vmatprep.subr.bf16.mxu0 0
        %2251 = vmatpush1.bf16.msra.mxu0 %v2231
        %2252 = vmatprep.subr.bf16.mxu0 0
        %2253 = vmatpush2.bf16.msra.mxu0 0
        %2254 = vmatprep.subr.bf16.mxu0 0
        %2255 = vmatpush2.bf16.msra.mxu0 0
        %2256 = vmatprep.subr.bf16.mxu0 0
        %2257 = vmatpush2.bf16.msra.mxu0 0
        %2258 = vmatprep.subr.bf16.mxu0 0
        %2259 = vmatpush2.bf16.msra.mxu0 0
        %2260 = vmatprep.subr.bf16.mxu0 0
        %2261 = vmatpush2.bf16.msra.mxu0 0
        %2262 = vmatprep.subr.bf16.mxu0 0
        %2263 = vmatpush2.bf16.msra.mxu0 0
        %2264 = vmatprep.subr.bf16.mxu0 0
        %2265 = vmatpush2.bf16.msra.mxu0 0
        %2266 = vmatprep.subr.bf16.mxu0 0
        %2267 = vmatpush2.bf16.msra.mxu0 0
        %2268 = vmatprep.mubr.bf16.mxu0 0
        %2269 = vmatmul.mubr.bf16.gmra.mxu0 %v2234
        %v2270 = vpop.f32.mrf.mxu0
        %v2271 = vadd.f32 0.0, %v2270
        %v2272 = vpop.f32.mrf.mxu0
        %v2273 = vpop.f32.mrf.mxu0
        %v2274 = vadd.f32 0.0, %v2273
        %v2275 = vpop.f32.mrf.mxu0
        %2276 = vdwg.mxu0
        %v2277 = vadd.f32 %v2221, %v2271
        %v2278 = vadd.f32 %v2222, %v2274
        %v2279 = vpack.c.bf16 %v1671, %v1666
        %s2280 = scalar_lea.vmem %s3, 80
        %v2281 = vld [vmem:[%s2280] sm:$0xf]
        %v2282 = vld [vmem:[%s2280 + $0x4] sm:$0xf]
        %v2285 = vunpack.c.l.b16 %v2281
        %v2286 = vunpack.c.l.b16 %v2282
        %v2287 = vpack.c.b16 %v2286, %v2285
        %v2290 = vsel %vm1402, %v2279, 0
        %2292 = vmatprep.subr.bf16.mxu0 0
        %2293 = vmatpush1.bf16.msra.mxu0 0
        %2294 = vmatprep.subr.bf16.mxu0 0
        %2295 = vmatpush1.bf16.msra.mxu0 0
        %2296 = vmatprep.subr.bf16.mxu0 0
        %2297 = vmatpush1.bf16.msra.mxu0 0
        %2298 = vmatprep.subr.bf16.mxu0 0
        %2299 = vmatpush1.bf16.msra.mxu0 0
        %2300 = vmatprep.subr.bf16.mxu0 0
        %2301 = vmatpush1.bf16.msra.mxu0 0
        %2302 = vmatprep.subr.bf16.mxu0 0
        %2303 = vmatpush1.bf16.msra.mxu0 0
        %2304 = vmatprep.subr.bf16.mxu0 0
        %2305 = vmatpush1.bf16.msra.mxu0 0
        %2306 = vmatprep.subr.bf16.mxu0 0
        %2307 = vmatpush1.bf16.msra.mxu0 %v2287
        %2308 = vmatprep.subr.bf16.mxu0 0
        %2309 = vmatpush2.bf16.msra.mxu0 0
        %2310 = vmatprep.subr.bf16.mxu0 0
        %2311 = vmatpush2.bf16.msra.mxu0 0
        %2312 = vmatprep.subr.bf16.mxu0 0
        %2313 = vmatpush2.bf16.msra.mxu0 0
        %2314 = vmatprep.subr.bf16.mxu0 0
        %2315 = vmatpush2.bf16.msra.mxu0 0
        %2316 = vmatprep.subr.bf16.mxu0 0
        %2317 = vmatpush2.bf16.msra.mxu0 0
        %2318 = vmatprep.subr.bf16.mxu0 0
        %2319 = vmatpush2.bf16.msra.mxu0 0
        %2320 = vmatprep.subr.bf16.mxu0 0
        %2321 = vmatpush2.bf16.msra.mxu0 0
        %2322 = vmatprep.subr.bf16.mxu0 0
        %2323 = vmatpush2.bf16.msra.mxu0 0
        %2324 = vmatprep.mubr.bf16.mxu0 0
        %2325 = vmatmul.mubr.bf16.gmra.mxu0 %v2290
        %v2326 = vpop.f32.mrf.mxu0
        %v2327 = vadd.f32 0.0, %v2326
        %v2328 = vpop.f32.mrf.mxu0
        %v2329 = vpop.f32.mrf.mxu0
        %v2330 = vadd.f32 0.0, %v2329
        %v2331 = vpop.f32.mrf.mxu0
        %2332 = vdwg.mxu0
        %v2333 = vadd.f32 %v2277, %v2327
        %v2334 = vadd.f32 %v2278, %v2330
        %v2335 = vpack.c.bf16 %v1681, %v1676
        %s2336 = scalar_lea.vmem %s3, 88
        %v2337 = vld [vmem:[%s2336] sm:$0xf]
        %v2338 = vld [vmem:[%s2336 + $0x4] sm:$0xf]
        %v2341 = vunpack.c.l.b16 %v2337
        %v2342 = vunpack.c.l.b16 %v2338
        %v2343 = vpack.c.b16 %v2342, %v2341
        %v2346 = vsel %vm1402, %v2335, 0
        %2348 = vmatprep.subr.bf16.mxu0 0
        %2349 = vmatpush1.bf16.msra.mxu0 0
        %2350 = vmatprep.subr.bf16.mxu0 0
        %2351 = vmatpush1.bf16.msra.mxu0 0
        %2352 = vmatprep.subr.bf16.mxu0 0
        %2353 = vmatpush1.bf16.msra.mxu0 0
        %2354 = vmatprep.subr.bf16.mxu0 0
        %2355 = vmatpush1.bf16.msra.mxu0 0
        %2356 = vmatprep.subr.bf16.mxu0 0
        %2357 = vmatpush1.bf16.msra.mxu0 0
        %2358 = vmatprep.subr.bf16.mxu0 0
        %2359 = vmatpush1.bf16.msra.mxu0 0
        %2360 = vmatprep.subr.bf16.mxu0 0
        %2361 = vmatpush1.bf16.msra.mxu0 0
        %2362 = vmatprep.subr.bf16.mxu0 0
        %2363 = vmatpush1.bf16.msra.mxu0 %v2343
        %2364 = vmatprep.subr.bf16.mxu0 0
        %2365 = vmatpush2.bf16.msra.mxu0 0
        %2366 = vmatprep.subr.bf16.mxu0 0
        %2367 = vmatpush2.bf16.msra.mxu0 0
        %2368 = vmatprep.subr.bf16.mxu0 0
        %2369 = vmatpush2.bf16.msra.mxu0 0
        %2370 = vmatprep.subr.bf16.mxu0 0
        %2371 = vmatpush2.bf16.msra.mxu0 0
        %2372 = vmatprep.subr.bf16.mxu0 0
        %2373 = vmatpush2.bf16.msra.mxu0 0
        %2374 = vmatprep.subr.bf16.mxu0 0
        %2375 = vmatpush2.bf16.msra.mxu0 0
        %2376 = vmatprep.subr.bf16.mxu0 0
        %2377 = vmatpush2.bf16.msra.mxu0 0
        %2378 = vmatprep.subr.bf16.mxu0 0
        %2379 = vmatpush2.bf16.msra.mxu0 0
        %2380 = vmatprep.mubr.bf16.mxu0 0
        %2381 = vmatmul.mubr.bf16.gmra.mxu0 %v2346
        %v2382 = vpop.f32.mrf.mxu0
        %v2383 = vadd.f32 0.0, %v2382
        %v2384 = vpop.f32.mrf.mxu0
        %v2385 = vpop.f32.mrf.mxu0
        %v2386 = vadd.f32 0.0, %v2385
        %v2387 = vpop.f32.mrf.mxu0
        %2388 = vdwg.mxu0
        %v2389 = vadd.f32 %v2333, %v2383
        %v2390 = vadd.f32 %v2334, %v2386
        %v2391 = vpack.c.bf16 %v1691, %v1686
        %s2392 = scalar_lea.vmem %s3, 96
        %v2393 = vld [vmem:[%s2392] sm:$0xf]
        %v2394 = vld [vmem:[%s2392 + $0x4] sm:$0xf]
        %v2397 = vunpack.c.l.b16 %v2393
        %v2398 = vunpack.c.l.b16 %v2394
        %v2399 = vpack.c.b16 %v2398, %v2397
        %v2402 = vsel %vm1402, %v2391, 0
        %2404 = vmatprep.subr.bf16.mxu0 0
        %2405 = vmatpush1.bf16.msra.mxu0 0
        %2406 = vmatprep.subr.bf16.mxu0 0
        %2407 = vmatpush1.bf16.msra.mxu0 0
        %2408 = vmatprep.subr.bf16.mxu0 0
        %2409 = vmatpush1.bf16.msra.mxu0 0
        %2410 = vmatprep.subr.bf16.mxu0 0
        %2411 = vmatpush1.bf16.msra.mxu0 0
        %2412 = vmatprep.subr.bf16.mxu0 0
        %2413 = vmatpush1.bf16.msra.mxu0 0
        %2414 = vmatprep.subr.bf16.mxu0 0
        %2415 = vmatpush1.bf16.msra.mxu0 0
        %2416 = vmatprep.subr.bf16.mxu0 0
        %2417 = vmatpush1.bf16.msra.mxu0 0
        %2418 = vmatprep.subr.bf16.mxu0 0
        %2419 = vmatpush1.bf16.msra.mxu0 %v2399
        %2420 = vmatprep.subr.bf16.mxu0 0
        %2421 = vmatpush2.bf16.msra.mxu0 0
        %2422 = vmatprep.subr.bf16.mxu0 0
        %2423 = vmatpush2.bf16.msra.mxu0 0
        %2424 = vmatprep.subr.bf16.mxu0 0
        %2425 = vmatpush2.bf16.msra.mxu0 0
        %2426 = vmatprep.subr.bf16.mxu0 0
        %2427 = vmatpush2.bf16.msra.mxu0 0
        %2428 = vmatprep.subr.bf16.mxu0 0
        %2429 = vmatpush2.bf16.msra.mxu0 0
        %2430 = vmatprep.subr.bf16.mxu0 0
        %2431 = vmatpush2.bf16.msra.mxu0 0
        %2432 = vmatprep.subr.bf16.mxu0 0
        %2433 = vmatpush2.bf16.msra.mxu0 0
        %2434 = vmatprep.subr.bf16.mxu0 0
        %2435 = vmatpush2.bf16.msra.mxu0 0
        %2436 = vmatprep.mubr.bf16.mxu0 0
        %2437 = vmatmul.mubr.bf16.gmra.mxu0 %v2402
        %v2438 = vpop.f32.mrf.mxu0
        %v2439 = vadd.f32 0.0, %v2438
        %v2440 = vpop.f32.mrf.mxu0
        %v2441 = vpop.f32.mrf.mxu0
        %v2442 = vadd.f32 0.0, %v2441
        %v2443 = vpop.f32.mrf.mxu0
        %2444 = vdwg.mxu0
        %v2445 = vadd.f32 %v2389, %v2439
        %v2446 = vadd.f32 %v2390, %v2442
        %v2447 = vpack.c.bf16 %v1701, %v1696
        %s2448 = scalar_lea.vmem %s3, 104
        %v2449 = vld [vmem:[%s2448] sm:$0xf]
        %v2450 = vld [vmem:[%s2448 + $0x4] sm:$0xf]
        %v2453 = vunpack.c.l.b16 %v2449
        %v2454 = vunpack.c.l.b16 %v2450
        %v2455 = vpack.c.b16 %v2454, %v2453
        %v2458 = vsel %vm1402, %v2447, 0
        %2460 = vmatprep.subr.bf16.mxu0 0
        %2461 = vmatpush1.bf16.msra.mxu0 0
        %2462 = vmatprep.subr.bf16.mxu0 0
        %2463 = vmatpush1.bf16.msra.mxu0 0
        %2464 = vmatprep.subr.bf16.mxu0 0
        %2465 = vmatpush1.bf16.msra.mxu0 0
        %2466 = vmatprep.subr.bf16.mxu0 0
        %2467 = vmatpush1.bf16.msra.mxu0 0
        %2468 = vmatprep.subr.bf16.mxu0 0
        %2469 = vmatpush1.bf16.msra.mxu0 0
        %2470 = vmatprep.subr.bf16.mxu0 0
        %2471 = vmatpush1.bf16.msra.mxu0 0
        %2472 = vmatprep.subr.bf16.mxu0 0
        %2473 = vmatpush1.bf16.msra.mxu0 0
        %2474 = vmatprep.subr.bf16.mxu0 0
        %2475 = vmatpush1.bf16.msra.mxu0 %v2455
        %2476 = vmatprep.subr.bf16.mxu0 0
        %2477 = vmatpush2.bf16.msra.mxu0 0
        %2478 = vmatprep.subr.bf16.mxu0 0
        %2479 = vmatpush2.bf16.msra.mxu0 0
        %2480 = vmatprep.subr.bf16.mxu0 0
        %2481 = vmatpush2.bf16.msra.mxu0 0
        %2482 = vmatprep.subr.bf16.mxu0 0
        %2483 = vmatpush2.bf16.msra.mxu0 0
        %2484 = vmatprep.subr.bf16.mxu0 0
        %2485 = vmatpush2.bf16.msra.mxu0 0
        %2486 = vmatprep.subr.bf16.mxu0 0
        %2487 = vmatpush2.bf16.msra.mxu0 0
        %2488 = vmatprep.subr.bf16.mxu0 0
        %2489 = vmatpush2.bf16.msra.mxu0 0
        %2490 = vmatprep.subr.bf16.mxu0 0
        %2491 = vmatpush2.bf16.msra.mxu0 0
        %2492 = vmatprep.mubr.bf16.mxu0 0
        %2493 = vmatmul.mubr.bf16.gmra.mxu0 %v2458
        %v2494 = vpop.f32.mrf.mxu0
        %v2495 = vadd.f32 0.0, %v2494
        %v2496 = vpop.f32.mrf.mxu0
        %v2497 = vpop.f32.mrf.mxu0
        %v2498 = vadd.f32 0.0, %v2497
        %v2499 = vpop.f32.mrf.mxu0
        %2500 = vdwg.mxu0
        %v2501 = vadd.f32 %v2445, %v2495
        %v2502 = vadd.f32 %v2446, %v2498
        %v2503 = vpack.c.bf16 %v1711, %v1706
        %s2504 = scalar_lea.vmem %s3, 112
        %v2505 = vld [vmem:[%s2504] sm:$0xf]
        %v2506 = vld [vmem:[%s2504 + $0x4] sm:$0xf]
        %v2509 = vunpack.c.l.b16 %v2505
        %v2510 = vunpack.c.l.b16 %v2506
        %v2511 = vpack.c.b16 %v2510, %v2509
        %v2514 = vsel %vm1402, %v2503, 0
        %2516 = vmatprep.subr.bf16.mxu0 0
        %2517 = vmatpush1.bf16.msra.mxu0 0
        %2518 = vmatprep.subr.bf16.mxu0 0
        %2519 = vmatpush1.bf16.msra.mxu0 0
        %2520 = vmatprep.subr.bf16.mxu0 0
        %2521 = vmatpush1.bf16.msra.mxu0 0
        %2522 = vmatprep.subr.bf16.mxu0 0
        %2523 = vmatpush1.bf16.msra.mxu0 0
        %2524 = vmatprep.subr.bf16.mxu0 0
        %2525 = vmatpush1.bf16.msra.mxu0 0
        %2526 = vmatprep.subr.bf16.mxu0 0
        %2527 = vmatpush1.bf16.msra.mxu0 0
        %2528 = vmatprep.subr.bf16.mxu0 0
        %2529 = vmatpush1.bf16.msra.mxu0 0
        %2530 = vmatprep.subr.bf16.mxu0 0
        %2531 = vmatpush1.bf16.msra.mxu0 %v2511
        %2532 = vmatprep.subr.bf16.mxu0 0
        %2533 = vmatpush2.bf16.msra.mxu0 0
        %2534 = vmatprep.subr.bf16.mxu0 0
        %2535 = vmatpush2.bf16.msra.mxu0 0
        %2536 = vmatprep.subr.bf16.mxu0 0
        %2537 = vmatpush2.bf16.msra.mxu0 0
        %2538 = vmatprep.subr.bf16.mxu0 0
        %2539 = vmatpush2.bf16.msra.mxu0 0
        %2540 = vmatprep.subr.bf16.mxu0 0
        %2541 = vmatpush2.bf16.msra.mxu0 0
        %2542 = vmatprep.subr.bf16.mxu0 0
        %2543 = vmatpush2.bf16.msra.mxu0 0
        %2544 = vmatprep.subr.bf16.mxu0 0
        %2545 = vmatpush2.bf16.msra.mxu0 0
        %2546 = vmatprep.subr.bf16.mxu0 0
        %2547 = vmatpush2.bf16.msra.mxu0 0
        %2548 = vmatprep.mubr.bf16.mxu0 0
        %2549 = vmatmul.mubr.bf16.gmra.mxu0 %v2514
        %v2550 = vpop.f32.mrf.mxu0
        %v2551 = vadd.f32 0.0, %v2550
        %v2552 = vpop.f32.mrf.mxu0
        %v2553 = vpop.f32.mrf.mxu0
        %v2554 = vadd.f32 0.0, %v2553
        %v2555 = vpop.f32.mrf.mxu0
        %2556 = vdwg.mxu0
        %v2557 = vadd.f32 %v2501, %v2551
        %v2558 = vadd.f32 %v2502, %v2554
        %v2559 = vpack.c.bf16 %v1721, %v1716
        %s2560 = scalar_lea.vmem %s3, 120
        %v2561 = vld [vmem:[%s2560] sm:$0xf]
        %v2562 = vld [vmem:[%s2560 + $0x4] sm:$0xf]
        %v2565 = vunpack.c.l.b16 %v2561
        %v2566 = vunpack.c.l.b16 %v2562
        %v2567 = vpack.c.b16 %v2566, %v2565
        %v2570 = vsel %vm1402, %v2559, 0
        %2572 = vmatprep.subr.bf16.mxu0 0
        %2573 = vmatpush1.bf16.msra.mxu0 0
        %2574 = vmatprep.subr.bf16.mxu0 0
        %2575 = vmatpush1.bf16.msra.mxu0 0
        %2576 = vmatprep.subr.bf16.mxu0 0
        %2577 = vmatpush1.bf16.msra.mxu0 0
        %2578 = vmatprep.subr.bf16.mxu0 0
        %2579 = vmatpush1.bf16.msra.mxu0 0
        %2580 = vmatprep.subr.bf16.mxu0 0
        %2581 = vmatpush1.bf16.msra.mxu0 0
        %2582 = vmatprep.subr.bf16.mxu0 0
        %2583 = vmatpush1.bf16.msra.mxu0 0
        %2584 = vmatprep.subr.bf16.mxu0 0
        %2585 = vmatpush1.bf16.msra.mxu0 0
        %2586 = vmatprep.subr.bf16.mxu0 0
        %2587 = vmatpush1.bf16.msra.mxu0 %v2567
        %2588 = vmatprep.subr.bf16.mxu0 0
        %2589 = vmatpush2.bf16.msra.mxu0 0
        %2590 = vmatprep.subr.bf16.mxu0 0
        %2591 = vmatpush2.bf16.msra.mxu0 0
        %2592 = vmatprep.subr.bf16.mxu0 0
        %2593 = vmatpush2.bf16.msra.mxu0 0
        %2594 = vmatprep.subr.bf16.mxu0 0
        %2595 = vmatpush2.bf16.msra.mxu0 0
        %2596 = vmatprep.subr.bf16.mxu0 0
        %2597 = vmatpush2.bf16.msra.mxu0 0
        %2598 = vmatprep.subr.bf16.mxu0 0
        %2599 = vmatpush2.bf16.msra.mxu0 0
        %2600 = vmatprep.subr.bf16.mxu0 0
        %2601 = vmatpush2.bf16.msra.mxu0 0
        %2602 = vmatprep.subr.bf16.mxu0 0
        %2603 = vmatpush2.bf16.msra.mxu0 0
        %2604 = vmatprep.mubr.bf16.mxu0 0
        %2605 = vmatmul.mubr.bf16.gmra.mxu0 %v2570
        %v2606 = vpop.f32.mrf.mxu0
        %v2607 = vadd.f32 0.0, %v2606
        %v2608 = vpop.f32.mrf.mxu0
        %v2609 = vpop.f32.mrf.mxu0
        %v2610 = vadd.f32 0.0, %v2609
        %v2611 = vpop.f32.mrf.mxu0
        %2612 = vdwg.mxu0
        %v2613 = vadd.f32 %v2557, %v2607
        %v2614 = vadd.f32 %v2558, %v2610
        %v2615 = vld [vmem:[#allocation8 + $0x150] sm:$0xff]
        %v2616 = vld [vmem:[#allocation8 + $0x158] sm:$0xff]
        %2618 = vset.pattern.permute.xlu0 0
        %2619 = vperm.xlu0 %2618, %v2615
        %v2620 = vpop.permute.xlu0 %2619
        %2623 = vset.pattern.permute.xlu0 0
        %2624 = vperm.xlu0 %2623, %v2616
        %v2625 = vpop.permute.xlu0 %2624
        %v2627 = vadd.f32 %v2613, %v2620
        %v2628 = vadd.f32 %v2614, %v2625
        %v2629 = vmax.f32 %v2627, 0.0
        %v2630 = vmax.f32 %v2628, 0.0
        %v2631 = vld [vmem:[#allocation8 + $0x160] sm:$0xff]
        %v2632 = vld [vmem:[#allocation8 + $0x168] sm:$0xff]
        %2634 = vset.pattern.permute.xlu0 0
        %2635 = vperm.xlu0 %2634, %v2632
        %v2636 = vpop.permute.xlu0 %2635
        %v2639 = vsel %vm1402, %v2631, 0
        %2641 = vmatprep.subr.mxu0 0.0
        %2642 = vmatpush1.msra.mxu0 0.0
        %2643 = vmatprep.subr.mxu0 0.0
        %2644 = vmatpush1.msra.mxu0 0.0
        %2645 = vmatprep.subr.mxu0 0.0
        %2646 = vmatpush1.msra.mxu0 0.0
        %2647 = vmatprep.subr.mxu0 0.0
        %2648 = vmatpush1.msra.mxu0 0.0
        %2649 = vmatprep.subr.mxu0 0.0
        %2650 = vmatpush1.msra.mxu0 0.0
        %2651 = vmatprep.subr.mxu0 0.0
        %2652 = vmatpush1.msra.mxu0 0.0
        %2653 = vmatprep.subr.mxu0 0.0
        %2654 = vmatpush1.msra.mxu0 0.0
        %2655 = vmatprep.subr.mxu0 0.0
        %2656 = vmatpush1.msra.mxu0 0.0
        %2657 = vmatprep.subr.mxu0 0.0
        %2658 = vmatpush1.msra.mxu0 0.0
        %2659 = vmatprep.subr.mxu0 0.0
        %2660 = vmatpush1.msra.mxu0 0.0
        %2661 = vmatprep.subr.mxu0 0.0
        %2662 = vmatpush1.msra.mxu0 0.0
        %2663 = vmatprep.subr.mxu0 0.0
        %2664 = vmatpush1.msra.mxu0 0.0
        %2665 = vmatprep.subr.mxu0 0.0
        %2666 = vmatpush1.msra.mxu0 0.0
        %2667 = vmatprep.subr.mxu0 0.0
        %2668 = vmatpush1.msra.mxu0 0.0
        %2669 = vmatprep.subr.mxu0 0.0
        %2670 = vmatpush1.msra.mxu0 %v2630
        %2671 = vmatprep.subr.mxu0 0.0
        %2672 = vmatpush1.msra.mxu0 %v2629
        %2673 = vmatprep.subr.mxu0 0.0
        %2674 = vmatpush2.msra.mxu0 0.0
        %2675 = vmatprep.subr.mxu0 0.0
        %2676 = vmatpush2.msra.mxu0 0.0
        %2677 = vmatprep.subr.mxu0 0.0
        %2678 = vmatpush2.msra.mxu0 0.0
        %2679 = vmatprep.subr.mxu0 0.0
        %2680 = vmatpush2.msra.mxu0 0.0
        %2681 = vmatprep.subr.mxu0 0.0
        %2682 = vmatpush2.msra.mxu0 0.0
        %2683 = vmatprep.subr.mxu0 0.0
        %2684 = vmatpush2.msra.mxu0 0.0
        %2685 = vmatprep.subr.mxu0 0.0
        %2686 = vmatpush2.msra.mxu0 0.0
        %2687 = vmatprep.subr.mxu0 0.0
        %2688 = vmatpush2.msra.mxu0 0.0
        %2689 = vmatprep.subr.mxu0 0.0
        %2690 = vmatpush2.msra.mxu0 0.0
        %2691 = vmatprep.subr.mxu0 0.0
        %2692 = vmatpush2.msra.mxu0 0.0
        %2693 = vmatprep.subr.mxu0 0.0
        %2694 = vmatpush2.msra.mxu0 0.0
        %2695 = vmatprep.subr.mxu0 0.0
        %2696 = vmatpush2.msra.mxu0 0.0
        %2697 = vmatprep.subr.mxu0 0.0
        %2698 = vmatpush2.msra.mxu0 0.0
        %2699 = vmatprep.subr.mxu0 0.0
        %2700 = vmatpush2.msra.mxu0 0.0
        %2701 = vmatprep.subr.mxu0 0.0
        %2702 = vmatpush2.msra.mxu0 0.0
        %2703 = vmatprep.subr.mxu0 0.0
        %2704 = vmatpush2.msra.mxu0 0.0
        %2705 = vmatprep.mubr.f32.mxu0 0.0
        %2706 = vmatmul.mubr.f32.gmra.mxu0 %v2639
        %v2707 = vpop.f32.mrf.mxu0
        %v2708 = vadd.f32 %v2636, %v2707
        %v2709 = vpop.f32.mrf.mxu0
        %2710 = vdwg.mxu0
        %v2711 = vmax.f32 %v2708, 0.0
        %v2712 = vld [vmem:[#allocation8 + $0x170] sm:$0xff]
        %v2713 = vld [vmem:[#allocation8 + $0x178] sm:$0xff]
        %2715 = vset.pattern.permute.xlu0 0
        %2716 = vperm.xlu0 %2715, %v2713
        %v2717 = vpop.permute.xlu0 %2716
        %v2720 = vsel %vm1286, %v2712, 0
        %2722 = vmatprep.subr.mxu0 0.0
        %2723 = vmatpush1.msra.mxu0 0.0
        %2724 = vmatprep.subr.mxu0 0.0
        %2725 = vmatpush1.msra.mxu0 0.0
        %2726 = vmatprep.subr.mxu0 0.0
        %2727 = vmatpush1.msra.mxu0 0.0
        %2728 = vmatprep.subr.mxu0 0.0
        %2729 = vmatpush1.msra.mxu0 0.0
        %2730 = vmatprep.subr.mxu0 0.0
        %2731 = vmatpush1.msra.mxu0 0.0
        %2732 = vmatprep.subr.mxu0 0.0
        %2733 = vmatpush1.msra.mxu0 0.0
        %2734 = vmatprep.subr.mxu0 0.0
        %2735 = vmatpush1.msra.mxu0 0.0
        %2736 = vmatprep.subr.mxu0 0.0
        %2737 = vmatpush1.msra.mxu0 0.0
        %2738 = vmatprep.subr.mxu0 0.0
        %2739 = vmatpush1.msra.mxu0 0.0
        %2740 = vmatprep.subr.mxu0 0.0
        %2741 = vmatpush1.msra.mxu0 0.0
        %2742 = vmatprep.subr.mxu0 0.0
        %2743 = vmatpush1.msra.mxu0 0.0
        %2744 = vmatprep.subr.mxu0 0.0
        %2745 = vmatpush1.msra.mxu0 0.0
        %2746 = vmatprep.subr.mxu0 0.0
        %2747 = vmatpush1.msra.mxu0 0.0
        %2748 = vmatprep.subr.mxu0 0.0
        %2749 = vmatpush1.msra.mxu0 0.0
        %2750 = vmatprep.subr.mxu0 0.0
        %2751 = vmatpush1.msra.mxu0 0.0
        %2752 = vmatprep.subr.mxu0 0.0
        %2753 = vmatpush1.msra.mxu0 %v1086
        %2754 = vmatprep.subr.mxu0 0.0
        %2755 = vmatpush2.msra.mxu0 0.0
        %2756 = vmatprep.subr.mxu0 0.0
        %2757 = vmatpush2.msra.mxu0 0.0
        %2758 = vmatprep.subr.mxu0 0.0
        %2759 = vmatpush2.msra.mxu0 0.0
        %2760 = vmatprep.subr.mxu0 0.0
        %2761 = vmatpush2.msra.mxu0 0.0
        %2762 = vmatprep.subr.mxu0 0.0
        %2763 = vmatpush2.msra.mxu0 0.0
        %2764 = vmatprep.subr.mxu0 0.0
        %2765 = vmatpush2.msra.mxu0 0.0
        %2766 = vmatprep.subr.mxu0 0.0
        %2767 = vmatpush2.msra.mxu0 0.0
        %2768 = vmatprep.subr.mxu0 0.0
        %2769 = vmatpush2.msra.mxu0 0.0
        %2770 = vmatprep.subr.mxu0 0.0
        %2771 = vmatpush2.msra.mxu0 0.0
        %2772 = vmatprep.subr.mxu0 0.0
        %2773 = vmatpush2.msra.mxu0 0.0
        %2774 = vmatprep.subr.mxu0 0.0
        %2775 = vmatpush2.msra.mxu0 0.0
        %2776 = vmatprep.subr.mxu0 0.0
        %2777 = vmatpush2.msra.mxu0 0.0
        %2778 = vmatprep.subr.mxu0 0.0
        %2779 = vmatpush2.msra.mxu0 0.0
        %2780 = vmatprep.subr.mxu0 0.0
        %2781 = vmatpush2.msra.mxu0 0.0
        %2782 = vmatprep.subr.mxu0 0.0
        %2783 = vmatpush2.msra.mxu0 0.0
        %2784 = vmatprep.subr.mxu0 0.0
        %2785 = vmatpush2.msra.mxu0 0.0
        %2786 = vmatprep.mubr.f32.mxu0 0.0
        %2787 = vmatmul.mubr.f32.gmra.mxu0 %v2720
        %v2788 = vpop.f32.mrf.mxu0
        %v2789 = vadd.f32 %v2717, %v2788
        %v2790 = vpop.f32.mrf.mxu0
        %2791 = vdwg.mxu0
        %v2792 = vmax.f32 %v2789, 0.0
        %v2793 = vadd.f32 %v2792, %v2711
        %s2794 = smul.u32 4, 16
        %s2795 = smul.u32 %s2794, 8
        %s2796 = smul.u32 %s2795, 2
        %s2797 = sshll.u32 %s2796, 4
        %2798 = dma.done [#allocation3], %s2797
        %v2799 = vld [vmem:[#allocation8 + $0x180] sm:$0xff]
        %v2800 = vld [vmem:[#allocation8 + $0x188] sm:$0xff]
        %v2801 = vld [vmem:[#allocation8 + $0x190] sm:$0xff]
        %v2802 = vld [vmem:[#allocation8 + $0x198] sm:$0xff]
        %v2803 = vld [vmem:[#allocation8 + $0x1a0] sm:$0xff]
        %v2804 = vld [vmem:[#allocation8 + $0x1a8] sm:$0xff]
        %v2805 = vld [vmem:[#allocation8 + $0x1b0] sm:$0xff]
        %v2806 = vld [vmem:[#allocation8 + $0x1b8] sm:$0xff]
        %v2807 = vld [vmem:[#allocation8 + $0x1c0] sm:$0xff]
        %v2808 = vld [vmem:[#allocation8 + $0x1c8] sm:$0xff]
        %v2809 = vld [vmem:[#allocation8 + $0x1d0] sm:$0xff]
        %v2810 = vld [vmem:[#allocation8 + $0x1d8] sm:$0xff]
        %v2811 = vld [vmem:[#allocation8 + $0x1e0] sm:$0xff]
        %v2812 = vld [vmem:[#allocation8 + $0x1e8] sm:$0xff]
        %v2813 = vld [vmem:[#allocation8 + $0x1f0] sm:$0xff]
        %v2814 = vld [vmem:[#allocation8 + $0x1f8] sm:$0xff]
        %v2816 = vsel %vm1286, %v2799, 0
        %v2819 = vsel %vm1286, %v2800, 0
        %v2822 = vsel %vm1286, %v2801, 0
        %v2825 = vsel %vm1286, %v2802, 0
        %v2828 = vsel %vm1286, %v2803, 0
        %v2831 = vsel %vm1286, %v2804, 0
        %v2834 = vsel %vm1286, %v2805, 0
        %v2837 = vsel %vm1286, %v2806, 0
        %v2840 = vsel %vm1286, %v2807, 0
        %v2843 = vsel %vm1286, %v2808, 0
        %v2846 = vsel %vm1286, %v2809, 0
        %v2849 = vsel %vm1286, %v2810, 0
        %v2852 = vsel %vm1286, %v2811, 0
        %v2855 = vsel %vm1286, %v2812, 0
        %v2858 = vsel %vm1286, %v2813, 0
        %v2861 = vsel %vm1286, %v2814, 0
        %2863 = vmatprep.subr.mxu0 0.0
        %2864 = vmatpush1.msra.mxu0 0.0
        %2865 = vmatprep.subr.mxu0 0.0
        %2866 = vmatpush1.msra.mxu0 0.0
        %2867 = vmatprep.subr.mxu0 0.0
        %2868 = vmatpush1.msra.mxu0 0.0
        %2869 = vmatprep.subr.mxu0 0.0
        %2870 = vmatpush1.msra.mxu0 0.0
        %2871 = vmatprep.subr.mxu0 0.0
        %2872 = vmatpush1.msra.mxu0 0.0
        %2873 = vmatprep.subr.mxu0 0.0
        %2874 = vmatpush1.msra.mxu0 0.0
        %2875 = vmatprep.subr.mxu0 0.0
        %2876 = vmatpush1.msra.mxu0 0.0
        %2877 = vmatprep.subr.mxu0 0.0
        %2878 = vmatpush1.msra.mxu0 0.0
        %2879 = vmatprep.subr.mxu0 0.0
        %2880 = vmatpush1.msra.mxu0 0.0
        %2881 = vmatprep.subr.mxu0 0.0
        %2882 = vmatpush1.msra.mxu0 0.0
        %2883 = vmatprep.subr.mxu0 0.0
        %2884 = vmatpush1.msra.mxu0 0.0
        %2885 = vmatprep.subr.mxu0 0.0
        %2886 = vmatpush1.msra.mxu0 0.0
        %2887 = vmatprep.subr.mxu0 0.0
        %2888 = vmatpush1.msra.mxu0 0.0
        %2889 = vmatprep.subr.mxu0 0.0
        %2890 = vmatpush1.msra.mxu0 0.0
        %2891 = vmatprep.subr.mxu0 0.0
        %2892 = vmatpush1.msra.mxu0 0.0
        %2893 = vmatprep.subr.mxu0 0.0
        %2894 = vmatpush1.msra.mxu0 %v2793
        %2895 = vmatprep.subr.mxu0 0.0
        %2896 = vmatpush2.msra.mxu0 0.0
        %2897 = vmatprep.subr.mxu0 0.0
        %2898 = vmatpush2.msra.mxu0 0.0
        %2899 = vmatprep.subr.mxu0 0.0
        %2900 = vmatpush2.msra.mxu0 0.0
        %2901 = vmatprep.subr.mxu0 0.0
        %2902 = vmatpush2.msra.mxu0 0.0
        %2903 = vmatprep.subr.mxu0 0.0
        %2904 = vmatpush2.msra.mxu0 0.0
        %2905 = vmatprep.subr.mxu0 0.0
        %2906 = vmatpush2.msra.mxu0 0.0
        %2907 = vmatprep.subr.mxu0 0.0
        %2908 = vmatpush2.msra.mxu0 0.0
        %2909 = vmatprep.subr.mxu0 0.0
        %2910 = vmatpush2.msra.mxu0 0.0
        %2911 = vmatprep.subr.mxu0 0.0
        %2912 = vmatpush2.msra.mxu0 0.0
        %2913 = vmatprep.subr.mxu0 0.0
        %2914 = vmatpush2.msra.mxu0 0.0
        %2915 = vmatprep.subr.mxu0 0.0
        %2916 = vmatpush2.msra.mxu0 0.0
        %2917 = vmatprep.subr.mxu0 0.0
        %2918 = vmatpush2.msra.mxu0 0.0
        %2919 = vmatprep.subr.mxu0 0.0
        %2920 = vmatpush2.msra.mxu0 0.0
        %2921 = vmatprep.subr.mxu0 0.0
        %2922 = vmatpush2.msra.mxu0 0.0
        %2923 = vmatprep.subr.mxu0 0.0
        %2924 = vmatpush2.msra.mxu0 0.0
        %2925 = vmatprep.subr.mxu0 0.0
        %2926 = vmatpush2.msra.mxu0 0.0
        %2927 = vmatprep.mubr.f32.mxu0 0.0
        %2928 = vmatmul.mubr.f32.gmra.mxu0 %v2816
        %v2929 = vpop.f32.mrf.mxu0
        %v2930 = vadd.f32 0.0, %v2929
        %v2931 = vpop.f32.mrf.mxu0
        %2932 = vmatprep.mubr.f32.mxu0 0.0
        %2933 = vmatmul.mubr.f32.gmra.mxu0 %v2819
        %v2934 = vpop.f32.mrf.mxu0
        %v2935 = vadd.f32 0.0, %v2934
        %v2936 = vpop.f32.mrf.mxu0
        %2937 = vmatprep.mubr.f32.mxu0 0.0
        %2938 = vmatmul.mubr.f32.gmra.mxu0 %v2822
        %v2939 = vpop.f32.mrf.mxu0
        %v2940 = vadd.f32 0.0, %v2939
        %v2941 = vpop.f32.mrf.mxu0
        %2942 = vmatprep.mubr.f32.mxu0 0.0
        %2943 = vmatmul.mubr.f32.gmra.mxu0 %v2825
        %v2944 = vpop.f32.mrf.mxu0
        %v2945 = vadd.f32 0.0, %v2944
        %v2946 = vpop.f32.mrf.mxu0
        %2947 = vmatprep.mubr.f32.mxu0 0.0
        %2948 = vmatmul.mubr.f32.gmra.mxu0 %v2828
        %v2949 = vpop.f32.mrf.mxu0
        %v2950 = vadd.f32 0.0, %v2949
        %v2951 = vpop.f32.mrf.mxu0
        %2952 = vmatprep.mubr.f32.mxu0 0.0
        %2953 = vmatmul.mubr.f32.gmra.mxu0 %v2831
        %v2954 = vpop.f32.mrf.mxu0
        %v2955 = vadd.f32 0.0, %v2954
        %v2956 = vpop.f32.mrf.mxu0
        %2957 = vmatprep.mubr.f32.mxu0 0.0
        %2958 = vmatmul.mubr.f32.gmra.mxu0 %v2834
        %v2959 = vpop.f32.mrf.mxu0
        %v2960 = vadd.f32 0.0, %v2959
        %v2961 = vpop.f32.mrf.mxu0
        %2962 = vmatprep.mubr.f32.mxu0 0.0
        %2963 = vmatmul.mubr.f32.gmra.mxu0 %v2837
        %v2964 = vpop.f32.mrf.mxu0
        %v2965 = vadd.f32 0.0, %v2964
        %v2966 = vpop.f32.mrf.mxu0
        %2967 = vmatprep.mubr.f32.mxu0 0.0
        %2968 = vmatmul.mubr.f32.gmra.mxu0 %v2840
        %v2969 = vpop.f32.mrf.mxu0
        %v2970 = vadd.f32 0.0, %v2969
        %v2971 = vpop.f32.mrf.mxu0
        %2972 = vmatprep.mubr.f32.mxu0 0.0
        %2973 = vmatmul.mubr.f32.gmra.mxu0 %v2843
        %v2974 = vpop.f32.mrf.mxu0
        %v2975 = vadd.f32 0.0, %v2974
        %v2976 = vpop.f32.mrf.mxu0
        %2977 = vmatprep.mubr.f32.mxu0 0.0
        %2978 = vmatmul.mubr.f32.gmra.mxu0 %v2846
        %v2979 = vpop.f32.mrf.mxu0
        %v2980 = vadd.f32 0.0, %v2979
        %v2981 = vpop.f32.mrf.mxu0
        %2982 = vmatprep.mubr.f32.mxu0 0.0
        %2983 = vmatmul.mubr.f32.gmra.mxu0 %v2849
        %v2984 = vpop.f32.mrf.mxu0
        %v2985 = vadd.f32 0.0, %v2984
        %v2986 = vpop.f32.mrf.mxu0
        %2987 = vmatprep.mubr.f32.mxu0 0.0
        %2988 = vmatmul.mubr.f32.gmra.mxu0 %v2852
        %v2989 = vpop.f32.mrf.mxu0
        %v2990 = vadd.f32 0.0, %v2989
        %v2991 = vpop.f32.mrf.mxu0
        %2992 = vmatprep.mubr.f32.mxu0 0.0
        %2993 = vmatmul.mubr.f32.gmra.mxu0 %v2855
        %v2994 = vpop.f32.mrf.mxu0
        %v2995 = vadd.f32 0.0, %v2994
        %v2996 = vpop.f32.mrf.mxu0
        %2997 = vmatprep.mubr.f32.mxu0 0.0
        %2998 = vmatmul.mubr.f32.gmra.mxu0 %v2858
        %v2999 = vpop.f32.mrf.mxu0
        %v3000 = vadd.f32 0.0, %v2999
        %v3001 = vpop.f32.mrf.mxu0
        %3002 = vmatprep.mubr.f32.mxu0 0.0
        %3003 = vmatmul.mubr.f32.gmra.mxu0 %v2861
        %v3004 = vpop.f32.mrf.mxu0
        %v3005 = vadd.f32 0.0, %v3004
        %v3006 = vpop.f32.mrf.mxu0
        %3007 = vdwg.mxu0
        %v3008 = vpack.c.bf16 %v2930, %v2930
        %v3009 = vld [vmem:[#allocation2] sm:$0xff]
        %v3010 = vld [vmem:[#allocation2 + $0x8] sm:$0xff]
        %v3011 = vld [vmem:[#allocation2 + $0x10] sm:$0xff]
        %v3012 = vld [vmem:[#allocation2 + $0x18] sm:$0xff]
        %v3013 = vld [vmem:[#allocation2 + $0x20] sm:$0xff]
        %v3014 = vld [vmem:[#allocation2 + $0x28] sm:$0xff]
        %v3015 = vld [vmem:[#allocation2 + $0x30] sm:$0xff]
        %v3016 = vld [vmem:[#allocation2 + $0x38] sm:$0xff]
        %v3017 = vpack.c.bf16 %v2935, %v2935
        %s3018 = scalar_lea.vmem [#allocation2], 64
        %v3019 = vld [vmem:[%s3018] sm:$0xff]
        %v3020 = vld [vmem:[%s3018 + $0x8] sm:$0xff]
        %v3021 = vld [vmem:[%s3018 + $0x10] sm:$0xff]
        %v3022 = vld [vmem:[%s3018 + $0x18] sm:$0xff]
        %v3023 = vld [vmem:[%s3018 + $0x20] sm:$0xff]
        %v3024 = vld [vmem:[%s3018 + $0x28] sm:$0xff]
        %v3025 = vld [vmem:[%s3018 + $0x30] sm:$0xff]
        %v3026 = vld [vmem:[%s3018 + $0x38] sm:$0xff]
        %v3035 = vunpack.c.l.b16 %v3019
        %v3036 = vunpack.c.h.b16 %v3019
        %v3037 = vunpack.c.l.b16 %v3020
        %v3038 = vunpack.c.h.b16 %v3020
        %v3039 = vunpack.c.l.b16 %v3021
        %v3040 = vunpack.c.h.b16 %v3021
        %v3041 = vunpack.c.l.b16 %v3022
        %v3042 = vunpack.c.h.b16 %v3022
        %v3043 = vunpack.c.l.b16 %v3023
        %v3044 = vunpack.c.h.b16 %v3023
        %v3045 = vunpack.c.l.b16 %v3024
        %v3046 = vunpack.c.h.b16 %v3024
        %v3047 = vunpack.c.l.b16 %v3025
        %v3048 = vunpack.c.h.b16 %v3025
        %v3049 = vunpack.c.l.b16 %v3026
        %v3050 = vunpack.c.h.b16 %v3026
        %v3051 = vpack.c.b16 %v3037, %v3035
        %v3052 = vpack.c.b16 %v3038, %v3036
        %v3053 = vpack.c.b16 %v3041, %v3039
        %v3054 = vpack.c.b16 %v3042, %v3040
        %v3055 = vpack.c.b16 %v3045, %v3043
        %v3056 = vpack.c.b16 %v3046, %v3044
        %v3057 = vpack.c.b16 %v3049, %v3047
        %v3058 = vpack.c.b16 %v3050, %v3048
        %v3068 = vsel %vm1136, %v3017, 0
        %3070 = vmatprep.subr.bf16.mxu0 0
        %3071 = vmatpush1.bf16.msra.mxu0 0
        %3072 = vmatprep.subr.bf16.mxu0 0
        %3073 = vmatpush1.bf16.msra.mxu0 0
        %3074 = vmatprep.subr.bf16.mxu0 0
        %3075 = vmatpush1.bf16.msra.mxu0 0
        %3076 = vmatprep.subr.bf16.mxu0 0
        %3077 = vmatpush1.bf16.msra.mxu0 0
        %3078 = vmatprep.subr.bf16.mxu0 %v3058
        %3079 = vmatpush1.bf16.msra.mxu0 %v3057
        %3080 = vmatprep.subr.bf16.mxu0 %v3056
        %3081 = vmatpush1.bf16.msra.mxu0 %v3055
        %3082 = vmatprep.subr.bf16.mxu0 %v3054
        %3083 = vmatpush1.bf16.msra.mxu0 %v3053
        %3084 = vmatprep.subr.bf16.mxu0 %v3052
        %3085 = vmatpush1.bf16.msra.mxu0 %v3051
        %3086 = vmatprep.subr.bf16.mxu0 0
        %3087 = vmatpush2.bf16.msra.mxu0 0
        %3088 = vmatprep.subr.bf16.mxu0 0
        %3089 = vmatpush2.bf16.msra.mxu0 0
        %3090 = vmatprep.subr.bf16.mxu0 0
        %3091 = vmatpush2.bf16.msra.mxu0 0
        %3092 = vmatprep.subr.bf16.mxu0 0
        %3093 = vmatpush2.bf16.msra.mxu0 0
        %3094 = vmatprep.subr.bf16.mxu0 0
        %3095 = vmatpush2.bf16.msra.mxu0 0
        %3096 = vmatprep.subr.bf16.mxu0 0
        %3097 = vmatpush2.bf16.msra.mxu0 0
        %3098 = vmatprep.subr.bf16.mxu0 0
        %3099 = vmatpush2.bf16.msra.mxu0 0
        %3100 = vmatprep.subr.bf16.mxu0 0
        %3101 = vmatpush2.bf16.msra.mxu0 0
        %3102 = vmatprep.mubr.bf16.mxu0 0
        %3103 = vmatmul.mubr.bf16.gmra.mxu0 %v3068
        %v3104 = vpop.f32.mrf.mxu0
        %v3105 = vadd.f32 0.0, %v3104
        %v3106 = vpop.f32.mrf.mxu0
        %v3107 = vadd.f32 0.0, %v3106
        %v3108 = vpop.f32.mrf.mxu0
        %v3109 = vpop.f32.mrf.mxu0
        %3110 = vdwg.mxu0
        %v3119 = vunpack.c.l.b16 %v3009
        %v3120 = vunpack.c.h.b16 %v3009
        %v3121 = vunpack.c.l.b16 %v3010
        %v3122 = vunpack.c.h.b16 %v3010
        %v3123 = vunpack.c.l.b16 %v3011
        %v3124 = vunpack.c.h.b16 %v3011
        %v3125 = vunpack.c.l.b16 %v3012
        %v3126 = vunpack.c.h.b16 %v3012
        %v3127 = vunpack.c.l.b16 %v3013
        %v3128 = vunpack.c.h.b16 %v3013
        %v3129 = vunpack.c.l.b16 %v3014
        %v3130 = vunpack.c.h.b16 %v3014
        %v3131 = vunpack.c.l.b16 %v3015
        %v3132 = vunpack.c.h.b16 %v3015
        %v3133 = vunpack.c.l.b16 %v3016
        %v3134 = vunpack.c.h.b16 %v3016
        %v3135 = vpack.c.b16 %v3121, %v3119
        %v3136 = vpack.c.b16 %v3122, %v3120
        %v3137 = vpack.c.b16 %v3125, %v3123
        %v3138 = vpack.c.b16 %v3126, %v3124
        %v3139 = vpack.c.b16 %v3129, %v3127
        %v3140 = vpack.c.b16 %v3130, %v3128
        %v3141 = vpack.c.b16 %v3133, %v3131
        %v3142 = vpack.c.b16 %v3134, %v3132
        %v3152 = vsel %vm1136, %v3008, 0
        %3154 = vmatprep.subr.bf16.mxu0 0
        %3155 = vmatpush1.bf16.msra.mxu0 0
        %3156 = vmatprep.subr.bf16.mxu0 0
        %3157 = vmatpush1.bf16.msra.mxu0 0
        %3158 = vmatprep.subr.bf16.mxu0 0
        %3159 = vmatpush1.bf16.msra.mxu0 0
        %3160 = vmatprep.subr.bf16.mxu0 0
        %3161 = vmatpush1.bf16.msra.mxu0 0
        %3162 = vmatprep.subr.bf16.mxu0 %v3142
        %3163 = vmatpush1.bf16.msra.mxu0 %v3141
        %3164 = vmatprep.subr.bf16.mxu0 %v3140
        %3165 = vmatpush1.bf16.msra.mxu0 %v3139
        %3166 = vmatprep.subr.bf16.mxu0 %v3138
        %3167 = vmatpush1.bf16.msra.mxu0 %v3137
        %3168 = vmatprep.subr.bf16.mxu0 %v3136
        %3169 = vmatpush1.bf16.msra.mxu0 %v3135
        %3170 = vmatprep.subr.bf16.mxu0 0
        %3171 = vmatpush2.bf16.msra.mxu0 0
        %3172 = vmatprep.subr.bf16.mxu0 0
        %3173 = vmatpush2.bf16.msra.mxu0 0
        %3174 = vmatprep.subr.bf16.mxu0 0
        %3175 = vmatpush2.bf16.msra.mxu0 0
        %3176 = vmatprep.subr.bf16.mxu0 0
        %3177 = vmatpush2.bf16.msra.mxu0 0
        %3178 = vmatprep.subr.bf16.mxu0 0
        %3179 = vmatpush2.bf16.msra.mxu0 0
        %3180 = vmatprep.subr.bf16.mxu0 0
        %3181 = vmatpush2.bf16.msra.mxu0 0
        %3182 = vmatprep.subr.bf16.mxu0 0
        %3183 = vmatpush2.bf16.msra.mxu0 0
        %3184 = vmatprep.subr.bf16.mxu0 0
        %3185 = vmatpush2.bf16.msra.mxu0 0
        %3186 = vmatprep.mubr.bf16.mxu0 0
        %3187 = vmatmul.mubr.bf16.gmra.mxu0 %v3152
        %v3188 = vpop.f32.mrf.mxu0
        %v3189 = vadd.f32 %v3105, %v3188
        %v3190 = vpop.f32.mrf.mxu0
        %v3191 = vadd.f32 %v3107, %v3190
        %v3192 = vpop.f32.mrf.mxu0
        %v3193 = vpop.f32.mrf.mxu0
        %3194 = vdwg.mxu0
        %v3195 = vpack.c.bf16 %v2940, %v2940
        %s3196 = scalar_lea.vmem [#allocation2], 128
        %v3197 = vld [vmem:[%s3196] sm:$0xff]
        %v3198 = vld [vmem:[%s3196 + $0x8] sm:$0xff]
        %v3199 = vld [vmem:[%s3196 + $0x10] sm:$0xff]
        %v3200 = vld [vmem:[%s3196 + $0x18] sm:$0xff]
        %v3201 = vld [vmem:[%s3196 + $0x20] sm:$0xff]
        %v3202 = vld [vmem:[%s3196 + $0x28] sm:$0xff]
        %v3203 = vld [vmem:[%s3196 + $0x30] sm:$0xff]
        %v3204 = vld [vmem:[%s3196 + $0x38] sm:$0xff]
        %v3213 = vunpack.c.l.b16 %v3197
        %v3214 = vunpack.c.h.b16 %v3197
        %v3215 = vunpack.c.l.b16 %v3198
        %v3216 = vunpack.c.h.b16 %v3198
        %v3217 = vunpack.c.l.b16 %v3199
        %v3218 = vunpack.c.h.b16 %v3199
        %v3219 = vunpack.c.l.b16 %v3200
        %v3220 = vunpack.c.h.b16 %v3200
        %v3221 = vunpack.c.l.b16 %v3201
        %v3222 = vunpack.c.h.b16 %v3201
        %v3223 = vunpack.c.l.b16 %v3202
        %v3224 = vunpack.c.h.b16 %v3202
        %v3225 = vunpack.c.l.b16 %v3203
        %v3226 = vunpack.c.h.b16 %v3203
        %v3227 = vunpack.c.l.b16 %v3204
        %v3228 = vunpack.c.h.b16 %v3204
        %v3229 = vpack.c.b16 %v3215, %v3213
        %v3230 = vpack.c.b16 %v3216, %v3214
        %v3231 = vpack.c.b16 %v3219, %v3217
        %v3232 = vpack.c.b16 %v3220, %v3218
        %v3233 = vpack.c.b16 %v3223, %v3221
        %v3234 = vpack.c.b16 %v3224, %v3222
        %v3235 = vpack.c.b16 %v3227, %v3225
        %v3236 = vpack.c.b16 %v3228, %v3226
        %v3246 = vsel %vm1136, %v3195, 0
        %3248 = vmatprep.subr.bf16.mxu0 0
        %3249 = vmatpush1.bf16.msra.mxu0 0
        %3250 = vmatprep.subr.bf16.mxu0 0
        %3251 = vmatpush1.bf16.msra.mxu0 0
        %3252 = vmatprep.subr.bf16.mxu0 0
        %3253 = vmatpush1.bf16.msra.mxu0 0
        %3254 = vmatprep.subr.bf16.mxu0 0
        %3255 = vmatpush1.bf16.msra.mxu0 0
        %3256 = vmatprep.subr.bf16.mxu0 %v3236
        %3257 = vmatpush1.bf16.msra.mxu0 %v3235
        %3258 = vmatprep.subr.bf16.mxu0 %v3234
        %3259 = vmatpush1.bf16.msra.mxu0 %v3233
        %3260 = vmatprep.subr.bf16.mxu0 %v3232
        %3261 = vmatpush1.bf16.msra.mxu0 %v3231
        %3262 = vmatprep.subr.bf16.mxu0 %v3230
        %3263 = vmatpush1.bf16.msra.mxu0 %v3229
        %3264 = vmatprep.subr.bf16.mxu0 0
        %3265 = vmatpush2.bf16.msra.mxu0 0
        %3266 = vmatprep.subr.bf16.mxu0 0
        %3267 = vmatpush2.bf16.msra.mxu0 0
        %3268 = vmatprep.subr.bf16.mxu0 0
        %3269 = vmatpush2.bf16.msra.mxu0 0
        %3270 = vmatprep.subr.bf16.mxu0 0
        %3271 = vmatpush2.bf16.msra.mxu0 0
        %3272 = vmatprep.subr.bf16.mxu0 0
        %3273 = vmatpush2.bf16.msra.mxu0 0
        %3274 = vmatprep.subr.bf16.mxu0 0
        %3275 = vmatpush2.bf16.msra.mxu0 0
        %3276 = vmatprep.subr.bf16.mxu0 0
        %3277 = vmatpush2.bf16.msra.mxu0 0
        %3278 = vmatprep.subr.bf16.mxu0 0
        %3279 = vmatpush2.bf16.msra.mxu0 0
        %3280 = vmatprep.mubr.bf16.mxu0 0
        %3281 = vmatmul.mubr.bf16.gmra.mxu0 %v3246
        %v3282 = vpop.f32.mrf.mxu0
        %v3283 = vadd.f32 0.0, %v3282
        %v3284 = vpop.f32.mrf.mxu0
        %v3285 = vadd.f32 0.0, %v3284
        %v3286 = vpop.f32.mrf.mxu0
        %v3287 = vpop.f32.mrf.mxu0
        %3288 = vdwg.mxu0
        %v3289 = vadd.f32 %v3189, %v3283
        %v3290 = vadd.f32 %v3191, %v3285
        %v3291 = vpack.c.bf16 %v2945, %v2945
        %s3292 = scalar_lea.vmem [#allocation2], 192
        %v3293 = vld [vmem:[%s3292] sm:$0xff]
        %v3294 = vld [vmem:[%s3292 + $0x8] sm:$0xff]
        %v3295 = vld [vmem:[%s3292 + $0x10] sm:$0xff]
        %v3296 = vld [vmem:[%s3292 + $0x18] sm:$0xff]
        %v3297 = vld [vmem:[%s3292 + $0x20] sm:$0xff]
        %v3298 = vld [vmem:[%s3292 + $0x28] sm:$0xff]
        %v3299 = vld [vmem:[%s3292 + $0x30] sm:$0xff]
        %v3300 = vld [vmem:[%s3292 + $0x38] sm:$0xff]
        %v3309 = vunpack.c.l.b16 %v3293
        %v3310 = vunpack.c.h.b16 %v3293
        %v3311 = vunpack.c.l.b16 %v3294
        %v3312 = vunpack.c.h.b16 %v3294
        %v3313 = vunpack.c.l.b16 %v3295
        %v3314 = vunpack.c.h.b16 %v3295
        %v3315 = vunpack.c.l.b16 %v3296
        %v3316 = vunpack.c.h.b16 %v3296
        %v3317 = vunpack.c.l.b16 %v3297
        %v3318 = vunpack.c.h.b16 %v3297
        %v3319 = vunpack.c.l.b16 %v3298
        %v3320 = vunpack.c.h.b16 %v3298
        %v3321 = vunpack.c.l.b16 %v3299
        %v3322 = vunpack.c.h.b16 %v3299
        %v3323 = vunpack.c.l.b16 %v3300
        %v3324 = vunpack.c.h.b16 %v3300
        %v3325 = vpack.c.b16 %v3311, %v3309
        %v3326 = vpack.c.b16 %v3312, %v3310
        %v3327 = vpack.c.b16 %v3315, %v3313
        %v3328 = vpack.c.b16 %v3316, %v3314
        %v3329 = vpack.c.b16 %v3319, %v3317
        %v3330 = vpack.c.b16 %v3320, %v3318
        %v3331 = vpack.c.b16 %v3323, %v3321
        %v3332 = vpack.c.b16 %v3324, %v3322
        %v3342 = vsel %vm1136, %v3291, 0
        %3344 = vmatprep.subr.bf16.mxu0 0
        %3345 = vmatpush1.bf16.msra.mxu0 0
        %3346 = vmatprep.subr.bf16.mxu0 0
        %3347 = vmatpush1.bf16.msra.mxu0 0
        %3348 = vmatprep.subr.bf16.mxu0 0
        %3349 = vmatpush1.bf16.msra.mxu0 0
        %3350 = vmatprep.subr.bf16.mxu0 0
        %3351 = vmatpush1.bf16.msra.mxu0 0
        %3352 = vmatprep.subr.bf16.mxu0 %v3332
        %3353 = vmatpush1.bf16.msra.mxu0 %v3331
        %3354 = vmatprep.subr.bf16.mxu0 %v3330
        %3355 = vmatpush1.bf16.msra.mxu0 %v3329
        %3356 = vmatprep.subr.bf16.mxu0 %v3328
        %3357 = vmatpush1.bf16.msra.mxu0 %v3327
        %3358 = vmatprep.subr.bf16.mxu0 %v3326
        %3359 = vmatpush1.bf16.msra.mxu0 %v3325
        %3360 = vmatprep.subr.bf16.mxu0 0
        %3361 = vmatpush2.bf16.msra.mxu0 0
        %3362 = vmatprep.subr.bf16.mxu0 0
        %3363 = vmatpush2.bf16.msra.mxu0 0
        %3364 = vmatprep.subr.bf16.mxu0 0
        %3365 = vmatpush2.bf16.msra.mxu0 0
        %3366 = vmatprep.subr.bf16.mxu0 0
        %3367 = vmatpush2.bf16.msra.mxu0 0
        %3368 = vmatprep.subr.bf16.mxu0 0
        %3369 = vmatpush2.bf16.msra.mxu0 0
        %3370 = vmatprep.subr.bf16.mxu0 0
        %3371 = vmatpush2.bf16.msra.mxu0 0
        %3372 = vmatprep.subr.bf16.mxu0 0
        %3373 = vmatpush2.bf16.msra.mxu0 0
        %3374 = vmatprep.subr.bf16.mxu0 0
        %3375 = vmatpush2.bf16.msra.mxu0 0
        %3376 = vmatprep.mubr.bf16.mxu0 0
        %3377 = vmatmul.mubr.bf16.gmra.mxu0 %v3342
        %v3378 = vpop.f32.mrf.mxu0
        %v3379 = vadd.f32 0.0, %v3378
        %v3380 = vpop.f32.mrf.mxu0
        %v3381 = vadd.f32 0.0, %v3380
        %v3382 = vpop.f32.mrf.mxu0
        %v3383 = vpop.f32.mrf.mxu0
        %3384 = vdwg.mxu0
        %v3385 = vadd.f32 %v3289, %v3379
        %v3386 = vadd.f32 %v3290, %v3381
        %v3387 = vpack.c.bf16 %v2950, %v2950
        %s3388 = scalar_lea.vmem [#allocation2], 256
        %v3389 = vld [vmem:[%s3388] sm:$0xff]
        %v3390 = vld [vmem:[%s3388 + $0x8] sm:$0xff]
        %v3391 = vld [vmem:[%s3388 + $0x10] sm:$0xff]
        %v3392 = vld [vmem:[%s3388 + $0x18] sm:$0xff]
        %v3393 = vld [vmem:[%s3388 + $0x20] sm:$0xff]
        %v3394 = vld [vmem:[%s3388 + $0x28] sm:$0xff]
        %v3395 = vld [vmem:[%s3388 + $0x30] sm:$0xff]
        %v3396 = vld [vmem:[%s3388 + $0x38] sm:$0xff]
        %v3405 = vunpack.c.l.b16 %v3389
        %v3406 = vunpack.c.h.b16 %v3389
        %v3407 = vunpack.c.l.b16 %v3390
        %v3408 = vunpack.c.h.b16 %v3390
        %v3409 = vunpack.c.l.b16 %v3391
        %v3410 = vunpack.c.h.b16 %v3391
        %v3411 = vunpack.c.l.b16 %v3392
        %v3412 = vunpack.c.h.b16 %v3392
        %v3413 = vunpack.c.l.b16 %v3393
        %v3414 = vunpack.c.h.b16 %v3393
        %v3415 = vunpack.c.l.b16 %v3394
        %v3416 = vunpack.c.h.b16 %v3394
        %v3417 = vunpack.c.l.b16 %v3395
        %v3418 = vunpack.c.h.b16 %v3395
        %v3419 = vunpack.c.l.b16 %v3396
        %v3420 = vunpack.c.h.b16 %v3396
        %v3421 = vpack.c.b16 %v3407, %v3405
        %v3422 = vpack.c.b16 %v3408, %v3406
        %v3423 = vpack.c.b16 %v3411, %v3409
        %v3424 = vpack.c.b16 %v3412, %v3410
        %v3425 = vpack.c.b16 %v3415, %v3413
        %v3426 = vpack.c.b16 %v3416, %v3414
        %v3427 = vpack.c.b16 %v3419, %v3417
        %v3428 = vpack.c.b16 %v3420, %v3418
        %v3438 = vsel %vm1136, %v3387, 0
        %3440 = vmatprep.subr.bf16.mxu0 0
        %3441 = vmatpush1.bf16.msra.mxu0 0
        %3442 = vmatprep.subr.bf16.mxu0 0
        %3443 = vmatpush1.bf16.msra.mxu0 0
        %3444 = vmatprep.subr.bf16.mxu0 0
        %3445 = vmatpush1.bf16.msra.mxu0 0
        %3446 = vmatprep.subr.bf16.mxu0 0
        %3447 = vmatpush1.bf16.msra.mxu0 0
        %3448 = vmatprep.subr.bf16.mxu0 %v3428
        %3449 = vmatpush1.bf16.msra.mxu0 %v3427
        %3450 = vmatprep.subr.bf16.mxu0 %v3426
        %3451 = vmatpush1.bf16.msra.mxu0 %v3425
        %3452 = vmatprep.subr.bf16.mxu0 %v3424
        %3453 = vmatpush1.bf16.msra.mxu0 %v3423
        %3454 = vmatprep.subr.bf16.mxu0 %v3422
        %3455 = vmatpush1.bf16.msra.mxu0 %v3421
        %3456 = vmatprep.subr.bf16.mxu0 0
        %3457 = vmatpush2.bf16.msra.mxu0 0
        %3458 = vmatprep.subr.bf16.mxu0 0
        %3459 = vmatpush2.bf16.msra.mxu0 0
        %3460 = vmatprep.subr.bf16.mxu0 0
        %3461 = vmatpush2.bf16.msra.mxu0 0
        %3462 = vmatprep.subr.bf16.mxu0 0
        %3463 = vmatpush2.bf16.msra.mxu0 0
        %3464 = vmatprep.subr.bf16.mxu0 0
        %3465 = vmatpush2.bf16.msra.mxu0 0
        %3466 = vmatprep.subr.bf16.mxu0 0
        %3467 = vmatpush2.bf16.msra.mxu0 0
        %3468 = vmatprep.subr.bf16.mxu0 0
        %3469 = vmatpush2.bf16.msra.mxu0 0
        %3470 = vmatprep.subr.bf16.mxu0 0
        %3471 = vmatpush2.bf16.msra.mxu0 0
        %3472 = vmatprep.mubr.bf16.mxu0 0
        %3473 = vmatmul.mubr.bf16.gmra.mxu0 %v3438
        %v3474 = vpop.f32.mrf.mxu0
        %v3475 = vadd.f32 0.0, %v3474
        %v3476 = vpop.f32.mrf.mxu0
        %v3477 = vadd.f32 0.0, %v3476
        %v3478 = vpop.f32.mrf.mxu0
        %v3479 = vpop.f32.mrf.mxu0
        %3480 = vdwg.mxu0
        %v3481 = vadd.f32 %v3385, %v3475
        %v3482 = vadd.f32 %v3386, %v3477
        %v3483 = vpack.c.bf16 %v2955, %v2955
        %s3484 = scalar_lea.vmem [#allocation2], 320
        %v3485 = vld [vmem:[%s3484] sm:$0xff]
        %v3486 = vld [vmem:[%s3484 + $0x8] sm:$0xff]
        %v3487 = vld [vmem:[%s3484 + $0x10] sm:$0xff]
        %v3488 = vld [vmem:[%s3484 + $0x18] sm:$0xff]
        %v3489 = vld [vmem:[%s3484 + $0x20] sm:$0xff]
        %v3490 = vld [vmem:[%s3484 + $0x28] sm:$0xff]
        %v3491 = vld [vmem:[%s3484 + $0x30] sm:$0xff]
        %v3492 = vld [vmem:[%s3484 + $0x38] sm:$0xff]
        %v3501 = vunpack.c.l.b16 %v3485
        %v3502 = vunpack.c.h.b16 %v3485
        %v3503 = vunpack.c.l.b16 %v3486
        %v3504 = vunpack.c.h.b16 %v3486
        %v3505 = vunpack.c.l.b16 %v3487
        %v3506 = vunpack.c.h.b16 %v3487
        %v3507 = vunpack.c.l.b16 %v3488
        %v3508 = vunpack.c.h.b16 %v3488
        %v3509 = vunpack.c.l.b16 %v3489
        %v3510 = vunpack.c.h.b16 %v3489
        %v3511 = vunpack.c.l.b16 %v3490
        %v3512 = vunpack.c.h.b16 %v3490
        %v3513 = vunpack.c.l.b16 %v3491
        %v3514 = vunpack.c.h.b16 %v3491
        %v3515 = vunpack.c.l.b16 %v3492
        %v3516 = vunpack.c.h.b16 %v3492
        %v3517 = vpack.c.b16 %v3503, %v3501
        %v3518 = vpack.c.b16 %v3504, %v3502
        %v3519 = vpack.c.b16 %v3507, %v3505
        %v3520 = vpack.c.b16 %v3508, %v3506
        %v3521 = vpack.c.b16 %v3511, %v3509
        %v3522 = vpack.c.b16 %v3512, %v3510
        %v3523 = vpack.c.b16 %v3515, %v3513
        %v3524 = vpack.c.b16 %v3516, %v3514
        %v3534 = vsel %vm1136, %v3483, 0
        %3536 = vmatprep.subr.bf16.mxu0 0
        %3537 = vmatpush1.bf16.msra.mxu0 0
        %3538 = vmatprep.subr.bf16.mxu0 0
        %3539 = vmatpush1.bf16.msra.mxu0 0
        %3540 = vmatprep.subr.bf16.mxu0 0
        %3541 = vmatpush1.bf16.msra.mxu0 0
        %3542 = vmatprep.subr.bf16.mxu0 0
        %3543 = vmatpush1.bf16.msra.mxu0 0
        %3544 = vmatprep.subr.bf16.mxu0 %v3524
        %3545 = vmatpush1.bf16.msra.mxu0 %v3523
        %3546 = vmatprep.subr.bf16.mxu0 %v3522
        %3547 = vmatpush1.bf16.msra.mxu0 %v3521
        %3548 = vmatprep.subr.bf16.mxu0 %v3520
        %3549 = vmatpush1.bf16.msra.mxu0 %v3519
        %3550 = vmatprep.subr.bf16.mxu0 %v3518
        %3551 = vmatpush1.bf16.msra.mxu0 %v3517
        %3552 = vmatprep.subr.bf16.mxu0 0
        %3553 = vmatpush2.bf16.msra.mxu0 0
        %3554 = vmatprep.subr.bf16.mxu0 0
        %3555 = vmatpush2.bf16.msra.mxu0 0
        %3556 = vmatprep.subr.bf16.mxu0 0
        %3557 = vmatpush2.bf16.msra.mxu0 0
        %3558 = vmatprep.subr.bf16.mxu0 0
        %3559 = vmatpush2.bf16.msra.mxu0 0
        %3560 = vmatprep.subr.bf16.mxu0 0
        %3561 = vmatpush2.bf16.msra.mxu0 0
        %3562 = vmatprep.subr.bf16.mxu0 0
        %3563 = vmatpush2.bf16.msra.mxu0 0
        %3564 = vmatprep.subr.bf16.mxu0 0
        %3565 = vmatpush2.bf16.msra.mxu0 0
        %3566 = vmatprep.subr.bf16.mxu0 0
        %3567 = vmatpush2.bf16.msra.mxu0 0
        %3568 = vmatprep.mubr.bf16.mxu0 0
        %3569 = vmatmul.mubr.bf16.gmra.mxu0 %v3534
        %v3570 = vpop.f32.mrf.mxu0
        %v3571 = vadd.f32 0.0, %v3570
        %v3572 = vpop.f32.mrf.mxu0
        %v3573 = vadd.f32 0.0, %v3572
        %v3574 = vpop.f32.mrf.mxu0
        %v3575 = vpop.f32.mrf.mxu0
        %3576 = vdwg.mxu0
        %v3577 = vadd.f32 %v3481, %v3571
        %v3578 = vadd.f32 %v3482, %v3573
        %v3579 = vpack.c.bf16 %v2960, %v2960
        %s3580 = scalar_lea.vmem [#allocation2], 384
        %v3581 = vld [vmem:[%s3580] sm:$0xff]
        %v3582 = vld [vmem:[%s3580 + $0x8] sm:$0xff]
        %v3583 = vld [vmem:[%s3580 + $0x10] sm:$0xff]
        %v3584 = vld [vmem:[%s3580 + $0x18] sm:$0xff]
        %v3585 = vld [vmem:[%s3580 + $0x20] sm:$0xff]
        %v3586 = vld [vmem:[%s3580 + $0x28] sm:$0xff]
        %v3587 = vld [vmem:[%s3580 + $0x30] sm:$0xff]
        %v3588 = vld [vmem:[%s3580 + $0x38] sm:$0xff]
        %v3597 = vunpack.c.l.b16 %v3581
        %v3598 = vunpack.c.h.b16 %v3581
        %v3599 = vunpack.c.l.b16 %v3582
        %v3600 = vunpack.c.h.b16 %v3582
        %v3601 = vunpack.c.l.b16 %v3583
        %v3602 = vunpack.c.h.b16 %v3583
        %v3603 = vunpack.c.l.b16 %v3584
        %v3604 = vunpack.c.h.b16 %v3584
        %v3605 = vunpack.c.l.b16 %v3585
        %v3606 = vunpack.c.h.b16 %v3585
        %v3607 = vunpack.c.l.b16 %v3586
        %v3608 = vunpack.c.h.b16 %v3586
        %v3609 = vunpack.c.l.b16 %v3587
        %v3610 = vunpack.c.h.b16 %v3587
        %v3611 = vunpack.c.l.b16 %v3588
        %v3612 = vunpack.c.h.b16 %v3588
        %v3613 = vpack.c.b16 %v3599, %v3597
        %v3614 = vpack.c.b16 %v3600, %v3598
        %v3615 = vpack.c.b16 %v3603, %v3601
        %v3616 = vpack.c.b16 %v3604, %v3602
        %v3617 = vpack.c.b16 %v3607, %v3605
        %v3618 = vpack.c.b16 %v3608, %v3606
        %v3619 = vpack.c.b16 %v3611, %v3609
        %v3620 = vpack.c.b16 %v3612, %v3610
        %v3630 = vsel %vm1136, %v3579, 0
        %3632 = vmatprep.subr.bf16.mxu0 0
        %3633 = vmatpush1.bf16.msra.mxu0 0
        %3634 = vmatprep.subr.bf16.mxu0 0
        %3635 = vmatpush1.bf16.msra.mxu0 0
        %3636 = vmatprep.subr.bf16.mxu0 0
        %3637 = vmatpush1.bf16.msra.mxu0 0
        %3638 = vmatprep.subr.bf16.mxu0 0
        %3639 = vmatpush1.bf16.msra.mxu0 0
        %3640 = vmatprep.subr.bf16.mxu0 %v3620
        %3641 = vmatpush1.bf16.msra.mxu0 %v3619
        %3642 = vmatprep.subr.bf16.mxu0 %v3618
        %3643 = vmatpush1.bf16.msra.mxu0 %v3617
        %3644 = vmatprep.subr.bf16.mxu0 %v3616
        %3645 = vmatpush1.bf16.msra.mxu0 %v3615
        %3646 = vmatprep.subr.bf16.mxu0 %v3614
        %3647 = vmatpush1.bf16.msra.mxu0 %v3613
        %3648 = vmatprep.subr.bf16.mxu0 0
        %3649 = vmatpush2.bf16.msra.mxu0 0
        %3650 = vmatprep.subr.bf16.mxu0 0
        %3651 = vmatpush2.bf16.msra.mxu0 0
        %3652 = vmatprep.subr.bf16.mxu0 0
        %3653 = vmatpush2.bf16.msra.mxu0 0
        %3654 = vmatprep.subr.bf16.mxu0 0
        %3655 = vmatpush2.bf16.msra.mxu0 0
        %3656 = vmatprep.subr.bf16.mxu0 0
        %3657 = vmatpush2.bf16.msra.mxu0 0
        %3658 = vmatprep.subr.bf16.mxu0 0
        %3659 = vmatpush2.bf16.msra.mxu0 0
        %3660 = vmatprep.subr.bf16.mxu0 0
        %3661 = vmatpush2.bf16.msra.mxu0 0
        %3662 = vmatprep.subr.bf16.mxu0 0
        %3663 = vmatpush2.bf16.msra.mxu0 0
        %3664 = vmatprep.mubr.bf16.mxu0 0
        %3665 = vmatmul.mubr.bf16.gmra.mxu0 %v3630
        %v3666 = vpop.f32.mrf.mxu0
        %v3667 = vadd.f32 0.0, %v3666
        %v3668 = vpop.f32.mrf.mxu0
        %v3669 = vadd.f32 0.0, %v3668
        %v3670 = vpop.f32.mrf.mxu0
        %v3671 = vpop.f32.mrf.mxu0
        %3672 = vdwg.mxu0
        %v3673 = vadd.f32 %v3577, %v3667
        %v3674 = vadd.f32 %v3578, %v3669
        %v3675 = vpack.c.bf16 %v2965, %v2965
        %s3676 = scalar_lea.vmem [#allocation2], 448
        %v3677 = vld [vmem:[%s3676] sm:$0xff]
        %v3678 = vld [vmem:[%s3676 + $0x8] sm:$0xff]
        %v3679 = vld [vmem:[%s3676 + $0x10] sm:$0xff]
        %v3680 = vld [vmem:[%s3676 + $0x18] sm:$0xff]
        %v3681 = vld [vmem:[%s3676 + $0x20] sm:$0xff]
        %v3682 = vld [vmem:[%s3676 + $0x28] sm:$0xff]
        %v3683 = vld [vmem:[%s3676 + $0x30] sm:$0xff]
        %v3684 = vld [vmem:[%s3676 + $0x38] sm:$0xff]
        %v3693 = vunpack.c.l.b16 %v3677
        %v3694 = vunpack.c.h.b16 %v3677
        %v3695 = vunpack.c.l.b16 %v3678
        %v3696 = vunpack.c.h.b16 %v3678
        %v3697 = vunpack.c.l.b16 %v3679
        %v3698 = vunpack.c.h.b16 %v3679
        %v3699 = vunpack.c.l.b16 %v3680
        %v3700 = vunpack.c.h.b16 %v3680
        %v3701 = vunpack.c.l.b16 %v3681
        %v3702 = vunpack.c.h.b16 %v3681
        %v3703 = vunpack.c.l.b16 %v3682
        %v3704 = vunpack.c.h.b16 %v3682
        %v3705 = vunpack.c.l.b16 %v3683
        %v3706 = vunpack.c.h.b16 %v3683
        %v3707 = vunpack.c.l.b16 %v3684
        %v3708 = vunpack.c.h.b16 %v3684
        %v3709 = vpack.c.b16 %v3695, %v3693
        %v3710 = vpack.c.b16 %v3696, %v3694
        %v3711 = vpack.c.b16 %v3699, %v3697
        %v3712 = vpack.c.b16 %v3700, %v3698
        %v3713 = vpack.c.b16 %v3703, %v3701
        %v3714 = vpack.c.b16 %v3704, %v3702
        %v3715 = vpack.c.b16 %v3707, %v3705
        %v3716 = vpack.c.b16 %v3708, %v3706
        %v3726 = vsel %vm1136, %v3675, 0
        %3728 = vmatprep.subr.bf16.mxu0 0
        %3729 = vmatpush1.bf16.msra.mxu0 0
        %3730 = vmatprep.subr.bf16.mxu0 0
        %3731 = vmatpush1.bf16.msra.mxu0 0
        %3732 = vmatprep.subr.bf16.mxu0 0
        %3733 = vmatpush1.bf16.msra.mxu0 0
        %3734 = vmatprep.subr.bf16.mxu0 0
        %3735 = vmatpush1.bf16.msra.mxu0 0
        %3736 = vmatprep.subr.bf16.mxu0 %v3716
        %3737 = vmatpush1.bf16.msra.mxu0 %v3715
        %3738 = vmatprep.subr.bf16.mxu0 %v3714
        %3739 = vmatpush1.bf16.msra.mxu0 %v3713
        %3740 = vmatprep.subr.bf16.mxu0 %v3712
        %3741 = vmatpush1.bf16.msra.mxu0 %v3711
        %3742 = vmatprep.subr.bf16.mxu0 %v3710
        %3743 = vmatpush1.bf16.msra.mxu0 %v3709
        %3744 = vmatprep.subr.bf16.mxu0 0
        %3745 = vmatpush2.bf16.msra.mxu0 0
        %3746 = vmatprep.subr.bf16.mxu0 0
        %3747 = vmatpush2.bf16.msra.mxu0 0
        %3748 = vmatprep.subr.bf16.mxu0 0
        %3749 = vmatpush2.bf16.msra.mxu0 0
        %3750 = vmatprep.subr.bf16.mxu0 0
        %3751 = vmatpush2.bf16.msra.mxu0 0
        %3752 = vmatprep.subr.bf16.mxu0 0
        %3753 = vmatpush2.bf16.msra.mxu0 0
        %3754 = vmatprep.subr.bf16.mxu0 0
        %3755 = vmatpush2.bf16.msra.mxu0 0
        %3756 = vmatprep.subr.bf16.mxu0 0
        %3757 = vmatpush2.bf16.msra.mxu0 0
        %3758 = vmatprep.subr.bf16.mxu0 0
        %3759 = vmatpush2.bf16.msra.mxu0 0
        %3760 = vmatprep.mubr.bf16.mxu0 0
        %3761 = vmatmul.mubr.bf16.gmra.mxu0 %v3726
        %v3762 = vpop.f32.mrf.mxu0
        %v3763 = vadd.f32 0.0, %v3762
        %v3764 = vpop.f32.mrf.mxu0
        %v3765 = vadd.f32 0.0, %v3764
        %v3766 = vpop.f32.mrf.mxu0
        %v3767 = vpop.f32.mrf.mxu0
        %3768 = vdwg.mxu0
        %v3769 = vadd.f32 %v3673, %v3763
        %v3770 = vadd.f32 %v3674, %v3765
        %v3771 = vpack.c.bf16 %v2970, %v2970
        %s3772 = scalar_lea.vmem [#allocation2], 512
        %v3773 = vld [vmem:[%s3772] sm:$0xff]
        %v3774 = vld [vmem:[%s3772 + $0x8] sm:$0xff]
        %v3775 = vld [vmem:[%s3772 + $0x10] sm:$0xff]
        %v3776 = vld [vmem:[%s3772 + $0x18] sm:$0xff]
        %v3777 = vld [vmem:[%s3772 + $0x20] sm:$0xff]
        %v3778 = vld [vmem:[%s3772 + $0x28] sm:$0xff]
        %v3779 = vld [vmem:[%s3772 + $0x30] sm:$0xff]
        %v3780 = vld [vmem:[%s3772 + $0x38] sm:$0xff]
        %v3789 = vunpack.c.l.b16 %v3773
        %v3790 = vunpack.c.h.b16 %v3773
        %v3791 = vunpack.c.l.b16 %v3774
        %v3792 = vunpack.c.h.b16 %v3774
        %v3793 = vunpack.c.l.b16 %v3775
        %v3794 = vunpack.c.h.b16 %v3775
        %v3795 = vunpack.c.l.b16 %v3776
        %v3796 = vunpack.c.h.b16 %v3776
        %v3797 = vunpack.c.l.b16 %v3777
        %v3798 = vunpack.c.h.b16 %v3777
        %v3799 = vunpack.c.l.b16 %v3778
        %v3800 = vunpack.c.h.b16 %v3778
        %v3801 = vunpack.c.l.b16 %v3779
        %v3802 = vunpack.c.h.b16 %v3779
        %v3803 = vunpack.c.l.b16 %v3780
        %v3804 = vunpack.c.h.b16 %v3780
        %v3805 = vpack.c.b16 %v3791, %v3789
        %v3806 = vpack.c.b16 %v3792, %v3790
        %v3807 = vpack.c.b16 %v3795, %v3793
        %v3808 = vpack.c.b16 %v3796, %v3794
        %v3809 = vpack.c.b16 %v3799, %v3797
        %v3810 = vpack.c.b16 %v3800, %v3798
        %v3811 = vpack.c.b16 %v3803, %v3801
        %v3812 = vpack.c.b16 %v3804, %v3802
        %v3822 = vsel %vm1136, %v3771, 0
        %3824 = vmatprep.subr.bf16.mxu0 0
        %3825 = vmatpush1.bf16.msra.mxu0 0
        %3826 = vmatprep.subr.bf16.mxu0 0
        %3827 = vmatpush1.bf16.msra.mxu0 0
        %3828 = vmatprep.subr.bf16.mxu0 0
        %3829 = vmatpush1.bf16.msra.mxu0 0
        %3830 = vmatprep.subr.bf16.mxu0 0
        %3831 = vmatpush1.bf16.msra.mxu0 0
        %3832 = vmatprep.subr.bf16.mxu0 %v3812
        %3833 = vmatpush1.bf16.msra.mxu0 %v3811
        %3834 = vmatprep.subr.bf16.mxu0 %v3810
        %3835 = vmatpush1.bf16.msra.mxu0 %v3809
        %3836 = vmatprep.subr.bf16.mxu0 %v3808
        %3837 = vmatpush1.bf16.msra.mxu0 %v3807
        %3838 = vmatprep.subr.bf16.mxu0 %v3806
        %3839 = vmatpush1.bf16.msra.mxu0 %v3805
        %3840 = vmatprep.subr.bf16.mxu0 0
        %3841 = vmatpush2.bf16.msra.mxu0 0
        %3842 = vmatprep.subr.bf16.mxu0 0
        %3843 = vmatpush2.bf16.msra.mxu0 0
        %3844 = vmatprep.subr.bf16.mxu0 0
        %3845 = vmatpush2.bf16.msra.mxu0 0
        %3846 = vmatprep.subr.bf16.mxu0 0
        %3847 = vmatpush2.bf16.msra.mxu0 0
        %3848 = vmatprep.subr.bf16.mxu0 0
        %3849 = vmatpush2.bf16.msra.mxu0 0
        %3850 = vmatprep.subr.bf16.mxu0 0
        %3851 = vmatpush2.bf16.msra.mxu0 0
        %3852 = vmatprep.subr.bf16.mxu0 0
        %3853 = vmatpush2.bf16.msra.mxu0 0
        %3854 = vmatprep.subr.bf16.mxu0 0
        %3855 = vmatpush2.bf16.msra.mxu0 0
        %3856 = vmatprep.mubr.bf16.mxu0 0
        %3857 = vmatmul.mubr.bf16.gmra.mxu0 %v3822
        %v3858 = vpop.f32.mrf.mxu0
        %v3859 = vadd.f32 0.0, %v3858
        %v3860 = vpop.f32.mrf.mxu0
        %v3861 = vadd.f32 0.0, %v3860
        %v3862 = vpop.f32.mrf.mxu0
        %v3863 = vpop.f32.mrf.mxu0
        %3864 = vdwg.mxu0
        %v3865 = vadd.f32 %v3769, %v3859
        %v3866 = vadd.f32 %v3770, %v3861
        %v3867 = vpack.c.bf16 %v2975, %v2975
        %s3868 = scalar_lea.vmem [#allocation2], 576
        %v3869 = vld [vmem:[%s3868] sm:$0xff]
        %v3870 = vld [vmem:[%s3868 + $0x8] sm:$0xff]
        %v3871 = vld [vmem:[%s3868 + $0x10] sm:$0xff]
        %v3872 = vld [vmem:[%s3868 + $0x18] sm:$0xff]
        %v3873 = vld [vmem:[%s3868 + $0x20] sm:$0xff]
        %v3874 = vld [vmem:[%s3868 + $0x28] sm:$0xff]
        %v3875 = vld [vmem:[%s3868 + $0x30] sm:$0xff]
        %v3876 = vld [vmem:[%s3868 + $0x38] sm:$0xff]
        %v3885 = vunpack.c.l.b16 %v3869
        %v3886 = vunpack.c.h.b16 %v3869
        %v3887 = vunpack.c.l.b16 %v3870
        %v3888 = vunpack.c.h.b16 %v3870
        %v3889 = vunpack.c.l.b16 %v3871
        %v3890 = vunpack.c.h.b16 %v3871
        %v3891 = vunpack.c.l.b16 %v3872
        %v3892 = vunpack.c.h.b16 %v3872
        %v3893 = vunpack.c.l.b16 %v3873
        %v3894 = vunpack.c.h.b16 %v3873
        %v3895 = vunpack.c.l.b16 %v3874
        %v3896 = vunpack.c.h.b16 %v3874
        %v3897 = vunpack.c.l.b16 %v3875
        %v3898 = vunpack.c.h.b16 %v3875
        %v3899 = vunpack.c.l.b16 %v3876
        %v3900 = vunpack.c.h.b16 %v3876
        %v3901 = vpack.c.b16 %v3887, %v3885
        %v3902 = vpack.c.b16 %v3888, %v3886
        %v3903 = vpack.c.b16 %v3891, %v3889
        %v3904 = vpack.c.b16 %v3892, %v3890
        %v3905 = vpack.c.b16 %v3895, %v3893
        %v3906 = vpack.c.b16 %v3896, %v3894
        %v3907 = vpack.c.b16 %v3899, %v3897
        %v3908 = vpack.c.b16 %v3900, %v3898
        %v3918 = vsel %vm1136, %v3867, 0
        %3920 = vmatprep.subr.bf16.mxu0 0
        %3921 = vmatpush1.bf16.msra.mxu0 0
        %3922 = vmatprep.subr.bf16.mxu0 0
        %3923 = vmatpush1.bf16.msra.mxu0 0
        %3924 = vmatprep.subr.bf16.mxu0 0
        %3925 = vmatpush1.bf16.msra.mxu0 0
        %3926 = vmatprep.subr.bf16.mxu0 0
        %3927 = vmatpush1.bf16.msra.mxu0 0
        %3928 = vmatprep.subr.bf16.mxu0 %v3908
        %3929 = vmatpush1.bf16.msra.mxu0 %v3907
        %3930 = vmatprep.subr.bf16.mxu0 %v3906
        %3931 = vmatpush1.bf16.msra.mxu0 %v3905
        %3932 = vmatprep.subr.bf16.mxu0 %v3904
        %3933 = vmatpush1.bf16.msra.mxu0 %v3903
        %3934 = vmatprep.subr.bf16.mxu0 %v3902
        %3935 = vmatpush1.bf16.msra.mxu0 %v3901
        %3936 = vmatprep.subr.bf16.mxu0 0
        %3937 = vmatpush2.bf16.msra.mxu0 0
        %3938 = vmatprep.subr.bf16.mxu0 0
        %3939 = vmatpush2.bf16.msra.mxu0 0
        %3940 = vmatprep.subr.bf16.mxu0 0
        %3941 = vmatpush2.bf16.msra.mxu0 0
        %3942 = vmatprep.subr.bf16.mxu0 0
        %3943 = vmatpush2.bf16.msra.mxu0 0
        %3944 = vmatprep.subr.bf16.mxu0 0
        %3945 = vmatpush2.bf16.msra.mxu0 0
        %3946 = vmatprep.subr.bf16.mxu0 0
        %3947 = vmatpush2.bf16.msra.mxu0 0
        %3948 = vmatprep.subr.bf16.mxu0 0
        %3949 = vmatpush2.bf16.msra.mxu0 0
        %3950 = vmatprep.subr.bf16.mxu0 0
        %3951 = vmatpush2.bf16.msra.mxu0 0
        %3952 = vmatprep.mubr.bf16.mxu0 0
        %3953 = vmatmul.mubr.bf16.gmra.mxu0 %v3918
        %v3954 = vpop.f32.mrf.mxu0
        %v3955 = vadd.f32 0.0, %v3954
        %v3956 = vpop.f32.mrf.mxu0
        %v3957 = vadd.f32 0.0, %v3956
        %v3958 = vpop.f32.mrf.mxu0
        %v3959 = vpop.f32.mrf.mxu0
        %3960 = vdwg.mxu0
        %v3961 = vadd.f32 %v3865, %v3955
        %v3962 = vadd.f32 %v3866, %v3957
        %v3963 = vpack.c.bf16 %v2980, %v2980
        %s3964 = scalar_lea.vmem [#allocation2], 640
        %v3965 = vld [vmem:[%s3964] sm:$0xff]
        %v3966 = vld [vmem:[%s3964 + $0x8] sm:$0xff]
        %v3967 = vld [vmem:[%s3964 + $0x10] sm:$0xff]
        %v3968 = vld [vmem:[%s3964 + $0x18] sm:$0xff]
        %v3969 = vld [vmem:[%s3964 + $0x20] sm:$0xff]
        %v3970 = vld [vmem:[%s3964 + $0x28] sm:$0xff]
        %v3971 = vld [vmem:[%s3964 + $0x30] sm:$0xff]
        %v3972 = vld [vmem:[%s3964 + $0x38] sm:$0xff]
        %v3981 = vunpack.c.l.b16 %v3965
        %v3982 = vunpack.c.h.b16 %v3965
        %v3983 = vunpack.c.l.b16 %v3966
        %v3984 = vunpack.c.h.b16 %v3966
        %v3985 = vunpack.c.l.b16 %v3967
        %v3986 = vunpack.c.h.b16 %v3967
        %v3987 = vunpack.c.l.b16 %v3968
        %v3988 = vunpack.c.h.b16 %v3968
        %v3989 = vunpack.c.l.b16 %v3969
        %v3990 = vunpack.c.h.b16 %v3969
        %v3991 = vunpack.c.l.b16 %v3970
        %v3992 = vunpack.c.h.b16 %v3970
        %v3993 = vunpack.c.l.b16 %v3971
        %v3994 = vunpack.c.h.b16 %v3971
        %v3995 = vunpack.c.l.b16 %v3972
        %v3996 = vunpack.c.h.b16 %v3972
        %v3997 = vpack.c.b16 %v3983, %v3981
        %v3998 = vpack.c.b16 %v3984, %v3982
        %v3999 = vpack.c.b16 %v3987, %v3985
        %v4000 = vpack.c.b16 %v3988, %v3986
        %v4001 = vpack.c.b16 %v3991, %v3989
        %v4002 = vpack.c.b16 %v3992, %v3990
        %v4003 = vpack.c.b16 %v3995, %v3993
        %v4004 = vpack.c.b16 %v3996, %v3994
        %v4014 = vsel %vm1136, %v3963, 0
        %4016 = vmatprep.subr.bf16.mxu0 0
        %4017 = vmatpush1.bf16.msra.mxu0 0
        %4018 = vmatprep.subr.bf16.mxu0 0
        %4019 = vmatpush1.bf16.msra.mxu0 0
        %4020 = vmatprep.subr.bf16.mxu0 0
        %4021 = vmatpush1.bf16.msra.mxu0 0
        %4022 = vmatprep.subr.bf16.mxu0 0
        %4023 = vmatpush1.bf16.msra.mxu0 0
        %4024 = vmatprep.subr.bf16.mxu0 %v4004
        %4025 = vmatpush1.bf16.msra.mxu0 %v4003
        %4026 = vmatprep.subr.bf16.mxu0 %v4002
        %4027 = vmatpush1.bf16.msra.mxu0 %v4001
        %4028 = vmatprep.subr.bf16.mxu0 %v4000
        %4029 = vmatpush1.bf16.msra.mxu0 %v3999
        %4030 = vmatprep.subr.bf16.mxu0 %v3998
        %4031 = vmatpush1.bf16.msra.mxu0 %v3997
        %4032 = vmatprep.subr.bf16.mxu0 0
        %4033 = vmatpush2.bf16.msra.mxu0 0
        %4034 = vmatprep.subr.bf16.mxu0 0
        %4035 = vmatpush2.bf16.msra.mxu0 0
        %4036 = vmatprep.subr.bf16.mxu0 0
        %4037 = vmatpush2.bf16.msra.mxu0 0
        %4038 = vmatprep.subr.bf16.mxu0 0
        %4039 = vmatpush2.bf16.msra.mxu0 0
        %4040 = vmatprep.subr.bf16.mxu0 0
        %4041 = vmatpush2.bf16.msra.mxu0 0
        %4042 = vmatprep.subr.bf16.mxu0 0
        %4043 = vmatpush2.bf16.msra.mxu0 0
        %4044 = vmatprep.subr.bf16.mxu0 0
        %4045 = vmatpush2.bf16.msra.mxu0 0
        %4046 = vmatprep.subr.bf16.mxu0 0
        %4047 = vmatpush2.bf16.msra.mxu0 0
        %4048 = vmatprep.mubr.bf16.mxu0 0
        %4049 = vmatmul.mubr.bf16.gmra.mxu0 %v4014
        %v4050 = vpop.f32.mrf.mxu0
        %v4051 = vadd.f32 0.0, %v4050
        %v4052 = vpop.f32.mrf.mxu0
        %v4053 = vadd.f32 0.0, %v4052
        %v4054 = vpop.f32.mrf.mxu0
        %v4055 = vpop.f32.mrf.mxu0
        %4056 = vdwg.mxu0
        %v4057 = vadd.f32 %v3961, %v4051
        %v4058 = vadd.f32 %v3962, %v4053
        %v4059 = vpack.c.bf16 %v2985, %v2985
        %s4060 = scalar_lea.vmem [#allocation2], 704
        %v4061 = vld [vmem:[%s4060] sm:$0xff]
        %v4062 = vld [vmem:[%s4060 + $0x8] sm:$0xff]
        %v4063 = vld [vmem:[%s4060 + $0x10] sm:$0xff]
        %v4064 = vld [vmem:[%s4060 + $0x18] sm:$0xff]
        %v4065 = vld [vmem:[%s4060 + $0x20] sm:$0xff]
        %v4066 = vld [vmem:[%s4060 + $0x28] sm:$0xff]
        %v4067 = vld [vmem:[%s4060 + $0x30] sm:$0xff]
        %v4068 = vld [vmem:[%s4060 + $0x38] sm:$0xff]
        %v4077 = vunpack.c.l.b16 %v4061
        %v4078 = vunpack.c.h.b16 %v4061
        %v4079 = vunpack.c.l.b16 %v4062
        %v4080 = vunpack.c.h.b16 %v4062
        %v4081 = vunpack.c.l.b16 %v4063
        %v4082 = vunpack.c.h.b16 %v4063
        %v4083 = vunpack.c.l.b16 %v4064
        %v4084 = vunpack.c.h.b16 %v4064
        %v4085 = vunpack.c.l.b16 %v4065
        %v4086 = vunpack.c.h.b16 %v4065
        %v4087 = vunpack.c.l.b16 %v4066
        %v4088 = vunpack.c.h.b16 %v4066
        %v4089 = vunpack.c.l.b16 %v4067
        %v4090 = vunpack.c.h.b16 %v4067
        %v4091 = vunpack.c.l.b16 %v4068
        %v4092 = vunpack.c.h.b16 %v4068
        %v4093 = vpack.c.b16 %v4079, %v4077
        %v4094 = vpack.c.b16 %v4080, %v4078
        %v4095 = vpack.c.b16 %v4083, %v4081
        %v4096 = vpack.c.b16 %v4084, %v4082
        %v4097 = vpack.c.b16 %v4087, %v4085
        %v4098 = vpack.c.b16 %v4088, %v4086
        %v4099 = vpack.c.b16 %v4091, %v4089
        %v4100 = vpack.c.b16 %v4092, %v4090
        %v4110 = vsel %vm1136, %v4059, 0
        %4112 = vmatprep.subr.bf16.mxu0 0
        %4113 = vmatpush1.bf16.msra.mxu0 0
        %4114 = vmatprep.subr.bf16.mxu0 0
        %4115 = vmatpush1.bf16.msra.mxu0 0
        %4116 = vmatprep.subr.bf16.mxu0 0
        %4117 = vmatpush1.bf16.msra.mxu0 0
        %4118 = vmatprep.subr.bf16.mxu0 0
        %4119 = vmatpush1.bf16.msra.mxu0 0
        %4120 = vmatprep.subr.bf16.mxu0 %v4100
        %4121 = vmatpush1.bf16.msra.mxu0 %v4099
        %4122 = vmatprep.subr.bf16.mxu0 %v4098
        %4123 = vmatpush1.bf16.msra.mxu0 %v4097
        %4124 = vmatprep.subr.bf16.mxu0 %v4096
        %4125 = vmatpush1.bf16.msra.mxu0 %v4095
        %4126 = vmatprep.subr.bf16.mxu0 %v4094
        %4127 = vmatpush1.bf16.msra.mxu0 %v4093
        %4128 = vmatprep.subr.bf16.mxu0 0
        %4129 = vmatpush2.bf16.msra.mxu0 0
        %4130 = vmatprep.subr.bf16.mxu0 0
        %4131 = vmatpush2.bf16.msra.mxu0 0
        %4132 = vmatprep.subr.bf16.mxu0 0
        %4133 = vmatpush2.bf16.msra.mxu0 0
        %4134 = vmatprep.subr.bf16.mxu0 0
        %4135 = vmatpush2.bf16.msra.mxu0 0
        %4136 = vmatprep.subr.bf16.mxu0 0
        %4137 = vmatpush2.bf16.msra.mxu0 0
        %4138 = vmatprep.subr.bf16.mxu0 0
        %4139 = vmatpush2.bf16.msra.mxu0 0
        %4140 = vmatprep.subr.bf16.mxu0 0
        %4141 = vmatpush2.bf16.msra.mxu0 0
        %4142 = vmatprep.subr.bf16.mxu0 0
        %4143 = vmatpush2.bf16.msra.mxu0 0
        %4144 = vmatprep.mubr.bf16.mxu0 0
        %4145 = vmatmul.mubr.bf16.gmra.mxu0 %v4110
        %v4146 = vpop.f32.mrf.mxu0
        %v4147 = vadd.f32 0.0, %v4146
        %v4148 = vpop.f32.mrf.mxu0
        %v4149 = vadd.f32 0.0, %v4148
        %v4150 = vpop.f32.mrf.mxu0
        %v4151 = vpop.f32.mrf.mxu0
        %4152 = vdwg.mxu0
        %v4153 = vadd.f32 %v4057, %v4147
        %v4154 = vadd.f32 %v4058, %v4149
        %v4155 = vpack.c.bf16 %v2990, %v2990
        %s4156 = scalar_lea.vmem [#allocation2], 768
        %v4157 = vld [vmem:[%s4156] sm:$0xff]
        %v4158 = vld [vmem:[%s4156 + $0x8] sm:$0xff]
        %v4159 = vld [vmem:[%s4156 + $0x10] sm:$0xff]
        %v4160 = vld [vmem:[%s4156 + $0x18] sm:$0xff]
        %v4161 = vld [vmem:[%s4156 + $0x20] sm:$0xff]
        %v4162 = vld [vmem:[%s4156 + $0x28] sm:$0xff]
        %v4163 = vld [vmem:[%s4156 + $0x30] sm:$0xff]
        %v4164 = vld [vmem:[%s4156 + $0x38] sm:$0xff]
        %v4173 = vunpack.c.l.b16 %v4157
        %v4174 = vunpack.c.h.b16 %v4157
        %v4175 = vunpack.c.l.b16 %v4158
        %v4176 = vunpack.c.h.b16 %v4158
        %v4177 = vunpack.c.l.b16 %v4159
        %v4178 = vunpack.c.h.b16 %v4159
        %v4179 = vunpack.c.l.b16 %v4160
        %v4180 = vunpack.c.h.b16 %v4160
        %v4181 = vunpack.c.l.b16 %v4161
        %v4182 = vunpack.c.h.b16 %v4161
        %v4183 = vunpack.c.l.b16 %v4162
        %v4184 = vunpack.c.h.b16 %v4162
        %v4185 = vunpack.c.l.b16 %v4163
        %v4186 = vunpack.c.h.b16 %v4163
        %v4187 = vunpack.c.l.b16 %v4164
        %v4188 = vunpack.c.h.b16 %v4164
        %v4189 = vpack.c.b16 %v4175, %v4173
        %v4190 = vpack.c.b16 %v4176, %v4174
        %v4191 = vpack.c.b16 %v4179, %v4177
        %v4192 = vpack.c.b16 %v4180, %v4178
        %v4193 = vpack.c.b16 %v4183, %v4181
        %v4194 = vpack.c.b16 %v4184, %v4182
        %v4195 = vpack.c.b16 %v4187, %v4185
        %v4196 = vpack.c.b16 %v4188, %v4186
        %v4206 = vsel %vm1136, %v4155, 0
        %4208 = vmatprep.subr.bf16.mxu0 0
        %4209 = vmatpush1.bf16.msra.mxu0 0
        %4210 = vmatprep.subr.bf16.mxu0 0
        %4211 = vmatpush1.bf16.msra.mxu0 0
        %4212 = vmatprep.subr.bf16.mxu0 0
        %4213 = vmatpush1.bf16.msra.mxu0 0
        %4214 = vmatprep.subr.bf16.mxu0 0
        %4215 = vmatpush1.bf16.msra.mxu0 0
        %4216 = vmatprep.subr.bf16.mxu0 %v4196
        %4217 = vmatpush1.bf16.msra.mxu0 %v4195
        %4218 = vmatprep.subr.bf16.mxu0 %v4194
        %4219 = vmatpush1.bf16.msra.mxu0 %v4193
        %4220 = vmatprep.subr.bf16.mxu0 %v4192
        %4221 = vmatpush1.bf16.msra.mxu0 %v4191
        %4222 = vmatprep.subr.bf16.mxu0 %v4190
        %4223 = vmatpush1.bf16.msra.mxu0 %v4189
        %4224 = vmatprep.subr.bf16.mxu0 0
        %4225 = vmatpush2.bf16.msra.mxu0 0
        %4226 = vmatprep.subr.bf16.mxu0 0
        %4227 = vmatpush2.bf16.msra.mxu0 0
        %4228 = vmatprep.subr.bf16.mxu0 0
        %4229 = vmatpush2.bf16.msra.mxu0 0
        %4230 = vmatprep.subr.bf16.mxu0 0
        %4231 = vmatpush2.bf16.msra.mxu0 0
        %4232 = vmatprep.subr.bf16.mxu0 0
        %4233 = vmatpush2.bf16.msra.mxu0 0
        %4234 = vmatprep.subr.bf16.mxu0 0
        %4235 = vmatpush2.bf16.msra.mxu0 0
        %4236 = vmatprep.subr.bf16.mxu0 0
        %4237 = vmatpush2.bf16.msra.mxu0 0
        %4238 = vmatprep.subr.bf16.mxu0 0
        %4239 = vmatpush2.bf16.msra.mxu0 0
        %4240 = vmatprep.mubr.bf16.mxu0 0
        %4241 = vmatmul.mubr.bf16.gmra.mxu0 %v4206
        %v4242 = vpop.f32.mrf.mxu0
        %v4243 = vadd.f32 0.0, %v4242
        %v4244 = vpop.f32.mrf.mxu0
        %v4245 = vadd.f32 0.0, %v4244
        %v4246 = vpop.f32.mrf.mxu0
        %v4247 = vpop.f32.mrf.mxu0
        %4248 = vdwg.mxu0
        %v4249 = vadd.f32 %v4153, %v4243
        %v4250 = vadd.f32 %v4154, %v4245
        %v4251 = vpack.c.bf16 %v2995, %v2995
        %s4252 = scalar_lea.vmem [#allocation2], 832
        %v4253 = vld [vmem:[%s4252] sm:$0xff]
        %v4254 = vld [vmem:[%s4252 + $0x8] sm:$0xff]
        %v4255 = vld [vmem:[%s4252 + $0x10] sm:$0xff]
        %v4256 = vld [vmem:[%s4252 + $0x18] sm:$0xff]
        %v4257 = vld [vmem:[%s4252 + $0x20] sm:$0xff]
        %v4258 = vld [vmem:[%s4252 + $0x28] sm:$0xff]
        %v4259 = vld [vmem:[%s4252 + $0x30] sm:$0xff]
        %v4260 = vld [vmem:[%s4252 + $0x38] sm:$0xff]
        %v4269 = vunpack.c.l.b16 %v4253
        %v4270 = vunpack.c.h.b16 %v4253
        %v4271 = vunpack.c.l.b16 %v4254
        %v4272 = vunpack.c.h.b16 %v4254
        %v4273 = vunpack.c.l.b16 %v4255
        %v4274 = vunpack.c.h.b16 %v4255
        %v4275 = vunpack.c.l.b16 %v4256
        %v4276 = vunpack.c.h.b16 %v4256
        %v4277 = vunpack.c.l.b16 %v4257
        %v4278 = vunpack.c.h.b16 %v4257
        %v4279 = vunpack.c.l.b16 %v4258
        %v4280 = vunpack.c.h.b16 %v4258
        %v4281 = vunpack.c.l.b16 %v4259
        %v4282 = vunpack.c.h.b16 %v4259
        %v4283 = vunpack.c.l.b16 %v4260
        %v4284 = vunpack.c.h.b16 %v4260
        %v4285 = vpack.c.b16 %v4271, %v4269
        %v4286 = vpack.c.b16 %v4272, %v4270
        %v4287 = vpack.c.b16 %v4275, %v4273
        %v4288 = vpack.c.b16 %v4276, %v4274
        %v4289 = vpack.c.b16 %v4279, %v4277
        %v4290 = vpack.c.b16 %v4280, %v4278
        %v4291 = vpack.c.b16 %v4283, %v4281
        %v4292 = vpack.c.b16 %v4284, %v4282
        %v4302 = vsel %vm1136, %v4251, 0
        %4304 = vmatprep.subr.bf16.mxu0 0
        %4305 = vmatpush1.bf16.msra.mxu0 0
        %4306 = vmatprep.subr.bf16.mxu0 0
        %4307 = vmatpush1.bf16.msra.mxu0 0
        %4308 = vmatprep.subr.bf16.mxu0 0
        %4309 = vmatpush1.bf16.msra.mxu0 0
        %4310 = vmatprep.subr.bf16.mxu0 0
        %4311 = vmatpush1.bf16.msra.mxu0 0
        %4312 = vmatprep.subr.bf16.mxu0 %v4292
        %4313 = vmatpush1.bf16.msra.mxu0 %v4291
        %4314 = vmatprep.subr.bf16.mxu0 %v4290
        %4315 = vmatpush1.bf16.msra.mxu0 %v4289
        %4316 = vmatprep.subr.bf16.mxu0 %v4288
        %4317 = vmatpush1.bf16.msra.mxu0 %v4287
        %4318 = vmatprep.subr.bf16.mxu0 %v4286
        %4319 = vmatpush1.bf16.msra.mxu0 %v4285
        %4320 = vmatprep.subr.bf16.mxu0 0
        %4321 = vmatpush2.bf16.msra.mxu0 0
        %4322 = vmatprep.subr.bf16.mxu0 0
        %4323 = vmatpush2.bf16.msra.mxu0 0
        %4324 = vmatprep.subr.bf16.mxu0 0
        %4325 = vmatpush2.bf16.msra.mxu0 0
        %4326 = vmatprep.subr.bf16.mxu0 0
        %4327 = vmatpush2.bf16.msra.mxu0 0
        %4328 = vmatprep.subr.bf16.mxu0 0
        %4329 = vmatpush2.bf16.msra.mxu0 0
        %4330 = vmatprep.subr.bf16.mxu0 0
        %4331 = vmatpush2.bf16.msra.mxu0 0
        %4332 = vmatprep.subr.bf16.mxu0 0
        %4333 = vmatpush2.bf16.msra.mxu0 0
        %4334 = vmatprep.subr.bf16.mxu0 0
        %4335 = vmatpush2.bf16.msra.mxu0 0
        %4336 = vmatprep.mubr.bf16.mxu0 0
        %4337 = vmatmul.mubr.bf16.gmra.mxu0 %v4302
        %v4338 = vpop.f32.mrf.mxu0
        %v4339 = vadd.f32 0.0, %v4338
        %v4340 = vpop.f32.mrf.mxu0
        %v4341 = vadd.f32 0.0, %v4340
        %v4342 = vpop.f32.mrf.mxu0
        %v4343 = vpop.f32.mrf.mxu0
        %4344 = vdwg.mxu0
        %v4345 = vadd.f32 %v4249, %v4339
        %v4346 = vadd.f32 %v4250, %v4341
        %v4347 = vpack.c.bf16 %v3000, %v3000
        %s4348 = scalar_lea.vmem [#allocation2], 896
        %v4349 = vld [vmem:[%s4348] sm:$0xff]
        %v4350 = vld [vmem:[%s4348 + $0x8] sm:$0xff]
        %v4351 = vld [vmem:[%s4348 + $0x10] sm:$0xff]
        %v4352 = vld [vmem:[%s4348 + $0x18] sm:$0xff]
        %v4353 = vld [vmem:[%s4348 + $0x20] sm:$0xff]
        %v4354 = vld [vmem:[%s4348 + $0x28] sm:$0xff]
        %v4355 = vld [vmem:[%s4348 + $0x30] sm:$0xff]
        %v4356 = vld [vmem:[%s4348 + $0x38] sm:$0xff]
        %v4365 = vunpack.c.l.b16 %v4349
        %v4366 = vunpack.c.h.b16 %v4349
        %v4367 = vunpack.c.l.b16 %v4350
        %v4368 = vunpack.c.h.b16 %v4350
        %v4369 = vunpack.c.l.b16 %v4351
        %v4370 = vunpack.c.h.b16 %v4351
        %v4371 = vunpack.c.l.b16 %v4352
        %v4372 = vunpack.c.h.b16 %v4352
        %v4373 = vunpack.c.l.b16 %v4353
        %v4374 = vunpack.c.h.b16 %v4353
        %v4375 = vunpack.c.l.b16 %v4354
        %v4376 = vunpack.c.h.b16 %v4354
        %v4377 = vunpack.c.l.b16 %v4355
        %v4378 = vunpack.c.h.b16 %v4355
        %v4379 = vunpack.c.l.b16 %v4356
        %v4380 = vunpack.c.h.b16 %v4356
        %v4381 = vpack.c.b16 %v4367, %v4365
        %v4382 = vpack.c.b16 %v4368, %v4366
        %v4383 = vpack.c.b16 %v4371, %v4369
        %v4384 = vpack.c.b16 %v4372, %v4370
        %v4385 = vpack.c.b16 %v4375, %v4373
        %v4386 = vpack.c.b16 %v4376, %v4374
        %v4387 = vpack.c.b16 %v4379, %v4377
        %v4388 = vpack.c.b16 %v4380, %v4378
        %v4398 = vsel %vm1136, %v4347, 0
        %4400 = vmatprep.subr.bf16.mxu0 0
        %4401 = vmatpush1.bf16.msra.mxu0 0
        %4402 = vmatprep.subr.bf16.mxu0 0
        %4403 = vmatpush1.bf16.msra.mxu0 0
        %4404 = vmatprep.subr.bf16.mxu0 0
        %4405 = vmatpush1.bf16.msra.mxu0 0
        %4406 = vmatprep.subr.bf16.mxu0 0
        %4407 = vmatpush1.bf16.msra.mxu0 0
        %4408 = vmatprep.subr.bf16.mxu0 %v4388
        %4409 = vmatpush1.bf16.msra.mxu0 %v4387
        %4410 = vmatprep.subr.bf16.mxu0 %v4386
        %4411 = vmatpush1.bf16.msra.mxu0 %v4385
        %4412 = vmatprep.subr.bf16.mxu0 %v4384
        %4413 = vmatpush1.bf16.msra.mxu0 %v4383
        %4414 = vmatprep.subr.bf16.mxu0 %v4382
        %4415 = vmatpush1.bf16.msra.mxu0 %v4381
        %4416 = vmatprep.subr.bf16.mxu0 0
        %4417 = vmatpush2.bf16.msra.mxu0 0
        %4418 = vmatprep.subr.bf16.mxu0 0
        %4419 = vmatpush2.bf16.msra.mxu0 0
        %4420 = vmatprep.subr.bf16.mxu0 0
        %4421 = vmatpush2.bf16.msra.mxu0 0
        %4422 = vmatprep.subr.bf16.mxu0 0
        %4423 = vmatpush2.bf16.msra.mxu0 0
        %4424 = vmatprep.subr.bf16.mxu0 0
        %4425 = vmatpush2.bf16.msra.mxu0 0
        %4426 = vmatprep.subr.bf16.mxu0 0
        %4427 = vmatpush2.bf16.msra.mxu0 0
        %4428 = vmatprep.subr.bf16.mxu0 0
        %4429 = vmatpush2.bf16.msra.mxu0 0
        %4430 = vmatprep.subr.bf16.mxu0 0
        %4431 = vmatpush2.bf16.msra.mxu0 0
        %4432 = vmatprep.mubr.bf16.mxu0 0
        %4433 = vmatmul.mubr.bf16.gmra.mxu0 %v4398
        %v4434 = vpop.f32.mrf.mxu0
        %v4435 = vadd.f32 0.0, %v4434
        %v4436 = vpop.f32.mrf.mxu0
        %v4437 = vadd.f32 0.0, %v4436
        %v4438 = vpop.f32.mrf.mxu0
        %v4439 = vpop.f32.mrf.mxu0
        %4440 = vdwg.mxu0
        %v4441 = vadd.f32 %v4345, %v4435
        %v4442 = vadd.f32 %v4346, %v4437
        %v4443 = vpack.c.bf16 %v3005, %v3005
        %s4444 = scalar_lea.vmem [#allocation2], 960
        %v4445 = vld [vmem:[%s4444] sm:$0xff]
        %v4446 = vld [vmem:[%s4444 + $0x8] sm:$0xff]
        %v4447 = vld [vmem:[%s4444 + $0x10] sm:$0xff]
        %v4448 = vld [vmem:[%s4444 + $0x18] sm:$0xff]
        %v4449 = vld [vmem:[%s4444 + $0x20] sm:$0xff]
        %v4450 = vld [vmem:[%s4444 + $0x28] sm:$0xff]
        %v4451 = vld [vmem:[%s4444 + $0x30] sm:$0xff]
        %v4452 = vld [vmem:[%s4444 + $0x38] sm:$0xff]
        %v4461 = vunpack.c.l.b16 %v4445
        %v4462 = vunpack.c.h.b16 %v4445
        %v4463 = vunpack.c.l.b16 %v4446
        %v4464 = vunpack.c.h.b16 %v4446
        %v4465 = vunpack.c.l.b16 %v4447
        %v4466 = vunpack.c.h.b16 %v4447
        %v4467 = vunpack.c.l.b16 %v4448
        %v4468 = vunpack.c.h.b16 %v4448
        %v4469 = vunpack.c.l.b16 %v4449
        %v4470 = vunpack.c.h.b16 %v4449
        %v4471 = vunpack.c.l.b16 %v4450
        %v4472 = vunpack.c.h.b16 %v4450
        %v4473 = vunpack.c.l.b16 %v4451
        %v4474 = vunpack.c.h.b16 %v4451
        %v4475 = vunpack.c.l.b16 %v4452
        %v4476 = vunpack.c.h.b16 %v4452
        %v4477 = vpack.c.b16 %v4463, %v4461
        %v4478 = vpack.c.b16 %v4464, %v4462
        %v4479 = vpack.c.b16 %v4467, %v4465
        %v4480 = vpack.c.b16 %v4468, %v4466
        %v4481 = vpack.c.b16 %v4471, %v4469
        %v4482 = vpack.c.b16 %v4472, %v4470
        %v4483 = vpack.c.b16 %v4475, %v4473
        %v4484 = vpack.c.b16 %v4476, %v4474
        %v4494 = vsel %vm1136, %v4443, 0
        %4496 = vmatprep.subr.bf16.mxu0 0
        %4497 = vmatpush1.bf16.msra.mxu0 0
        %4498 = vmatprep.subr.bf16.mxu0 0
        %4499 = vmatpush1.bf16.msra.mxu0 0
        %4500 = vmatprep.subr.bf16.mxu0 0
        %4501 = vmatpush1.bf16.msra.mxu0 0
        %4502 = vmatprep.subr.bf16.mxu0 0
        %4503 = vmatpush1.bf16.msra.mxu0 0
        %4504 = vmatprep.subr.bf16.mxu0 %v4484
        %4505 = vmatpush1.bf16.msra.mxu0 %v4483
        %4506 = vmatprep.subr.bf16.mxu0 %v4482
        %4507 = vmatpush1.bf16.msra.mxu0 %v4481
        %4508 = vmatprep.subr.bf16.mxu0 %v4480
        %4509 = vmatpush1.bf16.msra.mxu0 %v4479
        %4510 = vmatprep.subr.bf16.mxu0 %v4478
        %4511 = vmatpush1.bf16.msra.mxu0 %v4477
        %4512 = vmatprep.subr.bf16.mxu0 0
        %4513 = vmatpush2.bf16.msra.mxu0 0
        %4514 = vmatprep.subr.bf16.mxu0 0
        %4515 = vmatpush2.bf16.msra.mxu0 0
        %4516 = vmatprep.subr.bf16.mxu0 0
        %4517 = vmatpush2.bf16.msra.mxu0 0
        %4518 = vmatprep.subr.bf16.mxu0 0
        %4519 = vmatpush2.bf16.msra.mxu0 0
        %4520 = vmatprep.subr.bf16.mxu0 0
        %4521 = vmatpush2.bf16.msra.mxu0 0
        %4522 = vmatprep.subr.bf16.mxu0 0
        %4523 = vmatpush2.bf16.msra.mxu0 0
        %4524 = vmatprep.subr.bf16.mxu0 0
        %4525 = vmatpush2.bf16.msra.mxu0 0
        %4526 = vmatprep.subr.bf16.mxu0 0
        %4527 = vmatpush2.bf16.msra.mxu0 0
        %4528 = vmatprep.mubr.bf16.mxu0 0
        %4529 = vmatmul.mubr.bf16.gmra.mxu0 %v4494
        %v4530 = vpop.f32.mrf.mxu0
        %v4531 = vadd.f32 0.0, %v4530
        %v4532 = vpop.f32.mrf.mxu0
        %v4533 = vadd.f32 0.0, %v4532
        %v4534 = vpop.f32.mrf.mxu0
        %v4535 = vpop.f32.mrf.mxu0
        %4536 = vdwg.mxu0
        %v4537 = vadd.f32 %v4441, %v4531
        %v4538 = vadd.f32 %v4442, %v4533
        %v4539 = vld [vmem:[#allocation8 + $0x200] sm:$0xff]
        %4541 = vset.pattern.permute.xlu0 0
        %4542 = vperm.xlu0 %4541, %v4539
        %v4543 = vpop.permute.xlu0 %4542
        %v4545 = vadd.f32 %v4537, %v4543
        %v4546 = vadd.f32 %v4538, %v4543
        %v4547 = vmax.f32 %v4545, 0.0
        %v4548 = vmax.f32 %v4546, 0.0
        %v4549 = vld [vmem:[#allocation8 + $0x208] sm:$0x7]
        %v4550 = vld [vmem:[#allocation8 + $0x210] sm:$0x7]
        %4552 = vset.pattern.permute.xlu0 0
        %4553 = vperm.xlu0 %4552, %v4550
        %v4554 = vpop.permute.xlu0 %4553
        %v4557 = vsel %vm1286, %v4549, 0
        %4559 = vmatprep.subr.mxu0 0.0
        %4560 = vmatpush1.msra.mxu0 0.0
        %4561 = vmatprep.subr.mxu0 0.0
        %4562 = vmatpush1.msra.mxu0 0.0
        %4563 = vmatprep.subr.mxu0 0.0
        %4564 = vmatpush1.msra.mxu0 0.0
        %4565 = vmatprep.subr.mxu0 0.0
        %4566 = vmatpush1.msra.mxu0 0.0
        %4567 = vmatprep.subr.mxu0 0.0
        %4568 = vmatpush1.msra.mxu0 0.0
        %4569 = vmatprep.subr.mxu0 0.0
        %4570 = vmatpush1.msra.mxu0 0.0
        %4571 = vmatprep.subr.mxu0 0.0
        %4572 = vmatpush1.msra.mxu0 0.0
        %4573 = vmatprep.subr.mxu0 0.0
        %4574 = vmatpush1.msra.mxu0 0.0
        %4575 = vmatprep.subr.mxu0 0.0
        %4576 = vmatpush1.msra.mxu0 0.0
        %4577 = vmatprep.subr.mxu0 0.0
        %4578 = vmatpush1.msra.mxu0 0.0
        %4579 = vmatprep.subr.mxu0 0.0
        %4580 = vmatpush1.msra.mxu0 0.0
        %4581 = vmatprep.subr.mxu0 0.0
        %4582 = vmatpush1.msra.mxu0 0.0
        %4583 = vmatprep.subr.mxu0 0.0
        %4584 = vmatpush1.msra.mxu0 0.0
        %4585 = vmatprep.subr.mxu0 0.0
        %4586 = vmatpush1.msra.mxu0 0.0
        %4587 = vmatprep.subr.mxu0 0.0
        %4588 = vmatpush1.msra.mxu0 0.0
        %4589 = vmatprep.subr.mxu0 %v4548
        %4590 = vmatpush1.msra.mxu0 %v4547
        %4591 = vmatprep.subr.mxu0 0.0
        %4592 = vmatpush2.msra.mxu0 0.0
        %4593 = vmatprep.subr.mxu0 0.0
        %4594 = vmatpush2.msra.mxu0 0.0
        %4595 = vmatprep.subr.mxu0 0.0
        %4596 = vmatpush2.msra.mxu0 0.0
        %4597 = vmatprep.subr.mxu0 0.0
        %4598 = vmatpush2.msra.mxu0 0.0
        %4599 = vmatprep.subr.mxu0 0.0
        %4600 = vmatpush2.msra.mxu0 0.0
        %4601 = vmatprep.subr.mxu0 0.0
        %4602 = vmatpush2.msra.mxu0 0.0
        %4603 = vmatprep.subr.mxu0 0.0
        %4604 = vmatpush2.msra.mxu0 0.0
        %4605 = vmatprep.subr.mxu0 0.0
        %4606 = vmatpush2.msra.mxu0 0.0
        %4607 = vmatprep.subr.mxu0 0.0
        %4608 = vmatpush2.msra.mxu0 0.0
        %4609 = vmatprep.subr.mxu0 0.0
        %4610 = vmatpush2.msra.mxu0 0.0
        %4611 = vmatprep.subr.mxu0 0.0
        %4612 = vmatpush2.msra.mxu0 0.0
        %4613 = vmatprep.subr.mxu0 0.0
        %4614 = vmatpush2.msra.mxu0 0.0
        %4615 = vmatprep.subr.mxu0 0.0
        %4616 = vmatpush2.msra.mxu0 0.0
        %4617 = vmatprep.subr.mxu0 0.0
        %4618 = vmatpush2.msra.mxu0 0.0
        %4619 = vmatprep.subr.mxu0 0.0
        %4620 = vmatpush2.msra.mxu0 0.0
        %4621 = vmatprep.subr.mxu0 0.0
        %4622 = vmatpush2.msra.mxu0 0.0
        %4623 = vmatprep.mubr.f32.mxu0 0.0
        %4624 = vmatmul.mubr.f32.gmra.mxu0 %v4557
        %v4625 = vpop.f32.mrf.mxu0
        %v4626 = vadd.f32 %v4554, %v4625
        %v4627 = vpop.f32.mrf.mxu0
        %v4628 = vadd.f32 %v4554, %v4627
        %4629 = vdwg.mxu0
        %v4630 = vmax.f32 %v4626, 0.0
        %v4631 = vmax.f32 %v4628, 0.0
        %v4634 = vcombine.low %v4630, %v4631
        %4636 = vst [vmem:[%s269] sm:$0x77] %v4634
        %p4637 = scmp.lt.s32.totalorder %s19, 1
        %s4638 = scalar_select %p4637, %s19, 1
        %s4639 = smul.addr %s4638, 2
        %s4640 = smul.addr %s4639, 4
        %s4641 = scalar_lea.vmem %s6, %s4640
        // Predicated region
        $region57: #{_lambda_.1} parent=39 // pred_check
          %p4642 = pneg %p147
        $region58: #{_lambda_.1} parent=39 // pred_check_branch
          %4644 = sbr.rel (%p4642) target = $region60
        $region59: #{_lambda_.1} parent=39 // pred_region
          _
        $region60: #{_lambda_.1} parent=39 // pred_fallthru
          _
      $region40: #{_lambda_.1} parent=5 // pred_fallthru
        _
      %p4645 = scmp.le.s32.totalorder 2, %s14
      // Predicated region
      $region61: #{_lambda_.1} parent=5 // pred_check
        %p4646 = pneg %p4645
      $region62: #{_lambda_.1} parent=5 // pred_check_branch
        %4648 = sbr.rel (%p4646) target = $region64
      $region63: #{_lambda_.1} parent=5 // pred_region
        %s4649 = ssub.s32 %s14, 2
        // Predicated region
        $region65: #{_lambda_.1} parent=63 // pred_check
          %p4650 = pneg %p153
        $region66: #{_lambda_.1} parent=63 // pred_check_branch
          %4652 = sbr.rel (%p4650) target = $region68
        $region67: #{_lambda_.1} parent=63 // pred_region
          %p4653 = scmp.lt.s32.totalorder %s20, 1
          %s4654 = scalar_select %p4653, %s20, 1
          %s4655 = smul.addr %s4654, 2
          %s4656 = smul.addr %s4655, 4
          %s4657 = scalar_lea.vmem %s6, %s4656
        $region68: #{_lambda_.1} parent=63 // pred_fallthru
          _
      $region64: #{_lambda_.1} parent=5 // pred_fallthru
        _
    $region6: #{_lambda_.1} parent=1 // loop_footer
      %s18 = sadd.s32 1, %s14
    $region7: #{_lambda_.1} parent=1 // loop_footer_branch
      %13 = sbr.rel target = $region3
    $region8: #{_lambda_.1} parent=1 // loop_exit
      _
    %4658 = vsyncpa [#allocation5], 1
    %s4659 = scalar_lea.sflag [#allocation5], 1
    %4660 = vsyncpa %s4659, 1
    %4661 = vsyncpa [#allocation7], 1
  %4662 = vsyncmov [#allocation3]
  %s4663 = vpop.sfrf %4662
  %p4664 = scmp.eq.s32.totalorder %s4663, 0
  %p4665 = pneg %p4664
  %4667 = shalt.err (%p4665)

</llo_original>
